<compile_context>
chip_gen: v6e
topology: v6e:2x2x1
jax: 0.10.0
libtpu: 0.0.40
codegen_flags: <defaults>
</compile_context>

<pallas_src>
import jax
import jax.numpy as jnp
from jax import lax
from jax.experimental import pallas as pl
from jax.experimental.pallas import tpu as pltpu

BN_EPS = 1e-5
LANE = 128          # TPU vreg lane width; channel dims are padded to this.


def _round_up(n, m):
    return (n + m - 1) // m * m


def _default_vmem_limit_bytes():
    """Generation-aware scoped-VMEM limit: ~3/4 of physical, capped at 96 MiB.

    v5e/v6e (128 MiB physical) -> 96 MiB; v7x (64 MiB physical) -> 48 MiB.
    Falls back to 96 MiB if hardware info is unavailable."""
    cap = 128 << 20
    try:
        cap = int(pltpu.get_tpu_info().vmem_capacity_bytes)
    except Exception:
        pass
    return int(min(96 << 20, max(32 << 20, (cap * 3) // 4)))


# ----------------------------- in-kernel helpers ---------------------------- #

def _shift_h(x, d):
    """y[n, i, j, c] = x[n, i+d, j, c], zero outside [0, H)."""
    nb, H, W, C = x.shape
    if d == 0:
        return x
    z = jnp.zeros((nb, 1, W, C), x.dtype)
    if d == 1:
        return jnp.concatenate([x[:, 1:], z], axis=1)
    return jnp.concatenate([z, x[:, :-1]], axis=1)


def _shift_w(x, d):
    """y[n, i, j, c] = x[n, i, j+d, c], zero outside [0, W)."""
    nb, H, W, C = x.shape
    if d == 0:
        return x
    z = jnp.zeros((nb, H, 1, C), x.dtype)
    if d == 1:
        return jnp.concatenate([x[:, :, 1:], z], axis=2)
    return jnp.concatenate([z, x[:, :, :-1]], axis=2)


def _conv3x3_acc(x_bf16, w_ref):
    """Stride-1 "same" 3x3 conv as THREE accumulating MXU matmuls.

    One matmul per ky tap row: the 3 kx taps are folded into the contraction
    (K = 3*C), operands are bf16, accumulation is f32.  Only a (nb, H, W, 3*C)
    bf16 patch slab is live at a time (vs. a full (M, 9*C) f32 im2col).
    Tap order matches w_hwio.reshape(9*C, Cout) (row-major over (ky, kx))."""
    nb, H, W, C = x_bf16.shape
    M = nb * H * W
    Co = w_ref.shape[1]
    acc = jnp.zeros((M, Co), jnp.float32)
    for t, dy in enumerate((-1, 0, 1)):
        xh = _shift_h(x_bf16, dy)
        patch = jnp.concatenate(
            [_shift_w(xh, dx) for dx in (-1, 0, 1)], axis=-1
        ).reshape(M, 3 * C)
        acc = acc + jnp.dot(patch, w_ref[pl.ds(t * 3 * C, 3 * C), :],
                            preferred_element_type=jnp.float32)
    return acc                                        # (M, Co) f32


def _partial_stats(y_f32):
    """One-pass partial BN statistics: rows [sum, sum-of-squares], (1, 2, C)."""
    s = jnp.sum(y_f32, axis=0, keepdims=True)
    sq = jnp.sum(y_f32 * y_f32, axis=0, keepdims=True)
    return jnp.concatenate([s, sq], axis=0)[None]


# ------------------------------- kernel bodies ------------------------------ #

def _conv1_identity_kernel(x_ref, w1_ref, y1_ref, s1_ref):
    nb, H, W, _ = x_ref.shape
    Co = w1_ref.shape[1]
    x = x_ref[...]                                    # bf16
    y1 = _conv3x3_acc(x, w1_ref)                      # f32 accumulator
    s1_ref[...] = _partial_stats(y1)                  # stats from f32
    y1_ref[...] = y1.reshape(nb, H, W, Co).astype(y1_ref.dtype)   # bf16 to HBM


def _conv1_proj_kernel(x_ref, w1_ref, ws_ref, y1_ref, s1_ref, ys_ref, ss_ref):
    nb, H, W, Ci = x_ref.shape
    Co = w1_ref.shape[1]
    x = x_ref[...]                                    # bf16, reused for both convs
    y1 = _conv3x3_acc(x, w1_ref)
    s1_ref[...] = _partial_stats(y1)
    y1_ref[...] = y1.reshape(nb, H, W, Co).astype(y1_ref.dtype)
    # 1x1-conv projection shortcut (stride 1): plain channel matmul on bf16 x.
    ys = jnp.dot(x.reshape(nb * H * W, Ci), ws_ref[...],
                 preferred_element_type=jnp.float32)
    ss_ref[...] = _partial_stats(ys)
    ys_ref[...] = ys.reshape(nb, H, W, Co).astype(ys_ref.dtype)


def _conv2_kernel(y1_ref, sc1_ref, bi1_ref, w2_ref, y2_ref, s2_ref):
    nb, H, W, _ = y1_ref.shape
    Co = w2_ref.shape[1]
    # bn1 (precomputed scale/bias FMA) + relu in f32, downcast to bf16 BEFORE
    # building conv2's patches.
    h1 = jnp.maximum(
        y1_ref[...].astype(jnp.float32) * sc1_ref[...] + bi1_ref[...], 0.0
    ).astype(jnp.bfloat16)
    y2 = _conv3x3_acc(h1, w2_ref)
    s2_ref[...] = _partial_stats(y2)
    y2_ref[...] = y2.reshape(nb, H, W, Co).astype(y2_ref.dtype)


def _epilogue_identity_kernel(y2_ref, sc2_ref, bi2_ref, x_ref, o_ref):
    o_ref[...] = jnp.maximum(
        y2_ref[...].astype(jnp.float32) * sc2_ref[...] + bi2_ref[...]
        + x_ref[...].astype(jnp.float32), 0.0).astype(o_ref.dtype)


def _epilogue_proj_kernel(y2_ref, sc2_ref, bi2_ref, ys_ref, scs_ref, bis_ref,
                          o_ref):
    o_ref[...] = jnp.maximum(
        y2_ref[...].astype(jnp.float32) * sc2_ref[...] + bi2_ref[...]
        + ys_ref[...].astype(jnp.float32) * scs_ref[...] + bis_ref[...],
        0.0).astype(o_ref.dtype)


# -------------------------------- JAX wrapper ------------------------------- #

def _nhwc_spec(nb, H, W, C):
    return pl.BlockSpec((nb, H, W, C), lambda b: (b, 0, 0, 0))


def _bcast_spec(shape):
    # Constant-index operand (weights / scale / bias), full array per step.
    # TODO(synk): single-buffer these (pipeline_mode=pl.Buffered(1)) to free
    #             one weight-sized VMEM buffer per operand on v7x's 64 MiB.
    nd = len(shape)
    return pl.BlockSpec(shape, lambda b: (0,) * nd)


def _stats_spec(C):
    return pl.BlockSpec((1, 2, C), lambda b: (b, 0, 0))


def _bn_scale_bias(partial_stats, gamma, beta, count):
    """Reduce per-tile (sum, sumsq) to a fused BN scale/bias (training stats)."""
    s = jnp.sum(partial_stats, axis=0)                 # (2, C)
    mean = s[0] / count
    var = jnp.maximum(s[1] / count - mean * mean, 0.0)  # biased var, BN-train
    # TODO(synk): use a shifted / Welford-style combine for very large N*H*W
    #             to avoid cancellation in E[x^2] - E[x]^2.
    scale = gamma * lax.rsqrt(var + BN_EPS)
    bias = beta - mean * scale
    return scale[None].astype(jnp.float32), bias[None].astype(jnp.float32)


def basic_block_forward_nhwc(x_nhwc, params, *, batch_tile=1):
    """BasicBlock forward on an NHWC f32 input; returns NHWC f32.

    Choose batch_tile so that (a) n_tiles = N // batch_tile >= 2 (megacore
    sharding on v7x) and (b) a (batch_tile, H, W, Cpad) bf16 tile plus its
    3*C patch slab fits comfortably inside the scoped VMEM limit."""
    use_projection = bool(params["use_projection"])
    N, H, W, Cin = x_nhwc.shape
    Cout = params["w1"].shape[-1]

    # Lane-dense channel padding.  For real ResNet channel counts (>=64, mostly
    # multiples of 128) this is cheap / a no-op; at the tiny demo channel count
    # it keeps every MXU column and vector store dense.  (For C=64 stages,
    # benchmark against keeping C=64 as the full last dim with masked stores.)
    Cpi = _round_up(Cin, LANE)
    Cpo = _round_up(Cout, LANE)

    # bf16 activations everywhere between phases: the MXU consumes bf16 anyway
    # and the memory-bound phases see half the HBM traffic.
    x_p = jnp.pad(x_nhwc.astype(jnp.bfloat16),
                  ((0, 0), (0, 0), (0, 0), (0, Cpi - Cin)))

    # Fold the 9 taps into the contraction dim, cast weights to bf16 once.
    w1 = jnp.pad(params["w1"], ((0, 0), (0, 0), (0, Cpi - Cin), (0, Cpo - Cout)))
    w1 = w1.reshape(9 * Cpi, Cpo).astype(jnp.bfloat16)
    w2 = jnp.pad(params["w2"], ((0, 0), (0, 0), (0, Cpo - Cout), (0, Cpo - Cout)))
    w2 = w2.reshape(9 * Cpo, Cpo).astype(jnp.bfloat16)

    def padc(v, C):
        return jnp.pad(v.astype(jnp.float32), (0, C - v.shape[0]))

    g1, b1 = padc(params["g1"], Cpo), padc(params["b1"], Cpo)
    g2, b2 = padc(params["g2"], Cpo), padc(params["b2"], Cpo)

    assert N % batch_tile == 0
    nb = batch_tile
    n_tiles = N // nb
    count = N * H * W

    act_dtype = jnp.bfloat16
    act_shape = jax.ShapeDtypeStruct((N, H, W, Cpo), act_dtype)
    stats_shape = jax.ShapeDtypeStruct((n_tiles, 2, Cpo), jnp.float32)

    x_spec = _nhwc_spec(nb, H, W, Cpi)
    act_spec = _nhwc_spec(nb, H, W, Cpo)
    st_spec = _stats_spec(Cpo)
    vec_spec = _bcast_spec((1, Cpo))
    cparams = pltpu.CompilerParams(
        dimension_semantics=("parallel",),
        vmem_limit_bytes=_default_vmem_limit_bytes())

    # -------- Phase 1: conv1 (+ projection shortcut conv) + partial stats ---- #
    if use_projection:
        ws = jnp.pad(params["ws"], ((0, Cpi - Cin), (0, Cpo - Cout)))
        ws = ws.astype(jnp.bfloat16)
        gs, bs = padc(params["gs"], Cpo), padc(params["bs"], Cpo)
        y1, s1, ys, ss = pl.pallas_call(
            _conv1_proj_kernel,
            grid=(n_tiles,),
            in_specs=[x_spec, _bcast_spec(w1.shape), _bcast_spec(ws.shape)],
            out_specs=(act_spec, st_spec, act_spec, st_spec),
            out_shape=(act_shape, stats_shape, act_shape, stats_shape),
            compiler_params=cparams,
        )(x_p, w1, ws)
    else:
        assert Cin == Cout, "identity shortcut requires in_planes == planes"
        y1, s1 = pl.pallas_call(
            _conv1_identity_kernel,
            grid=(n_tiles,),
            in_specs=[x_spec, _bcast_spec(w1.shape)],
            out_specs=(act_spec, st_spec),
            out_shape=(act_shape, stats_shape),
            compiler_params=cparams,
        )(x_p, w1)

    sc1, bi1 = _bn_scale_bias(s1, g1, b1, count)

    # -------- Phase 2: bn1 + relu + conv2 + partial stats -------------------- #
    y2, s2 = pl.pallas_call(
        _conv2_kernel,
        grid=(n_tiles,),
        in_specs=[act_spec, vec_spec, vec_spec, _bcast_spec(w2.shape)],
        out_specs=(act_spec, st_spec),
        out_shape=(act_shape, stats_shape),
        compiler_params=cparams,
    )(y1, sc1, bi1, w2)

    sc2, bi2 = _bn_scale_bias(s2, g2, b2, count)

    # -------- Phase 3: bn2 + shortcut + relu (output aliased onto y2) -------- #
    if use_projection:
        scs, bis = _bn_scale_bias(ss, gs, bs, count)
        out_p = pl.pallas_call(
            _epilogue_proj_kernel,
            grid=(n_tiles,),
            in_specs=[act_spec, vec_spec, vec_spec, act_spec, vec_spec, vec_spec],
            out_specs=act_spec,
            out_shape=act_shape,
            input_output_aliases={0: 0},           # reuse y2's HBM buffer
            compiler_params=cparams,
        )(y2, sc2, bi2, ys, scs, bis)
    else:
        out_p = pl.pallas_call(
            _epilogue_identity_kernel,
            grid=(n_tiles,),
            in_specs=[act_spec, vec_spec, vec_spec, x_spec],
            out_specs=act_spec,
            out_shape=act_shape,
            input_output_aliases={0: 0},           # reuse y2's HBM buffer
            compiler_params=cparams,
        )(y2, sc2, bi2, x_p)

    return out_p[..., :Cout].astype(jnp.float32)       # drop channel padding


def basic_block_forward(x_nchw, params, *, batch_tile=1):
    """NCHW boundary wrapper.  Multi-block networks should stay in NHWC and
    call basic_block_forward_nhwc directly (the transposes below are extra
    full HBM read+write passes)."""
    x = jnp.transpose(x_nchw, (0, 2, 3, 1))             # NCHW -> NHWC
    out = basic_block_forward_nhwc(x, params, batch_tile=batch_tile)
    return jnp.transpose(out, (0, 3, 1, 2))             # NHWC -> NCHW


# ----------------------------- params & reference --------------------------- #

def init_params(key, in_planes, planes, stride=1):
    assert stride == 1  # TODO(synk): stride != 1 not implemented
    k1, k2, k3, k4, k5 = jax.random.split(key, 5)
    w1 = jax.random.normal(k1, (3, 3, in_planes, planes), jnp.float32) \
        * (2.0 / (9 * in_planes)) ** 0.5
    w2 = jax.random.normal(k2, (3, 3, planes, planes), jnp.float32) \
        * (2.0 / (9 * planes)) ** 0.5
    use_projection = in_planes != planes
    if use_projection:
        ws = jax.random.normal(k3, (in_planes, planes), jnp.float32) \
            * (2.0 / in_planes) ** 0.5
    else:
        ws = jnp.zeros((in_planes, planes), jnp.float32)       # unused
    kg = jax.random.split(k4, 3)
    kb = jax.random.split(k5, 3)
    gamma = lambda k: 1.0 + 0.1 * jax.random.normal(k, (planes,), jnp.float32)
    beta = lambda k: 0.1 * jax.random.normal(k, (planes,), jnp.float32)
    return dict(w1=w1, w2=w2, ws=ws,
                g1=gamma(kg[0]), b1=beta(kb[0]),
                g2=gamma(kg[1]), b2=beta(kb[1]),
                gs=gamma(kg[2]), bs=beta(kb[2]),
                use_projection=use_projection)


def reference_forward(x_nchw, params, *, match_kernel_numerics=False):
    """Pure-JAX reference.

    match_kernel_numerics=True reproduces the kernel's numerics: bf16 MXU
    multiplies with f32 accumulation, bf16 inter-phase activation storage,
    BN statistics taken from the f32 conv accumulators."""
    x = jnp.transpose(x_nchw, (0, 2, 3, 1)).astype(jnp.float32)
    if match_kernel_numerics:
        mm = jnp.bfloat16
        rnd = lambda t: t.astype(jnp.bfloat16).astype(jnp.float32)
        prec = lax.Precision.DEFAULT
    else:
        mm = jnp.float32
        rnd = lambda t: t
        prec = lax.Precision.HIGHEST

    def conv(inp, w):
        return lax.conv_general_dilated(
            inp.astype(mm), w.astype(mm), (1, 1), "SAME",
            dimension_numbers=("NHWC", "HWIO", "NHWC"),
            preferred_element_type=jnp.float32, precision=prec)

    def bn_scale_bias(y, g, b):
        mean = jnp.mean(y, axis=(0, 1, 2))
        var = jnp.mean(jnp.square(y - mean), axis=(0, 1, 2))
        scale = g * lax.rsqrt(var + BN_EPS)
        return scale, b - mean * scale

    x_act = rnd(x)                                   # kernel stores x as bf16
    y1 = conv(x_act, params["w1"])                   # f32 accumulator
    sc1, bi1 = bn_scale_bias(y1, params["g1"], params["b1"])   # stats from f32
    h1 = jax.nn.relu(rnd(y1) * sc1 + bi1)            # y1 round-trips via bf16
    y2 = conv(h1, params["w2"])                      # h1 cast to bf16 in conv
    sc2, bi2 = bn_scale_bias(y2, params["g2"], params["b2"])
    main = rnd(y2) * sc2 + bi2
    if params["use_projection"]:
        ys = conv(x_act, params["ws"][None, None])
        scs, bis = bn_scale_bias(ys, params["gs"], params["bs"])
        short = rnd(ys) * scs + bis
    else:
        short = x_act
    out = jax.nn.relu(main + short)
    return jnp.transpose(out, (0, 3, 1, 2))


# ------------------------------------ main ----------------------------------- #

if __name__ == "__main__":
    key = jax.random.PRNGKey(0)
    kx, kp1, kp2 = jax.random.split(key, 3)

    # PyTorch-style NCHW input.
    x = jax.random.normal(kx, (2, 4, 16, 16), jnp.float32)

    cases = [("identity", init_params(kp1, in_planes=4, planes=4)),
             ("projection", init_params(kp2, in_planes=4, planes=8))]

    for name, p in cases:
        # jit the whole block so the phase-3 input/output alias is honored
        # without copies and inter-phase glue stays on-device.
        fwd = jax.jit(lambda xx, _p=p: basic_block_forward(xx, _p))
        out = jax.block_until_ready(fwd(x))
        planes = p["w1"].shape[-1]
        assert out.shape == (2, planes, 16, 16), f"{name}: bad output shape"

        # Check vs a reference that matches the kernel numerics (bf16 MXU,
        # bf16 inter-phase storage) -- validates indexing / BN / fusion.
        # Tolerance budgets ~1 bf16 ulp of rounding-boundary divergence.
        ref_bf = reference_forward(x, p, match_kernel_numerics=True)
        assert bool(jnp.allclose(out, ref_bf, atol=5e-3, rtol=1e-2)), \
            f"{name}: mismatch vs numerics-matched reference"

        # Loose sanity check vs the full-f32 reference (bf16 rounding ~1e-2).
        ref_hi = reference_forward(x, p, match_kernel_numerics=False)
        assert bool(jnp.allclose(out, ref_hi, atol=5e-2, rtol=5e-2)), \
            f"{name}: mismatch vs f32 reference"

    print("KERNEL_OK")
</pallas_src>

<mosaic_0001>
module attributes {stable_mosaic.version = 11 : i64} {
  func.func @_conv1_identity_kernel(%arg0: i32, %arg1: memref<1x16x16x128xbf16, #tpu.memory_space<vmem>>, %arg2: memref<1152x128xbf16, #tpu.memory_space<vmem>>, %arg3: memref<1x16x16x128xbf16, #tpu.memory_space<vmem>>, %arg4: memref<1x2x128xf32, #tpu.memory_space<vmem>>) attributes {dimension_semantics = [#tpu.dimension_semantics<parallel>], iteration_bounds = array<i64: 2>, scalar_prefetch = 0 : i64, scratch_operands = 0 : i64, tpu.core_type = #tpu.core_type<tc>, window_params = [{transform_indices = @transform_0, window_bounds = array<i64: 1, 16, 16, 128>}, {pipeline_mode = #tpu.pipeline_mode<synchronous>, transform_indices = @transform_1, window_bounds = array<i64: 1152, 128>}, {transform_indices = @transform_2, window_bounds = array<i64: 1, 16, 16, 128>}, {transform_indices = @transform_3, window_bounds = array<i64: 1, 2, 128>}]} {
    %c0 = arith.constant 0 : index
    %c0_0 = arith.constant 0 : index
    %c0_1 = arith.constant 0 : index
    %c0_2 = arith.constant 0 : index
    %0 = vector.load %arg1[%c0, %c0_0, %c0_1, %c0_2] : memref<1x16x16x128xbf16, #tpu.memory_space<vmem>>, vector<1x16x16x128xbf16>
    %cst = arith.constant 0.000000e+00 : f32
    %1 = vector.broadcast %cst : f32 to vector<256x128xf32>
    %cst_3 = arith.constant 0.000000e+00 : bf16
    %2 = vector.broadcast %cst_3 : bf16 to vector<1x1x16x128xbf16>
    %3 = vector.extract_strided_slice %0 {offsets = [0, 0, 0, 0], sizes = [1, 15, 16, 128], strides = [1, 1, 1, 1]} : vector<1x16x16x128xbf16> to vector<1x15x16x128xbf16>
    %4 = tpu.concatenate %2, %3 in 1 : vector<1x1x16x128xbf16>, vector<1x15x16x128xbf16> -> vector<1x16x16x128xbf16>
    %cst_4 = arith.constant 0.000000e+00 : bf16
    %5 = vector.broadcast %cst_4 : bf16 to vector<1x16x1x128xbf16>
    %6 = vector.extract_strided_slice %4 {offsets = [0, 0, 0, 0], sizes = [1, 16, 15, 128], strides = [1, 1, 1, 1]} : vector<1x16x16x128xbf16> to vector<1x16x15x128xbf16>
    %7 = tpu.concatenate %5, %6 in 2 : vector<1x16x1x128xbf16>, vector<1x16x15x128xbf16> -> vector<1x16x16x128xbf16>
    %cst_5 = arith.constant 0.000000e+00 : bf16
    %8 = vector.broadcast %cst_5 : bf16 to vector<1x16x1x128xbf16>
    %9 = vector.extract_strided_slice %4 {offsets = [0, 0, 1, 0], sizes = [1, 16, 15, 128], strides = [1, 1, 1, 1]} : vector<1x16x16x128xbf16> to vector<1x16x15x128xbf16>
    %10 = tpu.concatenate %9, %8 in 2 : vector<1x16x15x128xbf16>, vector<1x16x1x128xbf16> -> vector<1x16x16x128xbf16>
    %11 = tpu.concatenate %7, %4, %10 in 3 : vector<1x16x16x128xbf16>, vector<1x16x16x128xbf16>, vector<1x16x16x128xbf16> -> vector<1x16x16x384xbf16>
    %12 = vector.shape_cast %11 : vector<1x16x16x384xbf16> to vector<256x384xbf16>
    %c0_6 = arith.constant 0 : index
    %c0_7 = arith.constant 0 : index
    %13 = vector.load %arg2[%c0_6, %c0_7] : memref<1152x128xbf16, #tpu.memory_space<vmem>>, vector<384x128xbf16>
    %cst_8 = arith.constant dense<0.000000e+00> : vector<256x128xf32>
    %14 = tpu.matmul %12, %13, %cst_8 {dimension_numbers = #tpu.dot_dimension_numbers<[1], [0], [0], [1], [0, 0, 1, 1], [], []>} : vector<256x384xbf16>, vector<384x128xbf16>, vector<256x128xf32> -> vector<256x128xf32>
    %15 = arith.addf %1, %14 : vector<256x128xf32>
    %cst_9 = arith.constant 0.000000e+00 : bf16
    %16 = vector.broadcast %cst_9 : bf16 to vector<1x16x1x128xbf16>
    %17 = vector.extract_strided_slice %0 {offsets = [0, 0, 0, 0], sizes = [1, 16, 15, 128], strides = [1, 1, 1, 1]} : vector<1x16x16x128xbf16> to vector<1x16x15x128xbf16>
    %18 = tpu.concatenate %16, %17 in 2 : vector<1x16x1x128xbf16>, vector<1x16x15x128xbf16> -> vector<1x16x16x128xbf16>
    %cst_10 = arith.constant 0.000000e+00 : bf16
    %19 = vector.broadcast %cst_10 : bf16 to vector<1x16x1x128xbf16>
    %20 = vector.extract_strided_slice %0 {offsets = [0, 0, 1, 0], sizes = [1, 16, 15, 128], strides = [1, 1, 1, 1]} : vector<1x16x16x128xbf16> to vector<1x16x15x128xbf16>
    %21 = tpu.concatenate %20, %19 in 2 : vector<1x16x15x128xbf16>, vector<1x16x1x128xbf16> -> vector<1x16x16x128xbf16>
    %22 = tpu.concatenate %18, %0, %21 in 3 : vector<1x16x16x128xbf16>, vector<1x16x16x128xbf16>, vector<1x16x16x128xbf16> -> vector<1x16x16x384xbf16>
    %23 = vector.shape_cast %22 : vector<1x16x16x384xbf16> to vector<256x384xbf16>
    %c384 = arith.constant 384 : index
    %c0_11 = arith.constant 0 : index
    %24 = vector.load %arg2[%c384, %c0_11] : memref<1152x128xbf16, #tpu.memory_space<vmem>>, vector<384x128xbf16>
    %cst_12 = arith.constant dense<0.000000e+00> : vector<256x128xf32>
    %25 = tpu.matmul %23, %24, %cst_12 {dimension_numbers = #tpu.dot_dimension_numbers<[1], [0], [0], [1], [0, 0, 1, 1], [], []>} : vector<256x384xbf16>, vector<384x128xbf16>, vector<256x128xf32> -> vector<256x128xf32>
    %26 = arith.addf %15, %25 : vector<256x128xf32>
    %cst_13 = arith.constant 0.000000e+00 : bf16
    %27 = vector.broadcast %cst_13 : bf16 to vector<1x1x16x128xbf16>
    %28 = vector.extract_strided_slice %0 {offsets = [0, 1, 0, 0], sizes = [1, 15, 16, 128], strides = [1, 1, 1, 1]} : vector<1x16x16x128xbf16> to vector<1x15x16x128xbf16>
    %29 = tpu.concatenate %28, %27 in 1 : vector<1x15x16x128xbf16>, vector<1x1x16x128xbf16> -> vector<1x16x16x128xbf16>
    %cst_14 = arith.constant 0.000000e+00 : bf16
    %30 = vector.broadcast %cst_14 : bf16 to vector<1x16x1x128xbf16>
    %31 = vector.extract_strided_slice %29 {offsets = [0, 0, 0, 0], sizes = [1, 16, 15, 128], strides = [1, 1, 1, 1]} : vector<1x16x16x128xbf16> to vector<1x16x15x128xbf16>
    %32 = tpu.concatenate %30, %31 in 2 : vector<1x16x1x128xbf16>, vector<1x16x15x128xbf16> -> vector<1x16x16x128xbf16>
    %cst_15 = arith.constant 0.000000e+00 : bf16
    %33 = vector.broadcast %cst_15 : bf16 to vector<1x16x1x128xbf16>
    %34 = vector.extract_strided_slice %29 {offsets = [0, 0, 1, 0], sizes = [1, 16, 15, 128], strides = [1, 1, 1, 1]} : vector<1x16x16x128xbf16> to vector<1x16x15x128xbf16>
    %35 = tpu.concatenate %34, %33 in 2 : vector<1x16x15x128xbf16>, vector<1x16x1x128xbf16> -> vector<1x16x16x128xbf16>
    %36 = tpu.concatenate %32, %29, %35 in 3 : vector<1x16x16x128xbf16>, vector<1x16x16x128xbf16>, vector<1x16x16x128xbf16> -> vector<1x16x16x384xbf16>
    %37 = vector.shape_cast %36 : vector<1x16x16x384xbf16> to vector<256x384xbf16>
    %c768 = arith.constant 768 : index
    %c0_16 = arith.constant 0 : index
    %38 = vector.load %arg2[%c768, %c0_16] : memref<1152x128xbf16, #tpu.memory_space<vmem>>, vector<384x128xbf16>
    %cst_17 = arith.constant dense<0.000000e+00> : vector<256x128xf32>
    %39 = tpu.matmul %37, %38, %cst_17 {dimension_numbers = #tpu.dot_dimension_numbers<[1], [0], [0], [1], [0, 0, 1, 1], [], []>} : vector<256x384xbf16>, vector<384x128xbf16>, vector<256x128xf32> -> vector<256x128xf32>
    %40 = arith.addf %26, %39 : vector<256x128xf32>
    %cst_18 = arith.constant dense<0.000000e+00> : vector<128xf32>
    %41 = vector.multi_reduction <add>, %40, %cst_18 [0] : vector<256x128xf32> to vector<128xf32>
    %42 = vector.shape_cast %41 : vector<128xf32> to vector<1x128xf32>
    %43 = arith.mulf %40, %40 : vector<256x128xf32>
    %cst_19 = arith.constant dense<0.000000e+00> : vector<128xf32>
    %44 = vector.multi_reduction <add>, %43, %cst_19 [0] : vector<256x128xf32> to vector<128xf32>
    %45 = vector.shape_cast %44 : vector<128xf32> to vector<1x128xf32>
    %46 = tpu.concatenate %42, %45 in 0 : vector<1x128xf32>, vector<1x128xf32> -> vector<2x128xf32>
    %47 = vector.shape_cast %46 : vector<2x128xf32> to vector<1x2x128xf32>
    %c0_20 = arith.constant 0 : index
    %c0_21 = arith.constant 0 : index
    %c0_22 = arith.constant 0 : index
    %48 = vector.load %arg4[%c0_20, %c0_21, %c0_22] : memref<1x2x128xf32, #tpu.memory_space<vmem>>, vector<1x2x128xf32>
    tpu.vector_store %arg4[%c0_20, %c0_21, %c0_22], %47 {strides = array<i32>} : memref<1x2x128xf32, #tpu.memory_space<vmem>>, vector<1x2x128xf32>,
    %49 = vector.shape_cast %40 : vector<256x128xf32> to vector<1x16x16x128xf32>
    %50 = arith.truncf %49 : vector<1x16x16x128xf32> to vector<1x16x16x128xbf16>
    %c0_23 = arith.constant 0 : index
    %c0_24 = arith.constant 0 : index
    %c0_25 = arith.constant 0 : index
    %c0_26 = arith.constant 0 : index
    %51 = vector.load %arg3[%c0_23, %c0_24, %c0_25, %c0_26] : memref<1x16x16x128xbf16, #tpu.memory_space<vmem>>, vector<1x16x16x128xbf16>
    tpu.vector_store %arg3[%c0_23, %c0_24, %c0_25, %c0_26], %50 {strides = array<i32>} : memref<1x16x16x128xbf16, #tpu.memory_space<vmem>>, vector<1x16x16x128xbf16>,
    return
  }
  func.func @transform_0(%arg0: i32) -> (i32, i32, i32, i32) {
    %c0_i32 = arith.constant 0 : i32
    %c0_i32_0 = arith.constant 0 : i32
    %c0_i32_1 = arith.constant 0 : i32
    %c0_i32_2 = arith.constant 0 : i32
    return %arg0, %c0_i32, %c0_i32_0, %c0_i32_1 : i32, i32, i32, i32
  }
  func.func @transform_1(%arg0: i32) -> (i32, i32) {
    %c0_i32 = arith.constant 0 : i32
    %c0_i32_0 = arith.constant 0 : i32
    %c0_i32_1 = arith.constant 0 : i32
    return %c0_i32, %c0_i32_0 : i32, i32
  }
  func.func @transform_2(%arg0: i32) -> (i32, i32, i32, i32) {
    %c0_i32 = arith.constant 0 : i32
    %c0_i32_0 = arith.constant 0 : i32
    %c0_i32_1 = arith.constant 0 : i32
    %c0_i32_2 = arith.constant 0 : i32
    return %arg0, %c0_i32, %c0_i32_0, %c0_i32_1 : i32, i32, i32, i32
  }
  func.func @transform_3(%arg0: i32) -> (i32, i32, i32) {
    %c0_i32 = arith.constant 0 : i32
    %c0_i32_0 = arith.constant 0 : i32
    %c0_i32_1 = arith.constant 0 : i32
    return %arg0, %c0_i32, %c0_i32_0 : i32, i32, i32
  }
}

module attributes {stable_mosaic.version = 11 : i64} {
  func.func @_epilogue_identity_kernel(%arg0: i32, %arg1: memref<1x16x16x128xbf16, #tpu.memory_space<vmem>>, %arg2: memref<1x128xf32, #tpu.memory_space<vmem>>, %arg3: memref<1x128xf32, #tpu.memory_space<vmem>>, %arg4: memref<1x16x16x128xbf16, #tpu.memory_space<vmem>>, %arg5: memref<1x16x16x128xbf16, #tpu.memory_space<vmem>>) attributes {dimension_semantics = [#tpu.dimension_semantics<parallel>], iteration_bounds = array<i64: 2>, scalar_prefetch = 0 : i64, scratch_operands = 0 : i64, tpu.core_type = #tpu.core_type<tc>, window_params = [{transform_indices = @transform_0, window_bounds = array<i64: 1, 16, 16, 128>}, {pipeline_mode = #tpu.pipeline_mode<synchronous>, transform_indices = @transform_1, window_bounds = array<i64: 1, 128>}, {pipeline_mode = #tpu.pipeline_mode<synchronous>, transform_indices = @transform_2, window_bounds = array<i64: 1, 128>}, {transform_indices = @transform_3, window_bounds = array<i64: 1, 16, 16, 128>}, {transform_indices = @transform_4, window_bounds = array<i64: 1, 16, 16, 128>}]} {
    %c0 = arith.constant 0 : index
    %c0_0 = arith.constant 0 : index
    %c0_1 = arith.constant 0 : index
    %c0_2 = arith.constant 0 : index
    %0 = vector.load %arg1[%c0, %c0_0, %c0_1, %c0_2] : memref<1x16x16x128xbf16, #tpu.memory_space<vmem>>, vector<1x16x16x128xbf16>
    %1 = arith.extf %0 : vector<1x16x16x128xbf16> to vector<1x16x16x128xf32>
    %c0_3 = arith.constant 0 : index
    %c0_4 = arith.constant 0 : index
    %2 = vector.load %arg2[%c0_3, %c0_4] : memref<1x128xf32, #tpu.memory_space<vmem>>, vector<1x128xf32>
    %3 = vector.shape_cast %2 : vector<1x128xf32> to vector<1x1x1x128xf32>
    %4 = vector.broadcast %3 : vector<1x1x1x128xf32> to vector<1x16x16x128xf32>
    %5 = arith.mulf %1, %4 : vector<1x16x16x128xf32>
    %c0_5 = arith.constant 0 : index
    %c0_6 = arith.constant 0 : index
    %6 = vector.load %arg3[%c0_5, %c0_6] : memref<1x128xf32, #tpu.memory_space<vmem>>, vector<1x128xf32>
    %7 = vector.shape_cast %6 : vector<1x128xf32> to vector<1x1x1x128xf32>
    %8 = vector.broadcast %7 : vector<1x1x1x128xf32> to vector<1x16x16x128xf32>
    %9 = arith.addf %5, %8 : vector<1x16x16x128xf32>
    %c0_7 = arith.constant 0 : index
    %c0_8 = arith.constant 0 : index
    %c0_9 = arith.constant 0 : index
    %c0_10 = arith.constant 0 : index
    %10 = vector.load %arg4[%c0_7, %c0_8, %c0_9, %c0_10] : memref<1x16x16x128xbf16, #tpu.memory_space<vmem>>, vector<1x16x16x128xbf16>
    %11 = arith.extf %10 : vector<1x16x16x128xbf16> to vector<1x16x16x128xf32>
    %12 = arith.addf %9, %11 : vector<1x16x16x128xf32>
    %cst = arith.constant 0.000000e+00 : f32
    %13 = vector.broadcast %cst : f32 to vector<1x16x16x128xf32>
    %14 = arith.maximumf %12, %13 : vector<1x16x16x128xf32>
    %15 = arith.truncf %14 : vector<1x16x16x128xf32> to vector<1x16x16x128xbf16>
    %c0_11 = arith.constant 0 : index
    %c0_12 = arith.constant 0 : index
    %c0_13 = arith.constant 0 : index
    %c0_14 = arith.constant 0 : index
    %16 = vector.load %arg5[%c0_11, %c0_12, %c0_13, %c0_14] : memref<1x16x16x128xbf16, #tpu.memory_space<vmem>>, vector<1x16x16x128xbf16>
    tpu.vector_store %arg5[%c0_11, %c0_12, %c0_13, %c0_14], %15 {strides = array<i32>} : memref<1x16x16x128xbf16, #tpu.memory_space<vmem>>, vector<1x16x16x128xbf16>,
    return
  }
  func.func @transform_0(%arg0: i32) -> (i32, i32, i32, i32) {
    %c0_i32 = arith.constant 0 : i32
    %c0_i32_0 = arith.constant 0 : i32
    %c0_i32_1 = arith.constant 0 : i32
    %c0_i32_2 = arith.constant 0 : i32
    return %arg0, %c0_i32, %c0_i32_0, %c0_i32_1 : i32, i32, i32, i32
  }
  func.func @transform_1(%arg0: i32) -> (i32, i32) {
    %c0_i32 = arith.constant 0 : i32
    %c0_i32_0 = arith.constant 0 : i32
    %c0_i32_1 = arith.constant 0 : i32
    return %c0_i32, %c0_i32_0 : i32, i32
  }
  func.func @transform_2(%arg0: i32) -> (i32, i32) {
    %c0_i32 = arith.constant 0 : i32
    %c0_i32_0 = arith.constant 0 : i32
    %c0_i32_1 = arith.constant 0 : i32
    return %c0_i32, %c0_i32_0 : i32, i32
  }
  func.func @transform_3(%arg0: i32) -> (i32, i32, i32, i32) {
    %c0_i32 = arith.constant 0 : i32
    %c0_i32_0 = arith.constant 0 : i32
    %c0_i32_1 = arith.constant 0 : i32
    %c0_i32_2 = arith.constant 0 : i32
    return %arg0, %c0_i32, %c0_i32_0, %c0_i32_1 : i32, i32, i32, i32
  }
  func.func @transform_4(%arg0: i32) -> (i32, i32, i32, i32) {
    %c0_i32 = arith.constant 0 : i32
    %c0_i32_0 = arith.constant 0 : i32
    %c0_i32_1 = arith.constant 0 : i32
    %c0_i32_2 = arith.constant 0 : i32
    return %arg0, %c0_i32, %c0_i32_0, %c0_i32_1 : i32, i32, i32, i32
  }
}

module attributes {stable_mosaic.version = 11 : i64} {
  func.func @_conv2_kernel(%arg0: i32, %arg1: memref<1x16x16x128xbf16, #tpu.memory_space<vmem>>, %arg2: memref<1x128xf32, #tpu.memory_space<vmem>>, %arg3: memref<1x128xf32, #tpu.memory_space<vmem>>, %arg4: memref<1152x128xbf16, #tpu.memory_space<vmem>>, %arg5: memref<1x16x16x128xbf16, #tpu.memory_space<vmem>>, %arg6: memref<1x2x128xf32, #tpu.memory_space<vmem>>) attributes {dimension_semantics = [#tpu.dimension_semantics<parallel>], iteration_bounds = array<i64: 2>, scalar_prefetch = 0 : i64, scratch_operands = 0 : i64, tpu.core_type = #tpu.core_type<tc>, window_params = [{transform_indices = @transform_0, window_bounds = array<i64: 1, 16, 16, 128>}, {pipeline_mode = #tpu.pipeline_mode<synchronous>, transform_indices = @transform_1, window_bounds = array<i64: 1, 128>}, {pipeline_mode = #tpu.pipeline_mode<synchronous>, transform_indices = @transform_2, window_bounds = array<i64: 1, 128>}, {pipeline_mode = #tpu.pipeline_mode<synchronous>, transform_indices = @transform_3, window_bounds = array<i64: 1152, 128>}, {transform_indices = @transform_4, window_bounds = array<i64: 1, 16, 16, 128>}, {transform_indices = @transform_5, window_bounds = array<i64: 1, 2, 128>}]} {
    %c0 = arith.constant 0 : index
    %c0_0 = arith.constant 0 : index
    %c0_1 = arith.constant 0 : index
    %c0_2 = arith.constant 0 : index
    %0 = vector.load %arg1[%c0, %c0_0, %c0_1, %c0_2] : memref<1x16x16x128xbf16, #tpu.memory_space<vmem>>, vector<1x16x16x128xbf16>
    %1 = arith.extf %0 : vector<1x16x16x128xbf16> to vector<1x16x16x128xf32>
    %c0_3 = arith.constant 0 : index
    %c0_4 = arith.constant 0 : index
    %2 = vector.load %arg2[%c0_3, %c0_4] : memref<1x128xf32, #tpu.memory_space<vmem>>, vector<1x128xf32>
    %3 = vector.shape_cast %2 : vector<1x128xf32> to vector<1x1x1x128xf32>
    %4 = vector.broadcast %3 : vector<1x1x1x128xf32> to vector<1x16x16x128xf32>
    %5 = arith.mulf %1, %4 : vector<1x16x16x128xf32>
    %c0_5 = arith.constant 0 : index
    %c0_6 = arith.constant 0 : index
    %6 = vector.load %arg3[%c0_5, %c0_6] : memref<1x128xf32, #tpu.memory_space<vmem>>, vector<1x128xf32>
    %7 = vector.shape_cast %6 : vector<1x128xf32> to vector<1x1x1x128xf32>
    %8 = vector.broadcast %7 : vector<1x1x1x128xf32> to vector<1x16x16x128xf32>
    %9 = arith.addf %5, %8 : vector<1x16x16x128xf32>
    %cst = arith.constant 0.000000e+00 : f32
    %10 = vector.broadcast %cst : f32 to vector<1x16x16x128xf32>
    %11 = arith.maximumf %9, %10 : vector<1x16x16x128xf32>
    %12 = arith.truncf %11 : vector<1x16x16x128xf32> to vector<1x16x16x128xbf16>
    %cst_7 = arith.constant 0.000000e+00 : f32
    %13 = vector.broadcast %cst_7 : f32 to vector<256x128xf32>
    %cst_8 = arith.constant 0.000000e+00 : bf16
    %14 = vector.broadcast %cst_8 : bf16 to vector<1x1x16x128xbf16>
    %15 = vector.extract_strided_slice %12 {offsets = [0, 0, 0, 0], sizes = [1, 15, 16, 128], strides = [1, 1, 1, 1]} : vector<1x16x16x128xbf16> to vector<1x15x16x128xbf16>
    %16 = tpu.concatenate %14, %15 in 1 : vector<1x1x16x128xbf16>, vector<1x15x16x128xbf16> -> vector<1x16x16x128xbf16>
    %cst_9 = arith.constant 0.000000e+00 : bf16
    %17 = vector.broadcast %cst_9 : bf16 to vector<1x16x1x128xbf16>
    %18 = vector.extract_strided_slice %16 {offsets = [0, 0, 0, 0], sizes = [1, 16, 15, 128], strides = [1, 1, 1, 1]} : vector<1x16x16x128xbf16> to vector<1x16x15x128xbf16>
    %19 = tpu.concatenate %17, %18 in 2 : vector<1x16x1x128xbf16>, vector<1x16x15x128xbf16> -> vector<1x16x16x128xbf16>
    %cst_10 = arith.constant 0.000000e+00 : bf16
    %20 = vector.broadcast %cst_10 : bf16 to vector<1x16x1x128xbf16>
    %21 = vector.extract_strided_slice %16 {offsets = [0, 0, 1, 0], sizes = [1, 16, 15, 128], strides = [1, 1, 1, 1]} : vector<1x16x16x128xbf16> to vector<1x16x15x128xbf16>
    %22 = tpu.concatenate %21, %20 in 2 : vector<1x16x15x128xbf16>, vector<1x16x1x128xbf16> -> vector<1x16x16x128xbf16>
    %23 = tpu.concatenate %19, %16, %22 in 3 : vector<1x16x16x128xbf16>, vector<1x16x16x128xbf16>, vector<1x16x16x128xbf16> -> vector<1x16x16x384xbf16>
    %24 = vector.shape_cast %23 : vector<1x16x16x384xbf16> to vector<256x384xbf16>
    %c0_11 = arith.constant 0 : index
    %c0_12 = arith.constant 0 : index
    %25 = vector.load %arg4[%c0_11, %c0_12] : memref<1152x128xbf16, #tpu.memory_space<vmem>>, vector<384x128xbf16>
    %cst_13 = arith.constant dense<0.000000e+00> : vector<256x128xf32>
    %26 = tpu.matmul %24, %25, %cst_13 {dimension_numbers = #tpu.dot_dimension_numbers<[1], [0], [0], [1], [0, 0, 1, 1], [], []>} : vector<256x384xbf16>, vector<384x128xbf16>, vector<256x128xf32> -> vector<256x128xf32>
    %27 = arith.addf %13, %26 : vector<256x128xf32>
    %cst_14 = arith.constant 0.000000e+00 : bf16
    %28 = vector.broadcast %cst_14 : bf16 to vector<1x16x1x128xbf16>
    %29 = vector.extract_strided_slice %12 {offsets = [0, 0, 0, 0], sizes = [1, 16, 15, 128], strides = [1, 1, 1, 1]} : vector<1x16x16x128xbf16> to vector<1x16x15x128xbf16>
    %30 = tpu.concatenate %28, %29 in 2 : vector<1x16x1x128xbf16>, vector<1x16x15x128xbf16> -> vector<1x16x16x128xbf16>
    %cst_15 = arith.constant 0.000000e+00 : bf16
    %31 = vector.broadcast %cst_15 : bf16 to vector<1x16x1x128xbf16>
    %32 = vector.extract_strided_slice %12 {offsets = [0, 0, 1, 0], sizes = [1, 16, 15, 128], strides = [1, 1, 1, 1]} : vector<1x16x16x128xbf16> to vector<1x16x15x128xbf16>
    %33 = tpu.concatenate %32, %31 in 2 : vector<1x16x15x128xbf16>, vector<1x16x1x128xbf16> -> vector<1x16x16x128xbf16>
    %34 = tpu.concatenate %30, %12, %33 in 3 : vector<1x16x16x128xbf16>, vector<1x16x16x128xbf16>, vector<1x16x16x128xbf16> -> vector<1x16x16x384xbf16>
    %35 = vector.shape_cast %34 : vector<1x16x16x384xbf16> to vector<256x384xbf16>
    %c384 = arith.constant 384 : index
    %c0_16 = arith.constant 0 : index
    %36 = vector.load %arg4[%c384, %c0_16] : memref<1152x128xbf16, #tpu.memory_space<vmem>>, vector<384x128xbf16>
    %cst_17 = arith.constant dense<0.000000e+00> : vector<256x128xf32>
    %37 = tpu.matmul %35, %36, %cst_17 {dimension_numbers = #tpu.dot_dimension_numbers<[1], [0], [0], [1], [0, 0, 1, 1], [], []>} : vector<256x384xbf16>, vector<384x128xbf16>, vector<256x128xf32> -> vector<256x128xf32>
    %38 = arith.addf %27, %37 : vector<256x128xf32>
    %cst_18 = arith.constant 0.000000e+00 : bf16
    %39 = vector.broadcast %cst_18 : bf16 to vector<1x1x16x128xbf16>
    %40 = vector.extract_strided_slice %12 {offsets = [0, 1, 0, 0], sizes = [1, 15, 16, 128], strides = [1, 1, 1, 1]} : vector<1x16x16x128xbf16> to vector<1x15x16x128xbf16>
    %41 = tpu.concatenate %40, %39 in 1 : vector<1x15x16x128xbf16>, vector<1x1x16x128xbf16> -> vector<1x16x16x128xbf16>
    %cst_19 = arith.constant 0.000000e+00 : bf16
    %42 = vector.broadcast %cst_19 : bf16 to vector<1x16x1x128xbf16>
    %43 = vector.extract_strided_slice %41 {offsets = [0, 0, 0, 0], sizes = [1, 16, 15, 128], strides = [1, 1, 1, 1]} : vector<1x16x16x128xbf16> to vector<1x16x15x128xbf16>
    %44 = tpu.concatenate %42, %43 in 2 : vector<1x16x1x128xbf16>, vector<1x16x15x128xbf16> -> vector<1x16x16x128xbf16>
    %cst_20 = arith.constant 0.000000e+00 : bf16
    %45 = vector.broadcast %cst_20 : bf16 to vector<1x16x1x128xbf16>
    %46 = vector.extract_strided_slice %41 {offsets = [0, 0, 1, 0], sizes = [1, 16, 15, 128], strides = [1, 1, 1, 1]} : vector<1x16x16x128xbf16> to vector<1x16x15x128xbf16>
    %47 = tpu.concatenate %46, %45 in 2 : vector<1x16x15x128xbf16>, vector<1x16x1x128xbf16> -> vector<1x16x16x128xbf16>
    %48 = tpu.concatenate %44, %41, %47 in 3 : vector<1x16x16x128xbf16>, vector<1x16x16x128xbf16>, vector<1x16x16x128xbf16> -> vector<1x16x16x384xbf16>
    %49 = vector.shape_cast %48 : vector<1x16x16x384xbf16> to vector<256x384xbf16>
    %c768 = arith.constant 768 : index
    %c0_21 = arith.constant 0 : index
    %50 = vector.load %arg4[%c768, %c0_21] : memref<1152x128xbf16, #tpu.memory_space<vmem>>, vector<384x128xbf16>
    %cst_22 = arith.constant dense<0.000000e+00> : vector<256x128xf32>
    %51 = tpu.matmul %49, %50, %cst_22 {dimension_numbers = #tpu.dot_dimension_numbers<[1], [0], [0], [1], [0, 0, 1, 1], [], []>} : vector<256x384xbf16>, vector<384x128xbf16>, vector<256x128xf32> -> vector<256x128xf32>
    %52 = arith.addf %38, %51 : vector<256x128xf32>
    %cst_23 = arith.constant dense<0.000000e+00> : vector<128xf32>
    %53 = vector.multi_reduction <add>, %52, %cst_23 [0] : vector<256x128xf32> to vector<128xf32>
    %54 = vector.shape_cast %53 : vector<128xf32> to vector<1x128xf32>
    %55 = arith.mulf %52, %52 : vector<256x128xf32>
    %cst_24 = arith.constant dense<0.000000e+00> : vector<128xf32>
    %56 = vector.multi_reduction <add>, %55, %cst_24 [0] : vector<256x128xf32> to vector<128xf32>
    %57 = vector.shape_cast %56 : vector<128xf32> to vector<1x128xf32>
    %58 = tpu.concatenate %54, %57 in 0 : vector<1x128xf32>, vector<1x128xf32> -> vector<2x128xf32>
    %59 = vector.shape_cast %58 : vector<2x128xf32> to vector<1x2x128xf32>
    %c0_25 = arith.constant 0 : index
    %c0_26 = arith.constant 0 : index
    %c0_27 = arith.constant 0 : index
    %60 = vector.load %arg6[%c0_25, %c0_26, %c0_27] : memref<1x2x128xf32, #tpu.memory_space<vmem>>, vector<1x2x128xf32>
    tpu.vector_store %arg6[%c0_25, %c0_26, %c0_27], %59 {strides = array<i32>} : memref<1x2x128xf32, #tpu.memory_space<vmem>>, vector<1x2x128xf32>,
    %61 = vector.shape_cast %52 : vector<256x128xf32> to vector<1x16x16x128xf32>
    %62 = arith.truncf %61 : vector<1x16x16x128xf32> to vector<1x16x16x128xbf16>
    %c0_28 = arith.constant 0 : index
    %c0_29 = arith.constant 0 : index
    %c0_30 = arith.constant 0 : index
    %c0_31 = arith.constant 0 : index
    %63 = vector.load %arg5[%c0_28, %c0_29, %c0_30, %c0_31] : memref<1x16x16x128xbf16, #tpu.memory_space<vmem>>, vector<1x16x16x128xbf16>
    tpu.vector_store %arg5[%c0_28, %c0_29, %c0_30, %c0_31], %62 {strides = array<i32>} : memref<1x16x16x128xbf16, #tpu.memory_space<vmem>>, vector<1x16x16x128xbf16>,
    return
  }
  func.func @transform_0(%arg0: i32) -> (i32, i32, i32, i32) {
    %c0_i32 = arith.constant 0 : i32
    %c0_i32_0 = arith.constant 0 : i32
    %c0_i32_1 = arith.constant 0 : i32
    %c0_i32_2 = arith.constant 0 : i32
    return %arg0, %c0_i32, %c0_i32_0, %c0_i32_1 : i32, i32, i32, i32
  }
  func.func @transform_1(%arg0: i32) -> (i32, i32) {
    %c0_i32 = arith.constant 0 : i32
    %c0_i32_0 = arith.constant 0 : i32
    %c0_i32_1 = arith.constant 0 : i32
    return %c0_i32, %c0_i32_0 : i32, i32
  }
  func.func @transform_2(%arg0: i32) -> (i32, i32) {
    %c0_i32 = arith.constant 0 : i32
    %c0_i32_0 = arith.constant 0 : i32
    %c0_i32_1 = arith.constant 0 : i32
    return %c0_i32, %c0_i32_0 : i32, i32
  }
  func.func @transform_3(%arg0: i32) -> (i32, i32) {
    %c0_i32 = arith.constant 0 : i32
    %c0_i32_0 = arith.constant 0 : i32
    %c0_i32_1 = arith.constant 0 : i32
    return %c0_i32, %c0_i32_0 : i32, i32
  }
  func.func @transform_4(%arg0: i32) -> (i32, i32, i32, i32) {
    %c0_i32 = arith.constant 0 : i32
    %c0_i32_0 = arith.constant 0 : i32
    %c0_i32_1 = arith.constant 0 : i32
    %c0_i32_2 = arith.constant 0 : i32
    return %arg0, %c0_i32, %c0_i32_0, %c0_i32_1 : i32, i32, i32, i32
  }
  func.func @transform_5(%arg0: i32) -> (i32, i32, i32) {
    %c0_i32 = arith.constant 0 : i32
    %c0_i32_0 = arith.constant 0 : i32
    %c0_i32_1 = arith.constant 0 : i32
    return %arg0, %c0_i32, %c0_i32_0 : i32, i32, i32
  }
}

</mosaic_0001>

<llo_original>
// kernel: _lambda_.5
$region0: #{_lambda_.5}
  #allocation0 [shape = 'u32[]', space=smem, size = 0x4, offset = 0x4, fixed_abs, tag = 'smem constant byte address 0x4 - core index']
  #allocation1 [shape = 'u32[144,128]{1,0:T(1,128)}', space=vmem, size = 0x12000, scoped, tag = 'internal scratch']
  %s0 = inlined_call_operand.vmem [shape: bf16[2,16,16,128], index: 0, kind: input, shape index: {}, may-alias: {0,4}]
  %s1 = inlined_call_operand.vmem [shape: f32[1,128], index: 1, kind: input, shape index: {}]
  %s2 = inlined_call_operand.vmem [shape: f32[1,128], index: 2, kind: input, shape index: {}]
  %s3 = inlined_call_operand.vmem [shape: bf16[2,16,16,128], index: 3, kind: input, shape index: {}]
  %s4 = inlined_call_operand.vmem [shape: bf16[2,16,16,128], index: 4, kind: output, shape index: {}, may-alias: {0,4}]
  %s5 = sld [smem:[#allocation0]]
  $region49: #{_lambda_.5} parent=0
    _
  %s7 = ssub.s32 1, %s5
  %s8 = scalar_select 0, %s7, %s5
  loop: start=0, step=1, limit=4
  $region2: #{_lambda_.5} parent=0 // loop_pre_header
    _
  $region3: #{_lambda_.5} parent=0 // loop_header
    %s10 = sphi 0, %s14
    %p11 = scmp.ge.s32.totalorder %s10, 4
    %s20 = sphi 0, %s22
    %s23 = sphi 0, %s20
    %s24 = sphi 0, %s23
    %s40 = sphi 0, %s24
    %s44 = sphi 0, %s44
    %s46 = sphi 0, %s44
    %s47 = sphi 0, %s46
    %s61 = sphi 0, %s47
    %s65 = sphi 0, %s65
    %s67 = sphi 0, %s65
    %s68 = sphi 0, %s67
    %s82 = sphi 0, %s68
    %s88 = sphi 0, %s90
    %s91 = sphi 0, %s88
    %s92 = sphi 0, %s91
    %s108 = sphi 0, %s92
    %s114 = sphi 0, %s116
    %s117 = sphi 0, %s114
    %s118 = sphi 0, %s117
    %s134 = sphi 0, %s118
  $region4: #{_lambda_.5} parent=0 // loop_header_branch
    %13 = sbr.rel (%p11) target = $region8
  $region5: #{_lambda_.5} parent=0 // loop_body
    %s15 = ssub.s32 %s10, 1
    %s16 = ssub.s32 %s10, 2
    %s17 = sadd.s32 %s10, 1
    %s18 = ssub.s32 %s10, %s17
    %p19 = scmp.eq.s32.totalorder %s18, 0
    %s21 = sadd.s32 %s20, 1
    %s22 = scalar_select %p19, %s20, %s21
    %p25 = pneg %p19
    %p26 = scmp.eq.s32.totalorder %s10, 1
    %p27 = por %p25, %p26
    %p28 = scmp.ne.s32.totalorder %s20, %s23
    %p29 = scmp.eq.s32.totalorder %s10, 0
    %p30 = por %p28, %p29
    %p31 = scmp.ne.s32.totalorder %s20, %s23
    %p32 = scmp.eq.s32.totalorder %s15, 1
    %p33 = por %p31, %p32
    %p34 = scmp.ne.s32.totalorder %s23, %s24
    %p35 = scmp.eq.s32.totalorder %s15, 0
    %p36 = por %p34, %p35
    %p37 = scmp.ne.s32.totalorder %s23, %s24
    %p38 = scmp.eq.s32.totalorder %s16, 1
    %p39 = por %p37, %p38
    %p41 = scmp.ne.s32.totalorder %s24, %s40
    %p42 = scmp.eq.s32.totalorder %s16, 0
    %p43 = por %p41, %p42
    %s45 = sadd.s32 %s44, 1
    %p48 = scmp.eq.s32.totalorder %s10, 1
    %p49 = scmp.ne.s32.totalorder %s44, %s46
    %p50 = scmp.eq.s32.totalorder %s10, 0
    %p51 = por %p49, %p50
    %p52 = scmp.ne.s32.totalorder %s44, %s46
    %p53 = scmp.eq.s32.totalorder %s15, 1
    %p54 = por %p52, %p53
    %p55 = scmp.ne.s32.totalorder %s46, %s47
    %p56 = scmp.eq.s32.totalorder %s15, 0
    %p57 = por %p55, %p56
    %p58 = scmp.ne.s32.totalorder %s46, %s47
    %p59 = scmp.eq.s32.totalorder %s16, 1
    %p60 = por %p58, %p59
    %p62 = scmp.ne.s32.totalorder %s47, %s61
    %p63 = scmp.eq.s32.totalorder %s16, 0
    %p64 = por %p62, %p63
    %s66 = sadd.s32 %s65, 1
    %p69 = scmp.eq.s32.totalorder %s10, 1
    %p70 = scmp.ne.s32.totalorder %s65, %s67
    %p71 = scmp.eq.s32.totalorder %s10, 0
    %p72 = por %p70, %p71
    %p73 = scmp.ne.s32.totalorder %s65, %s67
    %p74 = scmp.eq.s32.totalorder %s15, 1
    %p75 = por %p73, %p74
    %p76 = scmp.ne.s32.totalorder %s67, %s68
    %p77 = scmp.eq.s32.totalorder %s15, 0
    %p78 = por %p76, %p77
    %p79 = scmp.ne.s32.totalorder %s67, %s68
    %p80 = scmp.eq.s32.totalorder %s16, 1
    %p81 = por %p79, %p80
    %p83 = scmp.ne.s32.totalorder %s68, %s82
    %p84 = scmp.eq.s32.totalorder %s16, 0
    %p85 = por %p83, %p84
    %s86 = ssub.s32 %s10, %s17
    %p87 = scmp.eq.s32.totalorder %s86, 0
    %s89 = sadd.s32 %s88, 1
    %s90 = scalar_select %p87, %s88, %s89
    %p93 = pneg %p87
    %p94 = scmp.eq.s32.totalorder %s10, 1
    %p95 = por %p93, %p94
    %p96 = scmp.ne.s32.totalorder %s88, %s91
    %p97 = scmp.eq.s32.totalorder %s10, 0
    %p98 = por %p96, %p97
    %p99 = scmp.ne.s32.totalorder %s88, %s91
    %p100 = scmp.eq.s32.totalorder %s15, 1
    %p101 = por %p99, %p100
    %p102 = scmp.ne.s32.totalorder %s91, %s92
    %p103 = scmp.eq.s32.totalorder %s15, 0
    %p104 = por %p102, %p103
    %p105 = scmp.ne.s32.totalorder %s91, %s92
    %p106 = scmp.eq.s32.totalorder %s16, 1
    %p107 = por %p105, %p106
    %p109 = scmp.ne.s32.totalorder %s92, %s108
    %p110 = scmp.eq.s32.totalorder %s16, 0
    %p111 = por %p109, %p110
    %s112 = ssub.s32 %s10, %s17
    %p113 = scmp.eq.s32.totalorder %s112, 0
    %s115 = sadd.s32 %s114, 1
    %s116 = scalar_select %p113, %s114, %s115
    %p119 = pneg %p113
    %p120 = scmp.eq.s32.totalorder %s10, 1
    %p121 = por %p119, %p120
    %p122 = scmp.ne.s32.totalorder %s114, %s117
    %p123 = scmp.eq.s32.totalorder %s10, 0
    %p124 = por %p122, %p123
    %p125 = scmp.ne.s32.totalorder %s114, %s117
    %p126 = scmp.eq.s32.totalorder %s15, 1
    %p127 = por %p125, %p126
    %p128 = scmp.ne.s32.totalorder %s117, %s118
    %p129 = scmp.eq.s32.totalorder %s15, 0
    %p130 = por %p128, %p129
    %p131 = scmp.ne.s32.totalorder %s117, %s118
    %p132 = scmp.eq.s32.totalorder %s16, 1
    %p133 = por %p131, %p132
    %p135 = scmp.ne.s32.totalorder %s118, %s134
    %p136 = scmp.eq.s32.totalorder %s16, 0
    %p137 = por %p135, %p136
    %p138 = scmp.le.s32.totalorder 1, %s10
    %p139 = scmp.lt.s32.totalorder %s10, 3
    %p140 = pnand %p138, %p139
    %p141 = pneg %p140
    // Predicated region
    $region9: #{_lambda_.5} parent=5 // pred_check
      _
    $region10: #{_lambda_.5} parent=5 // pred_check_branch
      %143 = sbr.rel (%p140) target = $region12
    $region11: #{_lambda_.5} parent=5 // pred_region
      %s144 = ssub.s32 %s10, 1
      // Predicated region
      $region13: #{_lambda_.5} parent=11 // pred_check
        %p145 = pneg %p57
      $region14: #{_lambda_.5} parent=11 // pred_check_branch
        %147 = sbr.rel (%p145) target = $region16
      $region15: #{_lambda_.5} parent=11 // pred_region
        _
      $region16: #{_lambda_.5} parent=11 // pred_fallthru
        _
      // Predicated region
      $region17: #{_lambda_.5} parent=11 // pred_check
        %p148 = pneg %p78
      $region18: #{_lambda_.5} parent=11 // pred_check_branch
        %150 = sbr.rel (%p148) target = $region20
      $region19: #{_lambda_.5} parent=11 // pred_region
        _
      $region20: #{_lambda_.5} parent=11 // pred_fallthru
        _
    $region12: #{_lambda_.5} parent=5 // pred_fallthru
      _
    %p151 = scmp.lt.s32.totalorder %s10, 2
    // Predicated region
    $region21: #{_lambda_.5} parent=5 // pred_check
      %p152 = pneg %p151
    $region22: #{_lambda_.5} parent=5 // pred_check_branch
      %154 = sbr.rel (%p152) target = $region24
    $region23: #{_lambda_.5} parent=5 // pred_region
      // Predicated region
      $region25: #{_lambda_.5} parent=23 // pred_check
        %p155 = pneg %p30
      $region26: #{_lambda_.5} parent=23 // pred_check_branch
        %157 = sbr.rel (%p155) target = $region28
      $region27: #{_lambda_.5} parent=23 // pred_region
        %p158 = scmp.lt.s32.totalorder %s10, 1
        %s159 = scalar_select %p158, %s10, 1
        %s160 = smul.addr %s159, 32
        %s161 = smul.addr %s160, 4
        %s162 = scalar_lea.vmem %s0, %s161
      $region28: #{_lambda_.5} parent=23 // pred_fallthru
        _
      // Predicated region
      $region29: #{_lambda_.5} parent=23 // pred_check
        %p163 = pneg %p98
      $region30: #{_lambda_.5} parent=23 // pred_check_branch
        %165 = sbr.rel (%p163) target = $region32
      $region31: #{_lambda_.5} parent=23 // pred_region
        %p166 = scmp.lt.s32.totalorder %s10, 1
        %s167 = scalar_select %p166, %s10, 1
        %s168 = smul.addr %s167, 32
        %s169 = smul.addr %s168, 4
        %s170 = scalar_lea.vmem %s3, %s169
      $region32: #{_lambda_.5} parent=23 // pred_fallthru
        _
    $region24: #{_lambda_.5} parent=5 // pred_fallthru
      _
    %p171 = scmp.le.s32.totalorder 1, %s10
    %p172 = scmp.lt.s32.totalorder %s10, 3
    %p173 = pnand %p171, %p172
    %p174 = pneg %p173
    // Predicated region
    $region33: #{_lambda_.5} parent=5 // pred_check
      _
    $region34: #{_lambda_.5} parent=5 // pred_check_branch
      %176 = sbr.rel (%p173) target = $region36
    $region35: #{_lambda_.5} parent=5 // pred_region
      %s177 = ssub.s32 %s10, 1
      %p178 = scmp.lt.s32.totalorder %s15, 1
      %s179 = scalar_select %p178, %s15, 1
      %s180 = smul.addr %s179, 32
      %s181 = smul.addr %s180, 4
      %s182 = scalar_lea.vmem %s0, %s181
      %p183 = pneg %p36
      %p184 = pneg %p33
      %p185 = pneg %p57
      %p186 = pneg %p54
      %p187 = pneg %p78
      %p188 = pneg %p75
      %p189 = scmp.lt.s32.totalorder %s15, 1
      %s190 = scalar_select %p189, %s15, 1
      %s191 = smul.addr %s190, 32
      %s192 = smul.addr %s191, 4
      %s193 = scalar_lea.vmem %s3, %s192
      %p194 = pneg %p104
      %p195 = pneg %p101
      %p196 = pneg %p130
      %p197 = pneg %p127
      %p198 = scmp.lt.s32.totalorder %s15, 1
      %s199 = scalar_select %p198, %s15, 1
      %s200 = smul.addr %s199, 32
      %s201 = smul.addr %s200, 4
      %s202 = scalar_lea.vmem %s4, %s201
      %p203 = scmp.lt.s32.totalorder %s15, 1
      %s204 = scalar_select %p203, %s15, 1
      %s205 = smul.addr %s204, 32
      %s206 = smul.addr %s205, 4
      %s207 = scalar_lea.vmem %s0, %s206
      %p208 = scmp.lt.s32.totalorder %s15, 1
      %s209 = scalar_select %p208, %s15, 1
      %s210 = smul.addr %s209, 32
      %s211 = smul.addr %s210, 4
      %s212 = scalar_lea.vmem %s3, %s211
      %p213 = scmp.lt.s32.totalorder %s15, 1
      %s214 = scalar_select %p213, %s15, 1
      %s215 = smul.addr %s214, 32
      %s216 = smul.addr %s215, 4
      %s217 = scalar_lea.vmem %s4, %s216
      %v218 = vld [vmem:[%s207] sm:$0xf]
      %v219 = vld [vmem:[%s207 + $0x4] sm:$0xf]
      %v220 = vld [vmem:[%s207 + $0x8] sm:$0xf]
      %v221 = vld [vmem:[%s207 + $0xc] sm:$0xf]
      %v222 = vld [vmem:[%s207 + $0x10] sm:$0xf]
      %v223 = vld [vmem:[%s207 + $0x14] sm:$0xf]
      %v224 = vld [vmem:[%s207 + $0x18] sm:$0xf]
      %v225 = vld [vmem:[%s207 + $0x1c] sm:$0xf]
      %v226 = vld [vmem:[%s207 + $0x20] sm:$0xf]
      %v227 = vld [vmem:[%s207 + $0x24] sm:$0xf]
      %v228 = vld [vmem:[%s207 + $0x28] sm:$0xf]
      %v229 = vld [vmem:[%s207 + $0x2c] sm:$0xf]
      %v230 = vld [vmem:[%s207 + $0x30] sm:$0xf]
      %v231 = vld [vmem:[%s207 + $0x34] sm:$0xf]
      %v232 = vld [vmem:[%s207 + $0x38] sm:$0xf]
      %v233 = vld [vmem:[%s207 + $0x3c] sm:$0xf]
      %v234 = vld [vmem:[%s207 + $0x40] sm:$0xf]
      %v235 = vld [vmem:[%s207 + $0x44] sm:$0xf]
      %v236 = vld [vmem:[%s207 + $0x48] sm:$0xf]
      %v237 = vld [vmem:[%s207 + $0x4c] sm:$0xf]
      %v238 = vld [vmem:[%s207 + $0x50] sm:$0xf]
      %v239 = vld [vmem:[%s207 + $0x54] sm:$0xf]
      %v240 = vld [vmem:[%s207 + $0x58] sm:$0xf]
      %v241 = vld [vmem:[%s207 + $0x5c] sm:$0xf]
      %v242 = vld [vmem:[%s207 + $0x60] sm:$0xf]
      %v243 = vld [vmem:[%s207 + $0x64] sm:$0xf]
      %v244 = vld [vmem:[%s207 + $0x68] sm:$0xf]
      %v245 = vld [vmem:[%s207 + $0x6c] sm:$0xf]
      %v246 = vld [vmem:[%s207 + $0x70] sm:$0xf]
      %v247 = vld [vmem:[%s207 + $0x74] sm:$0xf]
      %v248 = vld [vmem:[%s207 + $0x78] sm:$0xf]
      %v249 = vld [vmem:[%s207 + $0x7c] sm:$0xf]
      %v250 = vunpack.c.l.bf16 %v218
      %v251 = vunpack.c.l.bf16 %v219
      %v252 = vunpack.c.l.bf16 %v220
      %v253 = vunpack.c.l.bf16 %v221
      %v254 = vunpack.c.l.bf16 %v222
      %v255 = vunpack.c.l.bf16 %v223
      %v256 = vunpack.c.l.bf16 %v224
      %v257 = vunpack.c.l.bf16 %v225
      %v258 = vunpack.c.l.bf16 %v226
      %v259 = vunpack.c.l.bf16 %v227
      %v260 = vunpack.c.l.bf16 %v228
      %v261 = vunpack.c.l.bf16 %v229
      %v262 = vunpack.c.l.bf16 %v230
      %v263 = vunpack.c.l.bf16 %v231
      %v264 = vunpack.c.l.bf16 %v232
      %v265 = vunpack.c.l.bf16 %v233
      %v266 = vunpack.c.l.bf16 %v234
      %v267 = vunpack.c.l.bf16 %v235
      %v268 = vunpack.c.l.bf16 %v236
      %v269 = vunpack.c.l.bf16 %v237
      %v270 = vunpack.c.l.bf16 %v238
      %v271 = vunpack.c.l.bf16 %v239
      %v272 = vunpack.c.l.bf16 %v240
      %v273 = vunpack.c.l.bf16 %v241
      %v274 = vunpack.c.l.bf16 %v242
      %v275 = vunpack.c.l.bf16 %v243
      %v276 = vunpack.c.l.bf16 %v244
      %v277 = vunpack.c.l.bf16 %v245
      %v278 = vunpack.c.l.bf16 %v246
      %v279 = vunpack.c.l.bf16 %v247
      %v280 = vunpack.c.l.bf16 %v248
      %v281 = vunpack.c.l.bf16 %v249
      %v282 = vld [vmem:[%s1] sm:$0x1]
      %v284 = vlaneseq
      %v285 = vshrl.u32 %v284, 7
      %v286 = vsub.s32 0, %v285
      %v287 = vrot.slane %v282, %v286
      %v289 = vmul.f32 %v250, %v287
      %v290 = vmul.f32 %v251, %v287
      %v291 = vmul.f32 %v252, %v287
      %v292 = vmul.f32 %v253, %v287
      %v293 = vmul.f32 %v254, %v287
      %v294 = vmul.f32 %v255, %v287
      %v295 = vmul.f32 %v256, %v287
      %v296 = vmul.f32 %v257, %v287
      %v297 = vmul.f32 %v258, %v287
      %v298 = vmul.f32 %v259, %v287
      %v299 = vmul.f32 %v260, %v287
      %v300 = vmul.f32 %v261, %v287
      %v301 = vmul.f32 %v262, %v287
      %v302 = vmul.f32 %v263, %v287
      %v303 = vmul.f32 %v264, %v287
      %v304 = vmul.f32 %v265, %v287
      %v305 = vmul.f32 %v266, %v287
      %v306 = vmul.f32 %v267, %v287
      %v307 = vmul.f32 %v268, %v287
      %v308 = vmul.f32 %v269, %v287
      %v309 = vmul.f32 %v270, %v287
      %v310 = vmul.f32 %v271, %v287
      %v311 = vmul.f32 %v272, %v287
      %v312 = vmul.f32 %v273, %v287
      %v313 = vmul.f32 %v274, %v287
      %v314 = vmul.f32 %v275, %v287
      %v315 = vmul.f32 %v276, %v287
      %v316 = vmul.f32 %v277, %v287
      %v317 = vmul.f32 %v278, %v287
      %v318 = vmul.f32 %v279, %v287
      %v319 = vmul.f32 %v280, %v287
      %v320 = vmul.f32 %v281, %v287
      %v321 = vld [vmem:[%s2] sm:$0x1]
      %v323 = vlaneseq
      %v324 = vshrl.u32 %v323, 7
      %v325 = vsub.s32 0, %v324
      %v326 = vrot.slane %v321, %v325
      %v328 = vadd.f32 %v289, %v326
      %v329 = vadd.f32 %v290, %v326
      %v330 = vadd.f32 %v291, %v326
      %v331 = vadd.f32 %v292, %v326
      %v332 = vadd.f32 %v293, %v326
      %v333 = vadd.f32 %v294, %v326
      %v334 = vadd.f32 %v295, %v326
      %v335 = vadd.f32 %v296, %v326
      %v336 = vadd.f32 %v297, %v326
      %v337 = vadd.f32 %v298, %v326
      %v338 = vadd.f32 %v299, %v326
      %v339 = vadd.f32 %v300, %v326
      %v340 = vadd.f32 %v301, %v326
      %v341 = vadd.f32 %v302, %v326
      %v342 = vadd.f32 %v303, %v326
      %v343 = vadd.f32 %v304, %v326
      %v344 = vadd.f32 %v305, %v326
      %v345 = vadd.f32 %v306, %v326
      %v346 = vadd.f32 %v307, %v326
      %v347 = vadd.f32 %v308, %v326
      %v348 = vadd.f32 %v309, %v326
      %v349 = vadd.f32 %v310, %v326
      %v350 = vadd.f32 %v311, %v326
      %v351 = vadd.f32 %v312, %v326
      %v352 = vadd.f32 %v313, %v326
      %v353 = vadd.f32 %v314, %v326
      %v354 = vadd.f32 %v315, %v326
      %v355 = vadd.f32 %v316, %v326
      %v356 = vadd.f32 %v317, %v326
      %v357 = vadd.f32 %v318, %v326
      %v358 = vadd.f32 %v319, %v326
      %v359 = vadd.f32 %v320, %v326
      %v360 = vld [vmem:[%s212] sm:$0xf]
      %v361 = vld [vmem:[%s212 + $0x4] sm:$0xf]
      %v362 = vld [vmem:[%s212 + $0x8] sm:$0xf]
      %v363 = vld [vmem:[%s212 + $0xc] sm:$0xf]
      %v364 = vld [vmem:[%s212 + $0x10] sm:$0xf]
      %v365 = vld [vmem:[%s212 + $0x14] sm:$0xf]
      %v366 = vld [vmem:[%s212 + $0x18] sm:$0xf]
      %v367 = vld [vmem:[%s212 + $0x1c] sm:$0xf]
      %v368 = vld [vmem:[%s212 + $0x20] sm:$0xf]
      %v369 = vld [vmem:[%s212 + $0x24] sm:$0xf]
      %v370 = vld [vmem:[%s212 + $0x28] sm:$0xf]
      %v371 = vld [vmem:[%s212 + $0x2c] sm:$0xf]
      %v372 = vld [vmem:[%s212 + $0x30] sm:$0xf]
      %v373 = vld [vmem:[%s212 + $0x34] sm:$0xf]
      %v374 = vld [vmem:[%s212 + $0x38] sm:$0xf]
      %v375 = vld [vmem:[%s212 + $0x3c] sm:$0xf]
      %v376 = vld [vmem:[%s212 + $0x40] sm:$0xf]
      %v377 = vld [vmem:[%s212 + $0x44] sm:$0xf]
      %v378 = vld [vmem:[%s212 + $0x48] sm:$0xf]
      %v379 = vld [vmem:[%s212 + $0x4c] sm:$0xf]
      %v380 = vld [vmem:[%s212 + $0x50] sm:$0xf]
      %v381 = vld [vmem:[%s212 + $0x54] sm:$0xf]
      %v382 = vld [vmem:[%s212 + $0x58] sm:$0xf]
      %v383 = vld [vmem:[%s212 + $0x5c] sm:$0xf]
      %v384 = vld [vmem:[%s212 + $0x60] sm:$0xf]
      %v385 = vld [vmem:[%s212 + $0x64] sm:$0xf]
      %v386 = vld [vmem:[%s212 + $0x68] sm:$0xf]
      %v387 = vld [vmem:[%s212 + $0x6c] sm:$0xf]
      %v388 = vld [vmem:[%s212 + $0x70] sm:$0xf]
      %v389 = vld [vmem:[%s212 + $0x74] sm:$0xf]
      %v390 = vld [vmem:[%s212 + $0x78] sm:$0xf]
      %v391 = vld [vmem:[%s212 + $0x7c] sm:$0xf]
      %v392 = vunpack.c.l.bf16 %v360
      %v393 = vunpack.c.l.bf16 %v361
      %v394 = vunpack.c.l.bf16 %v362
      %v395 = vunpack.c.l.bf16 %v363
      %v396 = vunpack.c.l.bf16 %v364
      %v397 = vunpack.c.l.bf16 %v365
      %v398 = vunpack.c.l.bf16 %v366
      %v399 = vunpack.c.l.bf16 %v367
      %v400 = vunpack.c.l.bf16 %v368
      %v401 = vunpack.c.l.bf16 %v369
      %v402 = vunpack.c.l.bf16 %v370
      %v403 = vunpack.c.l.bf16 %v371
      %v404 = vunpack.c.l.bf16 %v372
      %v405 = vunpack.c.l.bf16 %v373
      %v406 = vunpack.c.l.bf16 %v374
      %v407 = vunpack.c.l.bf16 %v375
      %v408 = vunpack.c.l.bf16 %v376
      %v409 = vunpack.c.l.bf16 %v377
      %v410 = vunpack.c.l.bf16 %v378
      %v411 = vunpack.c.l.bf16 %v379
      %v412 = vunpack.c.l.bf16 %v380
      %v413 = vunpack.c.l.bf16 %v381
      %v414 = vunpack.c.l.bf16 %v382
      %v415 = vunpack.c.l.bf16 %v383
      %v416 = vunpack.c.l.bf16 %v384
      %v417 = vunpack.c.l.bf16 %v385
      %v418 = vunpack.c.l.bf16 %v386
      %v419 = vunpack.c.l.bf16 %v387
      %v420 = vunpack.c.l.bf16 %v388
      %v421 = vunpack.c.l.bf16 %v389
      %v422 = vunpack.c.l.bf16 %v390
      %v423 = vunpack.c.l.bf16 %v391
      %v424 = vadd.f32 %v328, %v392
      %v425 = vadd.f32 %v329, %v393
      %v426 = vadd.f32 %v330, %v394
      %v427 = vadd.f32 %v331, %v395
      %v428 = vadd.f32 %v332, %v396
      %v429 = vadd.f32 %v333, %v397
      %v430 = vadd.f32 %v334, %v398
      %v431 = vadd.f32 %v335, %v399
      %v432 = vadd.f32 %v336, %v400
      %v433 = vadd.f32 %v337, %v401
      %v434 = vadd.f32 %v338, %v402
      %v435 = vadd.f32 %v339, %v403
      %v436 = vadd.f32 %v340, %v404
      %v437 = vadd.f32 %v341, %v405
      %v438 = vadd.f32 %v342, %v406
      %v439 = vadd.f32 %v343, %v407
      %v440 = vadd.f32 %v344, %v408
      %v441 = vadd.f32 %v345, %v409
      %v442 = vadd.f32 %v346, %v410
      %v443 = vadd.f32 %v347, %v411
      %v444 = vadd.f32 %v348, %v412
      %v445 = vadd.f32 %v349, %v413
      %v446 = vadd.f32 %v350, %v414
      %v447 = vadd.f32 %v351, %v415
      %v448 = vadd.f32 %v352, %v416
      %v449 = vadd.f32 %v353, %v417
      %v450 = vadd.f32 %v354, %v418
      %v451 = vadd.f32 %v355, %v419
      %v452 = vadd.f32 %v356, %v420
      %v453 = vadd.f32 %v357, %v421
      %v454 = vadd.f32 %v358, %v422
      %v455 = vadd.f32 %v359, %v423
      %v456 = vmax.f32 %v424, 0.0
      %v457 = vmax.f32 %v425, 0.0
      %v458 = vmax.f32 %v426, 0.0
      %v459 = vmax.f32 %v427, 0.0
      %v460 = vmax.f32 %v428, 0.0
      %v461 = vmax.f32 %v429, 0.0
      %v462 = vmax.f32 %v430, 0.0
      %v463 = vmax.f32 %v431, 0.0
      %v464 = vmax.f32 %v432, 0.0
      %v465 = vmax.f32 %v433, 0.0
      %v466 = vmax.f32 %v434, 0.0
      %v467 = vmax.f32 %v435, 0.0
      %v468 = vmax.f32 %v436, 0.0
      %v469 = vmax.f32 %v437, 0.0
      %v470 = vmax.f32 %v438, 0.0
      %v471 = vmax.f32 %v439, 0.0
      %v472 = vmax.f32 %v440, 0.0
      %v473 = vmax.f32 %v441, 0.0
      %v474 = vmax.f32 %v442, 0.0
      %v475 = vmax.f32 %v443, 0.0
      %v476 = vmax.f32 %v444, 0.0
      %v477 = vmax.f32 %v445, 0.0
      %v478 = vmax.f32 %v446, 0.0
      %v479 = vmax.f32 %v447, 0.0
      %v480 = vmax.f32 %v448, 0.0
      %v481 = vmax.f32 %v449, 0.0
      %v482 = vmax.f32 %v450, 0.0
      %v483 = vmax.f32 %v451, 0.0
      %v484 = vmax.f32 %v452, 0.0
      %v485 = vmax.f32 %v453, 0.0
      %v486 = vmax.f32 %v454, 0.0
      %v487 = vmax.f32 %v455, 0.0
      %v488 = vpack.c.bf16 %v457, %v456
      %v489 = vpack.c.bf16 %v459, %v458
      %v490 = vpack.c.bf16 %v461, %v460
      %v491 = vpack.c.bf16 %v463, %v462
      %v492 = vpack.c.bf16 %v465, %v464
      %v493 = vpack.c.bf16 %v467, %v466
      %v494 = vpack.c.bf16 %v469, %v468
      %v495 = vpack.c.bf16 %v471, %v470
      %v496 = vpack.c.bf16 %v473, %v472
      %v497 = vpack.c.bf16 %v475, %v474
      %v498 = vpack.c.bf16 %v477, %v476
      %v499 = vpack.c.bf16 %v479, %v478
      %v500 = vpack.c.bf16 %v481, %v480
      %v501 = vpack.c.bf16 %v483, %v482
      %v502 = vpack.c.bf16 %v485, %v484
      %v503 = vpack.c.bf16 %v487, %v486
      %v520 = vunpack.c.l.b16 %v488
      %v521 = vunpack.c.h.b16 %v488
      %v522 = vunpack.c.l.b16 %v489
      %v523 = vunpack.c.h.b16 %v489
      %v524 = vunpack.c.l.b16 %v490
      %v525 = vunpack.c.h.b16 %v490
      %v526 = vunpack.c.l.b16 %v491
      %v527 = vunpack.c.h.b16 %v491
      %v528 = vunpack.c.l.b16 %v492
      %v529 = vunpack.c.h.b16 %v492
      %v530 = vunpack.c.l.b16 %v493
      %v531 = vunpack.c.h.b16 %v493
      %v532 = vunpack.c.l.b16 %v494
      %v533 = vunpack.c.h.b16 %v494
      %v534 = vunpack.c.l.b16 %v495
      %v535 = vunpack.c.h.b16 %v495
      %v536 = vunpack.c.l.b16 %v496
      %v537 = vunpack.c.h.b16 %v496
      %v538 = vunpack.c.l.b16 %v497
      %v539 = vunpack.c.h.b16 %v497
      %v540 = vunpack.c.l.b16 %v498
      %v541 = vunpack.c.h.b16 %v498
      %v542 = vunpack.c.l.b16 %v499
      %v543 = vunpack.c.h.b16 %v499
      %v544 = vunpack.c.l.b16 %v500
      %v545 = vunpack.c.h.b16 %v500
      %v546 = vunpack.c.l.b16 %v501
      %v547 = vunpack.c.h.b16 %v501
      %v548 = vunpack.c.l.b16 %v502
      %v549 = vunpack.c.h.b16 %v502
      %v550 = vunpack.c.l.b16 %v503
      %v551 = vunpack.c.h.b16 %v503
      %v552 = vpack.c.b16 %v520, %v520
      %v553 = vpack.c.b16 %v521, %v521
      %v554 = vpack.c.b16 %v522, %v522
      %v555 = vpack.c.b16 %v523, %v523
      %v556 = vpack.c.b16 %v524, %v524
      %v557 = vpack.c.b16 %v525, %v525
      %v558 = vpack.c.b16 %v526, %v526
      %v559 = vpack.c.b16 %v527, %v527
      %v560 = vpack.c.b16 %v528, %v528
      %v561 = vpack.c.b16 %v529, %v529
      %v562 = vpack.c.b16 %v530, %v530
      %v563 = vpack.c.b16 %v531, %v531
      %v564 = vpack.c.b16 %v532, %v532
      %v565 = vpack.c.b16 %v533, %v533
      %v566 = vpack.c.b16 %v534, %v534
      %v567 = vpack.c.b16 %v535, %v535
      %v568 = vpack.c.b16 %v536, %v536
      %v569 = vpack.c.b16 %v537, %v537
      %v570 = vpack.c.b16 %v538, %v538
      %v571 = vpack.c.b16 %v539, %v539
      %v572 = vpack.c.b16 %v540, %v540
      %v573 = vpack.c.b16 %v541, %v541
      %v574 = vpack.c.b16 %v542, %v542
      %v575 = vpack.c.b16 %v543, %v543
      %v576 = vpack.c.b16 %v544, %v544
      %v577 = vpack.c.b16 %v545, %v545
      %v578 = vpack.c.b16 %v546, %v546
      %v579 = vpack.c.b16 %v547, %v547
      %v580 = vpack.c.b16 %v548, %v548
      %v581 = vpack.c.b16 %v549, %v549
      %v582 = vpack.c.b16 %v550, %v550
      %v583 = vpack.c.b16 %v551, %v551
      %616 = vst [vmem:[%s217] sm:$0xf] %v552
      %617 = vst [vmem:[%s217 + $0x4] sm:$0xf] %v553
      %618 = vst [vmem:[%s217 + $0x8] sm:$0xf] %v554
      %619 = vst [vmem:[%s217 + $0xc] sm:$0xf] %v555
      %620 = vst [vmem:[%s217 + $0x10] sm:$0xf] %v556
      %621 = vst [vmem:[%s217 + $0x14] sm:$0xf] %v557
      %622 = vst [vmem:[%s217 + $0x18] sm:$0xf] %v558
      %623 = vst [vmem:[%s217 + $0x1c] sm:$0xf] %v559
      %624 = vst [vmem:[%s217 + $0x20] sm:$0xf] %v560
      %625 = vst [vmem:[%s217 + $0x24] sm:$0xf] %v561
      %626 = vst [vmem:[%s217 + $0x28] sm:$0xf] %v562
      %627 = vst [vmem:[%s217 + $0x2c] sm:$0xf] %v563
      %628 = vst [vmem:[%s217 + $0x30] sm:$0xf] %v564
      %629 = vst [vmem:[%s217 + $0x34] sm:$0xf] %v565
      %630 = vst [vmem:[%s217 + $0x38] sm:$0xf] %v566
      %631 = vst [vmem:[%s217 + $0x3c] sm:$0xf] %v567
      %632 = vst [vmem:[%s217 + $0x40] sm:$0xf] %v568
      %633 = vst [vmem:[%s217 + $0x44] sm:$0xf] %v569
      %634 = vst [vmem:[%s217 + $0x48] sm:$0xf] %v570
      %635 = vst [vmem:[%s217 + $0x4c] sm:$0xf] %v571
      %636 = vst [vmem:[%s217 + $0x50] sm:$0xf] %v572
      %637 = vst [vmem:[%s217 + $0x54] sm:$0xf] %v573
      %638 = vst [vmem:[%s217 + $0x58] sm:$0xf] %v574
      %639 = vst [vmem:[%s217 + $0x5c] sm:$0xf] %v575
      %640 = vst [vmem:[%s217 + $0x60] sm:$0xf] %v576
      %641 = vst [vmem:[%s217 + $0x64] sm:$0xf] %v577
      %642 = vst [vmem:[%s217 + $0x68] sm:$0xf] %v578
      %643 = vst [vmem:[%s217 + $0x6c] sm:$0xf] %v579
      %644 = vst [vmem:[%s217 + $0x70] sm:$0xf] %v580
      %645 = vst [vmem:[%s217 + $0x74] sm:$0xf] %v581
      %646 = vst [vmem:[%s217 + $0x78] sm:$0xf] %v582
      %647 = vst [vmem:[%s217 + $0x7c] sm:$0xf] %v583
      %p648 = scmp.lt.s32.totalorder %s15, 1
      %s649 = scalar_select %p648, %s15, 1
      %s650 = smul.addr %s649, 32
      %s651 = smul.addr %s650, 4
      %s652 = scalar_lea.vmem %s4, %s651
      // Predicated region
      $region37: #{_lambda_.5} parent=35 // pred_check
        %p653 = pneg %p127
      $region38: #{_lambda_.5} parent=35 // pred_check_branch
        %655 = sbr.rel (%p653) target = $region40
      $region39: #{_lambda_.5} parent=35 // pred_region
        _
      $region40: #{_lambda_.5} parent=35 // pred_fallthru
        _
    $region36: #{_lambda_.5} parent=5 // pred_fallthru
      _
    %p656 = scmp.le.s32.totalorder 2, %s10
    // Predicated region
    $region41: #{_lambda_.5} parent=5 // pred_check
      %p657 = pneg %p656
    $region42: #{_lambda_.5} parent=5 // pred_check_branch
      %659 = sbr.rel (%p657) target = $region44
    $region43: #{_lambda_.5} parent=5 // pred_region
      %s660 = ssub.s32 %s10, 2
      // Predicated region
      $region45: #{_lambda_.5} parent=43 // pred_check
        %p661 = pneg %p133
      $region46: #{_lambda_.5} parent=43 // pred_check_branch
        %663 = sbr.rel (%p661) target = $region48
      $region47: #{_lambda_.5} parent=43 // pred_region
        %p664 = scmp.lt.s32.totalorder %s16, 1
        %s665 = scalar_select %p664, %s16, 1
        %s666 = smul.addr %s665, 32
        %s667 = smul.addr %s666, 4
        %s668 = scalar_lea.vmem %s4, %s667
      $region48: #{_lambda_.5} parent=43 // pred_fallthru
        _
    $region44: #{_lambda_.5} parent=5 // pred_fallthru
      _
  $region6: #{_lambda_.5} parent=0 // loop_footer
    %s14 = sadd.s32 1, %s10
  $region7: #{_lambda_.5} parent=0 // loop_footer_branch
    %9 = sbr.rel target = $region3
  $region8: #{_lambda_.5} parent=0 // loop_exit
    _

// kernel: _lambda_.3
$region0: #{_lambda_.3}
  #allocation0 [shape = 'u32[]', space=smem, size = 0x4, offset = 0x4, fixed_abs, tag = 'smem constant byte address 0x4 - core index']
  #allocation1 [shape = 'u32[144,128]{1,0:T(1,128)}', space=vmem, size = 0x12000, scoped, tag = 'internal scratch']
  %s0 = inlined_call_operand.vmem [shape: bf16[2,16,16,128], index: 0, kind: input, shape index: {}]
  %s1 = inlined_call_operand.vmem [shape: bf16[1152,128], index: 1, kind: input, shape index: {}]
  %s2 = inlined_call_operand.vmem [shape: bf16[2,16,16,128], index: 2, kind: output, shape index: {0}]
  %s3 = inlined_call_operand.vmem [shape: f32[2,2,128], index: 3, kind: output, shape index: {1}]
  %4 = xla_tuple %s2, %s3
  %s5 = sld [smem:[#allocation0]]
  $region49: #{_lambda_.3} parent=0
    _
  %s7 = ssub.s32 1, %s5
  %s8 = scalar_select 0, %s7, %s5
  loop: start=0, step=1, limit=4
  $region2: #{_lambda_.3} parent=0 // loop_pre_header
    _
  $region3: #{_lambda_.3} parent=0 // loop_header
    %s10 = sphi 0, %s14
    %p11 = scmp.ge.s32.totalorder %s10, 4
    %s20 = sphi 0, %s22
    %s23 = sphi 0, %s20
    %s24 = sphi 0, %s23
    %s40 = sphi 0, %s24
    %s44 = sphi 0, %s44
    %s46 = sphi 0, %s44
    %s47 = sphi 0, %s46
    %s61 = sphi 0, %s47
    %s67 = sphi 0, %s69
    %s70 = sphi 0, %s67
    %s71 = sphi 0, %s70
    %s87 = sphi 0, %s71
    %s93 = sphi 0, %s95
    %s96 = sphi 0, %s93
    %s97 = sphi 0, %s96
    %s113 = sphi 0, %s97
  $region4: #{_lambda_.3} parent=0 // loop_header_branch
    %13 = sbr.rel (%p11) target = $region8
  $region5: #{_lambda_.3} parent=0 // loop_body
    %s15 = ssub.s32 %s10, 1
    %s16 = ssub.s32 %s10, 2
    %s17 = sadd.s32 %s10, 1
    %s18 = ssub.s32 %s10, %s17
    %p19 = scmp.eq.s32.totalorder %s18, 0
    %s21 = sadd.s32 %s20, 1
    %s22 = scalar_select %p19, %s20, %s21
    %p25 = pneg %p19
    %p26 = scmp.eq.s32.totalorder %s10, 1
    %p27 = por %p25, %p26
    %p28 = scmp.ne.s32.totalorder %s20, %s23
    %p29 = scmp.eq.s32.totalorder %s10, 0
    %p30 = por %p28, %p29
    %p31 = scmp.ne.s32.totalorder %s20, %s23
    %p32 = scmp.eq.s32.totalorder %s15, 1
    %p33 = por %p31, %p32
    %p34 = scmp.ne.s32.totalorder %s23, %s24
    %p35 = scmp.eq.s32.totalorder %s15, 0
    %p36 = por %p34, %p35
    %p37 = scmp.ne.s32.totalorder %s23, %s24
    %p38 = scmp.eq.s32.totalorder %s16, 1
    %p39 = por %p37, %p38
    %p41 = scmp.ne.s32.totalorder %s24, %s40
    %p42 = scmp.eq.s32.totalorder %s16, 0
    %p43 = por %p41, %p42
    %s45 = sadd.s32 %s44, 1
    %p48 = scmp.eq.s32.totalorder %s10, 1
    %p49 = scmp.ne.s32.totalorder %s44, %s46
    %p50 = scmp.eq.s32.totalorder %s10, 0
    %p51 = por %p49, %p50
    %p52 = scmp.ne.s32.totalorder %s44, %s46
    %p53 = scmp.eq.s32.totalorder %s15, 1
    %p54 = por %p52, %p53
    %p55 = scmp.ne.s32.totalorder %s46, %s47
    %p56 = scmp.eq.s32.totalorder %s15, 0
    %p57 = por %p55, %p56
    %p58 = scmp.ne.s32.totalorder %s46, %s47
    %p59 = scmp.eq.s32.totalorder %s16, 1
    %p60 = por %p58, %p59
    %p62 = scmp.ne.s32.totalorder %s47, %s61
    %p63 = scmp.eq.s32.totalorder %s16, 0
    %p64 = por %p62, %p63
    %s65 = ssub.s32 %s10, %s17
    %p66 = scmp.eq.s32.totalorder %s65, 0
    %s68 = sadd.s32 %s67, 1
    %s69 = scalar_select %p66, %s67, %s68
    %p72 = pneg %p66
    %p73 = scmp.eq.s32.totalorder %s10, 1
    %p74 = por %p72, %p73
    %p75 = scmp.ne.s32.totalorder %s67, %s70
    %p76 = scmp.eq.s32.totalorder %s10, 0
    %p77 = por %p75, %p76
    %p78 = scmp.ne.s32.totalorder %s67, %s70
    %p79 = scmp.eq.s32.totalorder %s15, 1
    %p80 = por %p78, %p79
    %p81 = scmp.ne.s32.totalorder %s70, %s71
    %p82 = scmp.eq.s32.totalorder %s15, 0
    %p83 = por %p81, %p82
    %p84 = scmp.ne.s32.totalorder %s70, %s71
    %p85 = scmp.eq.s32.totalorder %s16, 1
    %p86 = por %p84, %p85
    %p88 = scmp.ne.s32.totalorder %s71, %s87
    %p89 = scmp.eq.s32.totalorder %s16, 0
    %p90 = por %p88, %p89
    %s91 = ssub.s32 %s10, %s17
    %p92 = scmp.eq.s32.totalorder %s91, 0
    %s94 = sadd.s32 %s93, 1
    %s95 = scalar_select %p92, %s93, %s94
    %p98 = pneg %p92
    %p99 = scmp.eq.s32.totalorder %s10, 1
    %p100 = por %p98, %p99
    %p101 = scmp.ne.s32.totalorder %s93, %s96
    %p102 = scmp.eq.s32.totalorder %s10, 0
    %p103 = por %p101, %p102
    %p104 = scmp.ne.s32.totalorder %s93, %s96
    %p105 = scmp.eq.s32.totalorder %s15, 1
    %p106 = por %p104, %p105
    %p107 = scmp.ne.s32.totalorder %s96, %s97
    %p108 = scmp.eq.s32.totalorder %s15, 0
    %p109 = por %p107, %p108
    %p110 = scmp.ne.s32.totalorder %s96, %s97
    %p111 = scmp.eq.s32.totalorder %s16, 1
    %p112 = por %p110, %p111
    %p114 = scmp.ne.s32.totalorder %s97, %s113
    %p115 = scmp.eq.s32.totalorder %s16, 0
    %p116 = por %p114, %p115
    %p117 = scmp.le.s32.totalorder 1, %s10
    %p118 = scmp.lt.s32.totalorder %s10, 3
    %p119 = pnand %p117, %p118
    %p120 = pneg %p119
    // Predicated region
    $region9: #{_lambda_.3} parent=5 // pred_check
      _
    $region10: #{_lambda_.3} parent=5 // pred_check_branch
      %122 = sbr.rel (%p119) target = $region12
    $region11: #{_lambda_.3} parent=5 // pred_region
      %s123 = ssub.s32 %s10, 1
      // Predicated region
      $region13: #{_lambda_.3} parent=11 // pred_check
        %p124 = pneg %p57
      $region14: #{_lambda_.3} parent=11 // pred_check_branch
        %126 = sbr.rel (%p124) target = $region16
      $region15: #{_lambda_.3} parent=11 // pred_region
        _
      $region16: #{_lambda_.3} parent=11 // pred_fallthru
        _
    $region12: #{_lambda_.3} parent=5 // pred_fallthru
      _
    %p127 = scmp.lt.s32.totalorder %s10, 2
    // Predicated region
    $region17: #{_lambda_.3} parent=5 // pred_check
      %p128 = pneg %p127
    $region18: #{_lambda_.3} parent=5 // pred_check_branch
      %130 = sbr.rel (%p128) target = $region20
    $region19: #{_lambda_.3} parent=5 // pred_region
      // Predicated region
      $region21: #{_lambda_.3} parent=19 // pred_check
        %p131 = pneg %p30
      $region22: #{_lambda_.3} parent=19 // pred_check_branch
        %133 = sbr.rel (%p131) target = $region24
      $region23: #{_lambda_.3} parent=19 // pred_region
        %p134 = scmp.lt.s32.totalorder %s10, 1
        %s135 = scalar_select %p134, %s10, 1
        %s136 = smul.addr %s135, 32
        %s137 = smul.addr %s136, 4
        %s138 = scalar_lea.vmem %s0, %s137
      $region24: #{_lambda_.3} parent=19 // pred_fallthru
        _
    $region20: #{_lambda_.3} parent=5 // pred_fallthru
      _
    %p139 = scmp.le.s32.totalorder 1, %s10
    %p140 = scmp.lt.s32.totalorder %s10, 3
    %p141 = pnand %p139, %p140
    %p142 = pneg %p141
    // Predicated region
    $region25: #{_lambda_.3} parent=5 // pred_check
      _
    $region26: #{_lambda_.3} parent=5 // pred_check_branch
      %144 = sbr.rel (%p141) target = $region28
    $region27: #{_lambda_.3} parent=5 // pred_region
      %s145 = ssub.s32 %s10, 1
      %p146 = scmp.lt.s32.totalorder %s15, 1
      %s147 = scalar_select %p146, %s15, 1
      %s148 = smul.addr %s147, 32
      %s149 = smul.addr %s148, 4
      %s150 = scalar_lea.vmem %s0, %s149
      %p151 = pneg %p36
      %p152 = pneg %p33
      %p153 = pneg %p57
      %p154 = pneg %p54
      %p155 = pneg %p83
      %p156 = pneg %p80
      %p157 = scmp.lt.s32.totalorder %s15, 1
      %s158 = scalar_select %p157, %s15, 1
      %s159 = smul.addr %s158, 32
      %s160 = smul.addr %s159, 4
      %s161 = scalar_lea.vmem %s2, %s160
      %p162 = pneg %p109
      %p163 = pneg %p106
      %p164 = scmp.lt.s32.totalorder %s15, 1
      %s165 = scalar_select %p164, %s15, 1
      %s166 = smul.addr %s165, 2
      %s167 = scalar_lea.vmem %s3, %s166
      %p168 = scmp.lt.s32.totalorder %s15, 1
      %s169 = scalar_select %p168, %s15, 1
      %s170 = smul.addr %s169, 32
      %s171 = smul.addr %s170, 4
      %s172 = scalar_lea.vmem %s0, %s171
      %p173 = scmp.lt.s32.totalorder %s15, 1
      %s174 = scalar_select %p173, %s15, 1
      %s175 = smul.addr %s174, 32
      %s176 = smul.addr %s175, 4
      %s177 = scalar_lea.vmem %s2, %s176
      %p178 = scmp.lt.s32.totalorder %s15, 1
      %s179 = scalar_select %p178, %s15, 1
      %s180 = smul.addr %s179, 2
      %s181 = scalar_lea.vmem %s3, %s180
      %v183 = vld [vmem:[%s172] sm:$0xf]
      %v184 = vld [vmem:[%s172 + $0x4] sm:$0xf]
      %v185 = vld [vmem:[%s172 + $0x8] sm:$0xf]
      %v186 = vld [vmem:[%s172 + $0xc] sm:$0xf]
      %v187 = vld [vmem:[%s172 + $0x10] sm:$0xf]
      %v188 = vld [vmem:[%s172 + $0x14] sm:$0xf]
      %v189 = vld [vmem:[%s172 + $0x18] sm:$0xf]
      %v190 = vld [vmem:[%s172 + $0x1c] sm:$0xf]
      %v191 = vld [vmem:[%s172 + $0x20] sm:$0xf]
      %v192 = vld [vmem:[%s172 + $0x24] sm:$0xf]
      %v193 = vld [vmem:[%s172 + $0x28] sm:$0xf]
      %v194 = vld [vmem:[%s172 + $0x2c] sm:$0xf]
      %v195 = vld [vmem:[%s172 + $0x30] sm:$0xf]
      %v196 = vld [vmem:[%s172 + $0x34] sm:$0xf]
      %v197 = vld [vmem:[%s172 + $0x38] sm:$0xf]
      %v198 = vld [vmem:[%s172 + $0x3c] sm:$0xf]
      %v199 = vld [vmem:[%s172 + $0x40] sm:$0xf]
      %v200 = vld [vmem:[%s172 + $0x44] sm:$0xf]
      %v201 = vld [vmem:[%s172 + $0x48] sm:$0xf]
      %v202 = vld [vmem:[%s172 + $0x4c] sm:$0xf]
      %v203 = vld [vmem:[%s172 + $0x50] sm:$0xf]
      %v204 = vld [vmem:[%s172 + $0x54] sm:$0xf]
      %v205 = vld [vmem:[%s172 + $0x58] sm:$0xf]
      %v206 = vld [vmem:[%s172 + $0x5c] sm:$0xf]
      %v207 = vld [vmem:[%s172 + $0x60] sm:$0xf]
      %v208 = vld [vmem:[%s172 + $0x64] sm:$0xf]
      %v209 = vld [vmem:[%s172 + $0x68] sm:$0xf]
      %v210 = vld [vmem:[%s172 + $0x6c] sm:$0xf]
      %v211 = vld [vmem:[%s172 + $0x70] sm:$0xf]
      %v212 = vld [vmem:[%s172 + $0x74] sm:$0xf]
      %v213 = vld [vmem:[%s172 + $0x78] sm:$0xf]
      %v214 = vld [vmem:[%s172 + $0x7c] sm:$0xf]
      %v245 = vunpack.c.l.b16 %v183
      %v246 = vunpack.c.l.b16 %v184
      %v247 = vunpack.c.l.b16 %v185
      %v248 = vunpack.c.l.b16 %v186
      %v249 = vunpack.c.l.b16 %v187
      %v250 = vunpack.c.l.b16 %v188
      %v251 = vunpack.c.l.b16 %v189
      %v252 = vunpack.c.l.b16 %v190
      %v253 = vunpack.c.l.b16 %v191
      %v254 = vunpack.c.l.b16 %v192
      %v255 = vunpack.c.l.b16 %v193
      %v256 = vunpack.c.l.b16 %v194
      %v257 = vunpack.c.l.b16 %v195
      %v258 = vunpack.c.l.b16 %v196
      %v259 = vunpack.c.l.b16 %v197
      %v260 = vunpack.c.l.b16 %v198
      %v261 = vunpack.c.l.b16 %v199
      %v262 = vunpack.c.l.b16 %v200
      %v263 = vunpack.c.l.b16 %v201
      %v264 = vunpack.c.l.b16 %v202
      %v265 = vunpack.c.l.b16 %v203
      %v266 = vunpack.c.l.b16 %v204
      %v267 = vunpack.c.l.b16 %v205
      %v268 = vunpack.c.l.b16 %v206
      %v269 = vunpack.c.l.b16 %v207
      %v270 = vunpack.c.l.b16 %v208
      %v271 = vunpack.c.l.b16 %v209
      %v272 = vunpack.c.l.b16 %v210
      %v273 = vunpack.c.l.b16 %v211
      %v274 = vunpack.c.l.b16 %v212
      %v275 = vpack.c.b16 %v246, %v245
      %v276 = vpack.c.b16 %v248, %v247
      %v277 = vpack.c.b16 %v250, %v249
      %v278 = vpack.c.b16 %v252, %v251
      %v279 = vpack.c.b16 %v254, %v253
      %v280 = vpack.c.b16 %v256, %v255
      %v281 = vpack.c.b16 %v258, %v257
      %v282 = vpack.c.b16 %v260, %v259
      %v283 = vpack.c.b16 %v262, %v261
      %v284 = vpack.c.b16 %v264, %v263
      %v285 = vpack.c.b16 %v266, %v265
      %v286 = vpack.c.b16 %v268, %v267
      %v287 = vpack.c.b16 %v270, %v269
      %v288 = vpack.c.b16 %v272, %v271
      %v289 = vpack.c.b16 %v274, %v273
      %v306 = vshrl.u32 0, 16
      %v308 = vrot.slane %v306, 7
      %v309 = vshll.u32 0, 16
      %v311 = vor.u32 %v308, %v309
      %v313 = vshrl.u32 %v275, 16
      %v315 = vrot.slane %v313, 7
      %v316 = vshll.u32 %v275, 16
      %v318 = vor.u32 %v315, %v316
      %v320 = vshrl.u32 %v276, 16
      %v322 = vrot.slane %v320, 7
      %v323 = vshll.u32 %v276, 16
      %v325 = vor.u32 %v322, %v323
      %v327 = vshrl.u32 %v277, 16
      %v329 = vrot.slane %v327, 7
      %v330 = vshll.u32 %v277, 16
      %v332 = vor.u32 %v329, %v330
      %v334 = vshrl.u32 %v278, 16
      %v336 = vrot.slane %v334, 7
      %v337 = vshll.u32 %v278, 16
      %v339 = vor.u32 %v336, %v337
      %v341 = vshrl.u32 %v279, 16
      %v343 = vrot.slane %v341, 7
      %v344 = vshll.u32 %v279, 16
      %v346 = vor.u32 %v343, %v344
      %v348 = vshrl.u32 %v280, 16
      %v350 = vrot.slane %v348, 7
      %v351 = vshll.u32 %v280, 16
      %v353 = vor.u32 %v350, %v351
      %v355 = vshrl.u32 %v281, 16
      %v357 = vrot.slane %v355, 7
      %v358 = vshll.u32 %v281, 16
      %v360 = vor.u32 %v357, %v358
      %v362 = vshrl.u32 %v282, 16
      %v364 = vrot.slane %v362, 7
      %v365 = vshll.u32 %v282, 16
      %v367 = vor.u32 %v364, %v365
      %v369 = vshrl.u32 %v283, 16
      %v371 = vrot.slane %v369, 7
      %v372 = vshll.u32 %v283, 16
      %v374 = vor.u32 %v371, %v372
      %v376 = vshrl.u32 %v284, 16
      %v378 = vrot.slane %v376, 7
      %v379 = vshll.u32 %v284, 16
      %v381 = vor.u32 %v378, %v379
      %v383 = vshrl.u32 %v285, 16
      %v385 = vrot.slane %v383, 7
      %v386 = vshll.u32 %v285, 16
      %v388 = vor.u32 %v385, %v386
      %v390 = vshrl.u32 %v286, 16
      %v392 = vrot.slane %v390, 7
      %v393 = vshll.u32 %v286, 16
      %v395 = vor.u32 %v392, %v393
      %v397 = vshrl.u32 %v287, 16
      %v399 = vrot.slane %v397, 7
      %v400 = vshll.u32 %v287, 16
      %v402 = vor.u32 %v399, %v400
      %v404 = vshrl.u32 %v288, 16
      %v406 = vrot.slane %v404, 7
      %v407 = vshll.u32 %v288, 16
      %v409 = vor.u32 %v406, %v407
      %v411 = vshrl.u32 %v289, 16
      %v413 = vrot.slane %v411, 7
      %v414 = vshll.u32 %v289, 16
      %v416 = vor.u32 %v413, %v414
      %vm433 = vcmask 1040384
      %vm434 = vsmask.f32 256
      %vm435 = vmand %vm433, %vm434
      %v436 = vsel %vm435, 0, %v311
      %v437 = vsel %vm435, 0, %v318
      %v438 = vsel %vm435, 0, %v325
      %v439 = vsel %vm435, 0, %v332
      %v440 = vsel %vm435, 0, %v339
      %v441 = vsel %vm435, 0, %v346
      %v442 = vsel %vm435, 0, %v353
      %v443 = vsel %vm435, 0, %v360
      %v444 = vsel %vm435, 0, %v367
      %v445 = vsel %vm435, 0, %v374
      %v446 = vsel %vm435, 0, %v381
      %v447 = vsel %vm435, 0, %v388
      %v448 = vsel %vm435, 0, %v395
      %v449 = vsel %vm435, 0, %v402
      %v450 = vsel %vm435, 0, %v409
      %v451 = vsel %vm435, 0, %v416
      %v452 = vrot.slane %v309, 1
      %v453 = vor.u32 %v306, %v452
      %v454 = vrot.slane %v316, 1
      %v455 = vor.u32 %v313, %v454
      %v456 = vrot.slane %v323, 1
      %v457 = vor.u32 %v320, %v456
      %v458 = vrot.slane %v330, 1
      %v459 = vor.u32 %v327, %v458
      %v460 = vrot.slane %v337, 1
      %v461 = vor.u32 %v334, %v460
      %v462 = vrot.slane %v344, 1
      %v463 = vor.u32 %v341, %v462
      %v464 = vrot.slane %v351, 1
      %v465 = vor.u32 %v348, %v464
      %v466 = vrot.slane %v358, 1
      %v467 = vor.u32 %v355, %v466
      %v468 = vrot.slane %v365, 1
      %v469 = vor.u32 %v362, %v468
      %v470 = vrot.slane %v372, 1
      %v471 = vor.u32 %v369, %v470
      %v472 = vrot.slane %v379, 1
      %v473 = vor.u32 %v376, %v472
      %v474 = vrot.slane %v386, 1
      %v475 = vor.u32 %v383, %v474
      %v476 = vrot.slane %v393, 1
      %v477 = vor.u32 %v390, %v476
      %v478 = vrot.slane %v400, 1
      %v479 = vor.u32 %v397, %v478
      %v480 = vrot.slane %v407, 1
      %v481 = vor.u32 %v404, %v480
      %v482 = vrot.slane %v414, 1
      %v483 = vor.u32 %v411, %v482
      %vm500 = vcmask 1047552
      %vm501 = vsmask.f32 7424
      %vm502 = vmand %vm500, %vm501
      %v503 = vsel %vm502, %v453, 0
      %v504 = vsel %vm502, %v455, 0
      %v505 = vsel %vm502, %v457, 0
      %v506 = vsel %vm502, %v459, 0
      %v507 = vsel %vm502, %v461, 0
      %v508 = vsel %vm502, %v463, 0
      %v509 = vsel %vm502, %v465, 0
      %v510 = vsel %vm502, %v467, 0
      %v511 = vsel %vm502, %v469, 0
      %v512 = vsel %vm502, %v471, 0
      %v513 = vsel %vm502, %v473, 0
      %v514 = vsel %vm502, %v475, 0
      %v515 = vsel %vm502, %v477, 0
      %v516 = vsel %vm502, %v479, 0
      %v517 = vsel %vm502, %v481, 0
      %v518 = vsel %vm502, %v483, 0
      %v519 = vld [vmem:[%s1] sm:$0xf]
      %v520 = vld [vmem:[%s1 + $0x4] sm:$0xf]
      %v521 = vld [vmem:[%s1 + $0x8] sm:$0xf]
      %v522 = vld [vmem:[%s1 + $0xc] sm:$0xf]
      %v523 = vld [vmem:[%s1 + $0x10] sm:$0xf]
      %v524 = vld [vmem:[%s1 + $0x14] sm:$0xf]
      %v525 = vld [vmem:[%s1 + $0x18] sm:$0xf]
      %v526 = vld [vmem:[%s1 + $0x1c] sm:$0xf]
      %v527 = vld [vmem:[%s1 + $0x20] sm:$0xf]
      %v528 = vld [vmem:[%s1 + $0x24] sm:$0xf]
      %v529 = vld [vmem:[%s1 + $0x28] sm:$0xf]
      %v530 = vld [vmem:[%s1 + $0x2c] sm:$0xf]
      %v531 = vld [vmem:[%s1 + $0x30] sm:$0xf]
      %v532 = vld [vmem:[%s1 + $0x34] sm:$0xf]
      %v533 = vld [vmem:[%s1 + $0x38] sm:$0xf]
      %v534 = vld [vmem:[%s1 + $0x3c] sm:$0xf]
      %v535 = vld [vmem:[%s1 + $0x40] sm:$0xf]
      %v536 = vld [vmem:[%s1 + $0x44] sm:$0xf]
      %v537 = vld [vmem:[%s1 + $0x48] sm:$0xf]
      %v538 = vld [vmem:[%s1 + $0x4c] sm:$0xf]
      %v539 = vld [vmem:[%s1 + $0x50] sm:$0xf]
      %v540 = vld [vmem:[%s1 + $0x54] sm:$0xf]
      %v541 = vld [vmem:[%s1 + $0x58] sm:$0xf]
      %v542 = vld [vmem:[%s1 + $0x5c] sm:$0xf]
      %v543 = vld [vmem:[%s1 + $0x60] sm:$0xf]
      %v544 = vld [vmem:[%s1 + $0x64] sm:$0xf]
      %v545 = vld [vmem:[%s1 + $0x68] sm:$0xf]
      %v546 = vld [vmem:[%s1 + $0x6c] sm:$0xf]
      %v547 = vld [vmem:[%s1 + $0x70] sm:$0xf]
      %v548 = vld [vmem:[%s1 + $0x74] sm:$0xf]
      %v549 = vld [vmem:[%s1 + $0x78] sm:$0xf]
      %v550 = vld [vmem:[%s1 + $0x7c] sm:$0xf]
      %v551 = vld [vmem:[%s1 + $0x80] sm:$0xf]
      %v552 = vld [vmem:[%s1 + $0x84] sm:$0xf]
      %v553 = vld [vmem:[%s1 + $0x88] sm:$0xf]
      %v554 = vld [vmem:[%s1 + $0x8c] sm:$0xf]
      %v555 = vld [vmem:[%s1 + $0x90] sm:$0xf]
      %v556 = vld [vmem:[%s1 + $0x94] sm:$0xf]
      %v557 = vld [vmem:[%s1 + $0x98] sm:$0xf]
      %v558 = vld [vmem:[%s1 + $0x9c] sm:$0xf]
      %v559 = vld [vmem:[%s1 + $0xa0] sm:$0xf]
      %v560 = vld [vmem:[%s1 + $0xa4] sm:$0xf]
      %v561 = vld [vmem:[%s1 + $0xa8] sm:$0xf]
      %v562 = vld [vmem:[%s1 + $0xac] sm:$0xf]
      %v563 = vld [vmem:[%s1 + $0xb0] sm:$0xf]
      %v564 = vld [vmem:[%s1 + $0xb4] sm:$0xf]
      %v565 = vld [vmem:[%s1 + $0xb8] sm:$0xf]
      %v566 = vld [vmem:[%s1 + $0xbc] sm:$0xf]
      %v569 = vunpack.c.l.b16 %v213
      %v570 = vunpack.c.l.b16 %v214
      %v571 = vpack.c.b16 %v570, %v569
      %v573 = vshrl.u32 %v571, 16
      %v575 = vrot.slane %v573, 7
      %v576 = vshll.u32 %v571, 16
      %v578 = vor.u32 %v575, %v576
      %v580 = vsel %vm435, 0, %v578
      %v581 = vrot.slane %v576, 1
      %v582 = vor.u32 %v573, %v581
      %v584 = vsel %vm502, %v582, 0
      %v586 = vld [vmem:[%s1 + $0xc0] sm:$0xf]
      %v587 = vld [vmem:[%s1 + $0xc4] sm:$0xf]
      %v588 = vld [vmem:[%s1 + $0xc8] sm:$0xf]
      %v589 = vld [vmem:[%s1 + $0xcc] sm:$0xf]
      %v590 = vld [vmem:[%s1 + $0xd0] sm:$0xf]
      %v591 = vld [vmem:[%s1 + $0xd4] sm:$0xf]
      %v592 = vld [vmem:[%s1 + $0xd8] sm:$0xf]
      %v593 = vld [vmem:[%s1 + $0xdc] sm:$0xf]
      %v594 = vld [vmem:[%s1 + $0xe0] sm:$0xf]
      %v595 = vld [vmem:[%s1 + $0xe4] sm:$0xf]
      %v596 = vld [vmem:[%s1 + $0xe8] sm:$0xf]
      %v597 = vld [vmem:[%s1 + $0xec] sm:$0xf]
      %v598 = vld [vmem:[%s1 + $0xf0] sm:$0xf]
      %v599 = vld [vmem:[%s1 + $0xf4] sm:$0xf]
      %v600 = vld [vmem:[%s1 + $0xf8] sm:$0xf]
      %v601 = vld [vmem:[%s1 + $0xfc] sm:$0xf]
      %v602 = vld [vmem:[%s1 + $0x100] sm:$0xf]
      %v603 = vld [vmem:[%s1 + $0x104] sm:$0xf]
      %v604 = vld [vmem:[%s1 + $0x108] sm:$0xf]
      %v605 = vld [vmem:[%s1 + $0x10c] sm:$0xf]
      %v606 = vld [vmem:[%s1 + $0x110] sm:$0xf]
      %v607 = vld [vmem:[%s1 + $0x114] sm:$0xf]
      %v608 = vld [vmem:[%s1 + $0x118] sm:$0xf]
      %v609 = vld [vmem:[%s1 + $0x11c] sm:$0xf]
      %v610 = vld [vmem:[%s1 + $0x120] sm:$0xf]
      %v611 = vld [vmem:[%s1 + $0x124] sm:$0xf]
      %v612 = vld [vmem:[%s1 + $0x128] sm:$0xf]
      %v613 = vld [vmem:[%s1 + $0x12c] sm:$0xf]
      %v614 = vld [vmem:[%s1 + $0x130] sm:$0xf]
      %v615 = vld [vmem:[%s1 + $0x134] sm:$0xf]
      %v616 = vld [vmem:[%s1 + $0x138] sm:$0xf]
      %v617 = vld [vmem:[%s1 + $0x13c] sm:$0xf]
      %v618 = vld [vmem:[%s1 + $0x140] sm:$0xf]
      %v619 = vld [vmem:[%s1 + $0x144] sm:$0xf]
      %v620 = vld [vmem:[%s1 + $0x148] sm:$0xf]
      %v621 = vld [vmem:[%s1 + $0x14c] sm:$0xf]
      %v622 = vld [vmem:[%s1 + $0x150] sm:$0xf]
      %v623 = vld [vmem:[%s1 + $0x154] sm:$0xf]
      %v624 = vld [vmem:[%s1 + $0x158] sm:$0xf]
      %v625 = vld [vmem:[%s1 + $0x15c] sm:$0xf]
      %v626 = vld [vmem:[%s1 + $0x160] sm:$0xf]
      %v627 = vld [vmem:[%s1 + $0x164] sm:$0xf]
      %v628 = vld [vmem:[%s1 + $0x168] sm:$0xf]
      %v629 = vld [vmem:[%s1 + $0x16c] sm:$0xf]
      %v630 = vld [vmem:[%s1 + $0x170] sm:$0xf]
      %v631 = vld [vmem:[%s1 + $0x174] sm:$0xf]
      %v632 = vld [vmem:[%s1 + $0x178] sm:$0xf]
      %v633 = vld [vmem:[%s1 + $0x17c] sm:$0xf]
      %v682 = vunpack.c.l.b16 %v586
      %v683 = vunpack.c.l.b16 %v587
      %v684 = vunpack.c.l.b16 %v588
      %v685 = vunpack.c.l.b16 %v589
      %v686 = vunpack.c.l.b16 %v590
      %v687 = vunpack.c.l.b16 %v591
      %v688 = vunpack.c.l.b16 %v592
      %v689 = vunpack.c.l.b16 %v593
      %v690 = vunpack.c.l.b16 %v594
      %v691 = vunpack.c.l.b16 %v595
      %v692 = vunpack.c.l.b16 %v596
      %v693 = vunpack.c.l.b16 %v597
      %v694 = vunpack.c.l.b16 %v598
      %v695 = vunpack.c.l.b16 %v599
      %v696 = vunpack.c.l.b16 %v600
      %v697 = vunpack.c.l.b16 %v601
      %v698 = vunpack.c.l.b16 %v602
      %v699 = vunpack.c.l.b16 %v603
      %v700 = vunpack.c.l.b16 %v604
      %v701 = vunpack.c.l.b16 %v605
      %v702 = vunpack.c.l.b16 %v606
      %v703 = vunpack.c.l.b16 %v607
      %v704 = vunpack.c.l.b16 %v608
      %v705 = vunpack.c.l.b16 %v609
      %v706 = vunpack.c.l.b16 %v610
      %v707 = vunpack.c.l.b16 %v611
      %v708 = vunpack.c.l.b16 %v612
      %v709 = vunpack.c.l.b16 %v613
      %v710 = vunpack.c.l.b16 %v614
      %v711 = vunpack.c.l.b16 %v615
      %v712 = vunpack.c.l.b16 %v616
      %v713 = vunpack.c.l.b16 %v617
      %v714 = vunpack.c.l.b16 %v618
      %v715 = vunpack.c.l.b16 %v619
      %v716 = vunpack.c.l.b16 %v620
      %v717 = vunpack.c.l.b16 %v621
      %v718 = vunpack.c.l.b16 %v622
      %v719 = vunpack.c.l.b16 %v623
      %v720 = vunpack.c.l.b16 %v624
      %v721 = vunpack.c.l.b16 %v625
      %v722 = vunpack.c.l.b16 %v626
      %v723 = vunpack.c.l.b16 %v627
      %v724 = vunpack.c.l.b16 %v628
      %v725 = vunpack.c.l.b16 %v629
      %v726 = vunpack.c.l.b16 %v630
      %v727 = vunpack.c.l.b16 %v631
      %v728 = vunpack.c.l.b16 %v632
      %v729 = vunpack.c.l.b16 %v633
      %v730 = vpack.c.b16 %v683, %v682
      %v731 = vpack.c.b16 %v685, %v684
      %v732 = vpack.c.b16 %v687, %v686
      %v733 = vpack.c.b16 %v689, %v688
      %v734 = vpack.c.b16 %v691, %v690
      %v735 = vpack.c.b16 %v693, %v692
      %v736 = vpack.c.b16 %v695, %v694
      %v737 = vpack.c.b16 %v697, %v696
      %v738 = vpack.c.b16 %v699, %v698
      %v739 = vpack.c.b16 %v701, %v700
      %v740 = vpack.c.b16 %v703, %v702
      %v741 = vpack.c.b16 %v705, %v704
      %v742 = vpack.c.b16 %v707, %v706
      %v743 = vpack.c.b16 %v709, %v708
      %v744 = vpack.c.b16 %v711, %v710
      %v745 = vpack.c.b16 %v713, %v712
      %v746 = vpack.c.b16 %v715, %v714
      %v747 = vpack.c.b16 %v717, %v716
      %v748 = vpack.c.b16 %v719, %v718
      %v749 = vpack.c.b16 %v721, %v720
      %v750 = vpack.c.b16 %v723, %v722
      %v751 = vpack.c.b16 %v725, %v724
      %v752 = vpack.c.b16 %v727, %v726
      %v753 = vpack.c.b16 %v729, %v728
      %778 = vmatprep.subr.bf16.mxu0 0
      %779 = vmatpush1.bf16.msra.mxu0 %v737
      %780 = vmatprep.subr.bf16.mxu0 0
      %781 = vmatpush1.bf16.msra.mxu0 %v736
      %782 = vmatprep.subr.bf16.mxu0 0
      %783 = vmatpush1.bf16.msra.mxu0 %v735
      %784 = vmatprep.subr.bf16.mxu0 0
      %785 = vmatpush1.bf16.msra.mxu0 %v734
      %786 = vmatprep.subr.bf16.mxu0 0
      %787 = vmatpush1.bf16.msra.mxu0 %v733
      %788 = vmatprep.subr.bf16.mxu0 0
      %789 = vmatpush1.bf16.msra.mxu0 %v732
      %790 = vmatprep.subr.bf16.mxu0 0
      %791 = vmatpush1.bf16.msra.mxu0 %v731
      %792 = vmatprep.subr.bf16.mxu0 0
      %793 = vmatpush1.bf16.msra.mxu0 %v730
      %794 = vmatprep.subr.bf16.mxu0 0
      %795 = vmatpush2.bf16.msra.mxu0 %v745
      %796 = vmatprep.subr.bf16.mxu0 0
      %797 = vmatpush2.bf16.msra.mxu0 %v744
      %798 = vmatprep.subr.bf16.mxu0 0
      %799 = vmatpush2.bf16.msra.mxu0 %v743
      %800 = vmatprep.subr.bf16.mxu0 0
      %801 = vmatpush2.bf16.msra.mxu0 %v742
      %802 = vmatprep.subr.bf16.mxu0 0
      %803 = vmatpush2.bf16.msra.mxu0 %v741
      %804 = vmatprep.subr.bf16.mxu0 0
      %805 = vmatpush2.bf16.msra.mxu0 %v740
      %806 = vmatprep.subr.bf16.mxu0 0
      %807 = vmatpush2.bf16.msra.mxu0 %v739
      %808 = vmatprep.subr.bf16.mxu0 0
      %809 = vmatpush2.bf16.msra.mxu0 %v738
      %810 = vmatprep.mubr.bf16.mxu0 %v275
      %811 = vmatmul.mubr.bf16.gmra.mxu0 %v437
      %v812 = vpop.f32.mrf.mxu0
      %v813 = vadd.f32 0.0, %v812
      %v814 = vpop.f32.mrf.mxu0
      %v815 = vpop.f32.mrf.mxu0
      %v816 = vadd.f32 0.0, %v815
      %v817 = vpop.f32.mrf.mxu0
      %818 = vmatprep.mubr.bf16.mxu0 %v276
      %819 = vmatmul.mubr.bf16.gmra.mxu0 %v438
      %v820 = vpop.f32.mrf.mxu0
      %v821 = vadd.f32 0.0, %v820
      %v822 = vpop.f32.mrf.mxu0
      %v823 = vpop.f32.mrf.mxu0
      %v824 = vadd.f32 0.0, %v823
      %v825 = vpop.f32.mrf.mxu0
      %826 = vmatprep.mubr.bf16.mxu0 %v277
      %827 = vmatmul.mubr.bf16.gmra.mxu0 %v439
      %v828 = vpop.f32.mrf.mxu0
      %v829 = vadd.f32 0.0, %v828
      %v830 = vpop.f32.mrf.mxu0
      %v831 = vpop.f32.mrf.mxu0
      %v832 = vadd.f32 0.0, %v831
      %v833 = vpop.f32.mrf.mxu0
      %834 = vmatprep.mubr.bf16.mxu0 %v278
      %835 = vmatmul.mubr.bf16.gmra.mxu0 %v440
      %v836 = vpop.f32.mrf.mxu0
      %v837 = vadd.f32 0.0, %v836
      %v838 = vpop.f32.mrf.mxu0
      %v839 = vpop.f32.mrf.mxu0
      %v840 = vadd.f32 0.0, %v839
      %v841 = vpop.f32.mrf.mxu0
      %842 = vmatprep.mubr.bf16.mxu0 %v279
      %843 = vmatmul.mubr.bf16.gmra.mxu0 %v441
      %v844 = vpop.f32.mrf.mxu0
      %v845 = vadd.f32 0.0, %v844
      %v846 = vpop.f32.mrf.mxu0
      %v847 = vpop.f32.mrf.mxu0
      %v848 = vadd.f32 0.0, %v847
      %v849 = vpop.f32.mrf.mxu0
      %850 = vmatprep.mubr.bf16.mxu0 %v280
      %851 = vmatmul.mubr.bf16.gmra.mxu0 %v442
      %v852 = vpop.f32.mrf.mxu0
      %v853 = vadd.f32 0.0, %v852
      %v854 = vpop.f32.mrf.mxu0
      %v855 = vpop.f32.mrf.mxu0
      %v856 = vadd.f32 0.0, %v855
      %v857 = vpop.f32.mrf.mxu0
      %858 = vmatprep.mubr.bf16.mxu0 %v281
      %859 = vmatmul.mubr.bf16.gmra.mxu0 %v443
      %v860 = vpop.f32.mrf.mxu0
      %v861 = vadd.f32 0.0, %v860
      %v862 = vpop.f32.mrf.mxu0
      %v863 = vpop.f32.mrf.mxu0
      %v864 = vadd.f32 0.0, %v863
      %v865 = vpop.f32.mrf.mxu0
      %866 = vmatprep.mubr.bf16.mxu0 %v282
      %867 = vmatmul.mubr.bf16.gmra.mxu0 %v444
      %v868 = vpop.f32.mrf.mxu0
      %v869 = vadd.f32 0.0, %v868
      %v870 = vpop.f32.mrf.mxu0
      %v871 = vpop.f32.mrf.mxu0
      %v872 = vadd.f32 0.0, %v871
      %v873 = vpop.f32.mrf.mxu0
      %874 = vmatprep.mubr.bf16.mxu0 %v283
      %875 = vmatmul.mubr.bf16.gmra.mxu0 %v445
      %v876 = vpop.f32.mrf.mxu0
      %v877 = vadd.f32 0.0, %v876
      %v878 = vpop.f32.mrf.mxu0
      %v879 = vpop.f32.mrf.mxu0
      %v880 = vadd.f32 0.0, %v879
      %v881 = vpop.f32.mrf.mxu0
      %882 = vmatprep.mubr.bf16.mxu0 %v284
      %883 = vmatmul.mubr.bf16.gmra.mxu0 %v446
      %v884 = vpop.f32.mrf.mxu0
      %v885 = vadd.f32 0.0, %v884
      %v886 = vpop.f32.mrf.mxu0
      %v887 = vpop.f32.mrf.mxu0
      %v888 = vadd.f32 0.0, %v887
      %v889 = vpop.f32.mrf.mxu0
      %890 = vmatprep.mubr.bf16.mxu0 %v285
      %891 = vmatmul.mubr.bf16.gmra.mxu0 %v447
      %v892 = vpop.f32.mrf.mxu0
      %v893 = vadd.f32 0.0, %v892
      %v894 = vpop.f32.mrf.mxu0
      %v895 = vpop.f32.mrf.mxu0
      %v896 = vadd.f32 0.0, %v895
      %v897 = vpop.f32.mrf.mxu0
      %898 = vmatprep.mubr.bf16.mxu0 %v286
      %899 = vmatmul.mubr.bf16.gmra.mxu0 %v448
      %v900 = vpop.f32.mrf.mxu0
      %v901 = vadd.f32 0.0, %v900
      %v902 = vpop.f32.mrf.mxu0
      %v903 = vpop.f32.mrf.mxu0
      %v904 = vadd.f32 0.0, %v903
      %v905 = vpop.f32.mrf.mxu0
      %906 = vmatprep.mubr.bf16.mxu0 %v287
      %907 = vmatmul.mubr.bf16.gmra.mxu0 %v449
      %v908 = vpop.f32.mrf.mxu0
      %v909 = vadd.f32 0.0, %v908
      %v910 = vpop.f32.mrf.mxu0
      %v911 = vpop.f32.mrf.mxu0
      %v912 = vadd.f32 0.0, %v911
      %v913 = vpop.f32.mrf.mxu0
      %914 = vmatprep.mubr.bf16.mxu0 %v288
      %915 = vmatmul.mubr.bf16.gmra.mxu0 %v450
      %v916 = vpop.f32.mrf.mxu0
      %v917 = vadd.f32 0.0, %v916
      %v918 = vpop.f32.mrf.mxu0
      %v919 = vpop.f32.mrf.mxu0
      %v920 = vadd.f32 0.0, %v919
      %v921 = vpop.f32.mrf.mxu0
      %922 = vmatprep.mubr.bf16.mxu0 %v289
      %923 = vmatmul.mubr.bf16.gmra.mxu0 %v451
      %v924 = vpop.f32.mrf.mxu0
      %v925 = vadd.f32 0.0, %v924
      %v926 = vpop.f32.mrf.mxu0
      %v927 = vpop.f32.mrf.mxu0
      %v928 = vadd.f32 0.0, %v927
      %v929 = vpop.f32.mrf.mxu0
      %930 = vmatprep.mubr.bf16.mxu0 %v571
      %931 = vmatmul.mubr.bf16.gmra.mxu0 %v580
      %v932 = vpop.f32.mrf.mxu0
      %v933 = vadd.f32 0.0, %v932
      %v934 = vpop.f32.mrf.mxu0
      %v935 = vpop.f32.mrf.mxu0
      %v936 = vadd.f32 0.0, %v935
      %v937 = vpop.f32.mrf.mxu0
      %938 = vdwg.mxu0
      %939 = vmatprep.subr.bf16.mxu0 0
      %940 = vmatpush1.bf16.msra.mxu0 %v753
      %941 = vmatprep.subr.bf16.mxu0 0
      %942 = vmatpush1.bf16.msra.mxu0 %v752
      %943 = vmatprep.subr.bf16.mxu0 0
      %944 = vmatpush1.bf16.msra.mxu0 %v751
      %945 = vmatprep.subr.bf16.mxu0 0
      %946 = vmatpush1.bf16.msra.mxu0 %v750
      %947 = vmatprep.subr.bf16.mxu0 0
      %948 = vmatpush1.bf16.msra.mxu0 %v749
      %949 = vmatprep.subr.bf16.mxu0 0
      %950 = vmatpush1.bf16.msra.mxu0 %v748
      %951 = vmatprep.subr.bf16.mxu0 0
      %952 = vmatpush1.bf16.msra.mxu0 %v747
      %953 = vmatprep.subr.bf16.mxu0 0
      %954 = vmatpush1.bf16.msra.mxu0 %v746
      %955 = vmatprep.subr.bf16.mxu0 0
      %956 = vmatpush2.bf16.msra.mxu0 0
      %957 = vmatprep.subr.bf16.mxu0 0
      %958 = vmatpush2.bf16.msra.mxu0 0
      %959 = vmatprep.subr.bf16.mxu0 0
      %960 = vmatpush2.bf16.msra.mxu0 0
      %961 = vmatprep.subr.bf16.mxu0 0
      %962 = vmatpush2.bf16.msra.mxu0 0
      %963 = vmatprep.subr.bf16.mxu0 0
      %964 = vmatpush2.bf16.msra.mxu0 0
      %965 = vmatprep.subr.bf16.mxu0 0
      %966 = vmatpush2.bf16.msra.mxu0 0
      %967 = vmatprep.subr.bf16.mxu0 0
      %968 = vmatpush2.bf16.msra.mxu0 0
      %969 = vmatprep.subr.bf16.mxu0 0
      %970 = vmatpush2.bf16.msra.mxu0 0
      %971 = vmatprep.mubr.bf16.mxu0 0
      %972 = vmatmul.mubr.bf16.gmra.mxu0 %v504
      %v973 = vpop.f32.mrf.mxu0
      %v974 = vadd.f32 %v813, %v973
      %v975 = vpop.f32.mrf.mxu0
      %v976 = vpop.f32.mrf.mxu0
      %v977 = vadd.f32 %v816, %v976
      %v978 = vpop.f32.mrf.mxu0
      %979 = vmatprep.mubr.bf16.mxu0 0
      %980 = vmatmul.mubr.bf16.gmra.mxu0 %v505
      %v981 = vpop.f32.mrf.mxu0
      %v982 = vadd.f32 %v821, %v981
      %v983 = vpop.f32.mrf.mxu0
      %v984 = vpop.f32.mrf.mxu0
      %v985 = vadd.f32 %v824, %v984
      %v986 = vpop.f32.mrf.mxu0
      %987 = vmatprep.mubr.bf16.mxu0 0
      %988 = vmatmul.mubr.bf16.gmra.mxu0 %v506
      %v989 = vpop.f32.mrf.mxu0
      %v990 = vadd.f32 %v829, %v989
      %v991 = vpop.f32.mrf.mxu0
      %v992 = vpop.f32.mrf.mxu0
      %v993 = vadd.f32 %v832, %v992
      %v994 = vpop.f32.mrf.mxu0
      %995 = vmatprep.mubr.bf16.mxu0 0
      %996 = vmatmul.mubr.bf16.gmra.mxu0 %v507
      %v997 = vpop.f32.mrf.mxu0
      %v998 = vadd.f32 %v837, %v997
      %v999 = vpop.f32.mrf.mxu0
      %v1000 = vpop.f32.mrf.mxu0
      %v1001 = vadd.f32 %v840, %v1000
      %v1002 = vpop.f32.mrf.mxu0
      %1003 = vmatprep.mubr.bf16.mxu0 0
      %1004 = vmatmul.mubr.bf16.gmra.mxu0 %v508
      %v1005 = vpop.f32.mrf.mxu0
      %v1006 = vadd.f32 %v845, %v1005
      %v1007 = vpop.f32.mrf.mxu0
      %v1008 = vpop.f32.mrf.mxu0
      %v1009 = vadd.f32 %v848, %v1008
      %v1010 = vpop.f32.mrf.mxu0
      %1011 = vmatprep.mubr.bf16.mxu0 0
      %1012 = vmatmul.mubr.bf16.gmra.mxu0 %v509
      %v1013 = vpop.f32.mrf.mxu0
      %v1014 = vadd.f32 %v853, %v1013
      %v1015 = vpop.f32.mrf.mxu0
      %v1016 = vpop.f32.mrf.mxu0
      %v1017 = vadd.f32 %v856, %v1016
      %v1018 = vpop.f32.mrf.mxu0
      %1019 = vmatprep.mubr.bf16.mxu0 0
      %1020 = vmatmul.mubr.bf16.gmra.mxu0 %v510
      %v1021 = vpop.f32.mrf.mxu0
      %v1022 = vadd.f32 %v861, %v1021
      %v1023 = vpop.f32.mrf.mxu0
      %v1024 = vpop.f32.mrf.mxu0
      %v1025 = vadd.f32 %v864, %v1024
      %v1026 = vpop.f32.mrf.mxu0
      %1027 = vmatprep.mubr.bf16.mxu0 0
      %1028 = vmatmul.mubr.bf16.gmra.mxu0 %v511
      %v1029 = vpop.f32.mrf.mxu0
      %v1030 = vadd.f32 %v869, %v1029
      %v1031 = vpop.f32.mrf.mxu0
      %v1032 = vpop.f32.mrf.mxu0
      %v1033 = vadd.f32 %v872, %v1032
      %v1034 = vpop.f32.mrf.mxu0
      %1035 = vmatprep.mubr.bf16.mxu0 0
      %1036 = vmatmul.mubr.bf16.gmra.mxu0 %v512
      %v1037 = vpop.f32.mrf.mxu0
      %v1038 = vadd.f32 %v877, %v1037
      %v1039 = vpop.f32.mrf.mxu0
      %v1040 = vpop.f32.mrf.mxu0
      %v1041 = vadd.f32 %v880, %v1040
      %v1042 = vpop.f32.mrf.mxu0
      %1043 = vmatprep.mubr.bf16.mxu0 0
      %1044 = vmatmul.mubr.bf16.gmra.mxu0 %v513
      %v1045 = vpop.f32.mrf.mxu0
      %v1046 = vadd.f32 %v885, %v1045
      %v1047 = vpop.f32.mrf.mxu0
      %v1048 = vpop.f32.mrf.mxu0
      %v1049 = vadd.f32 %v888, %v1048
      %v1050 = vpop.f32.mrf.mxu0
      %1051 = vmatprep.mubr.bf16.mxu0 0
      %1052 = vmatmul.mubr.bf16.gmra.mxu0 %v514
      %v1053 = vpop.f32.mrf.mxu0
      %v1054 = vadd.f32 %v893, %v1053
      %v1055 = vpop.f32.mrf.mxu0
      %v1056 = vpop.f32.mrf.mxu0
      %v1057 = vadd.f32 %v896, %v1056
      %v1058 = vpop.f32.mrf.mxu0
      %1059 = vmatprep.mubr.bf16.mxu0 0
      %1060 = vmatmul.mubr.bf16.gmra.mxu0 %v515
      %v1061 = vpop.f32.mrf.mxu0
      %v1062 = vadd.f32 %v901, %v1061
      %v1063 = vpop.f32.mrf.mxu0
      %v1064 = vpop.f32.mrf.mxu0
      %v1065 = vadd.f32 %v904, %v1064
      %v1066 = vpop.f32.mrf.mxu0
      %1067 = vmatprep.mubr.bf16.mxu0 0
      %1068 = vmatmul.mubr.bf16.gmra.mxu0 %v516
      %v1069 = vpop.f32.mrf.mxu0
      %v1070 = vadd.f32 %v909, %v1069
      %v1071 = vpop.f32.mrf.mxu0
      %v1072 = vpop.f32.mrf.mxu0
      %v1073 = vadd.f32 %v912, %v1072
      %v1074 = vpop.f32.mrf.mxu0
      %1075 = vmatprep.mubr.bf16.mxu0 0
      %1076 = vmatmul.mubr.bf16.gmra.mxu0 %v517
      %v1077 = vpop.f32.mrf.mxu0
      %v1078 = vadd.f32 %v917, %v1077
      %v1079 = vpop.f32.mrf.mxu0
      %v1080 = vpop.f32.mrf.mxu0
      %v1081 = vadd.f32 %v920, %v1080
      %v1082 = vpop.f32.mrf.mxu0
      %1083 = vmatprep.mubr.bf16.mxu0 0
      %1084 = vmatmul.mubr.bf16.gmra.mxu0 %v518
      %v1085 = vpop.f32.mrf.mxu0
      %v1086 = vadd.f32 %v925, %v1085
      %v1087 = vpop.f32.mrf.mxu0
      %v1088 = vpop.f32.mrf.mxu0
      %v1089 = vadd.f32 %v928, %v1088
      %v1090 = vpop.f32.mrf.mxu0
      %1091 = vmatprep.mubr.bf16.mxu0 0
      %1092 = vmatmul.mubr.bf16.gmra.mxu0 %v584
      %v1093 = vpop.f32.mrf.mxu0
      %v1094 = vadd.f32 %v933, %v1093
      %v1095 = vpop.f32.mrf.mxu0
      %v1096 = vpop.f32.mrf.mxu0
      %v1097 = vadd.f32 %v936, %v1096
      %v1098 = vpop.f32.mrf.mxu0
      %1099 = vdwg.mxu0
      %v1148 = vunpack.c.l.b16 %v519
      %v1149 = vunpack.c.l.b16 %v520
      %v1150 = vunpack.c.l.b16 %v521
      %v1151 = vunpack.c.l.b16 %v522
      %v1152 = vunpack.c.l.b16 %v523
      %v1153 = vunpack.c.l.b16 %v524
      %v1154 = vunpack.c.l.b16 %v525
      %v1155 = vunpack.c.l.b16 %v526
      %v1156 = vunpack.c.l.b16 %v527
      %v1157 = vunpack.c.l.b16 %v528
      %v1158 = vunpack.c.l.b16 %v529
      %v1159 = vunpack.c.l.b16 %v530
      %v1160 = vunpack.c.l.b16 %v531
      %v1161 = vunpack.c.l.b16 %v532
      %v1162 = vunpack.c.l.b16 %v533
      %v1163 = vunpack.c.l.b16 %v534
      %v1164 = vunpack.c.l.b16 %v535
      %v1165 = vunpack.c.l.b16 %v536
      %v1166 = vunpack.c.l.b16 %v537
      %v1167 = vunpack.c.l.b16 %v538
      %v1168 = vunpack.c.l.b16 %v539
      %v1169 = vunpack.c.l.b16 %v540
      %v1170 = vunpack.c.l.b16 %v541
      %v1171 = vunpack.c.l.b16 %v542
      %v1172 = vunpack.c.l.b16 %v543
      %v1173 = vunpack.c.l.b16 %v544
      %v1174 = vunpack.c.l.b16 %v545
      %v1175 = vunpack.c.l.b16 %v546
      %v1176 = vunpack.c.l.b16 %v547
      %v1177 = vunpack.c.l.b16 %v548
      %v1178 = vunpack.c.l.b16 %v549
      %v1179 = vunpack.c.l.b16 %v550
      %v1180 = vunpack.c.l.b16 %v551
      %v1181 = vunpack.c.l.b16 %v552
      %v1182 = vunpack.c.l.b16 %v553
      %v1183 = vunpack.c.l.b16 %v554
      %v1184 = vunpack.c.l.b16 %v555
      %v1185 = vunpack.c.l.b16 %v556
      %v1186 = vunpack.c.l.b16 %v557
      %v1187 = vunpack.c.l.b16 %v558
      %v1188 = vunpack.c.l.b16 %v559
      %v1189 = vunpack.c.l.b16 %v560
      %v1190 = vunpack.c.l.b16 %v561
      %v1191 = vunpack.c.l.b16 %v562
      %v1192 = vunpack.c.l.b16 %v563
      %v1193 = vunpack.c.l.b16 %v564
      %v1194 = vunpack.c.l.b16 %v565
      %v1195 = vunpack.c.l.b16 %v566
      %v1196 = vpack.c.b16 %v1149, %v1148
      %v1197 = vpack.c.b16 %v1151, %v1150
      %v1198 = vpack.c.b16 %v1153, %v1152
      %v1199 = vpack.c.b16 %v1155, %v1154
      %v1200 = vpack.c.b16 %v1157, %v1156
      %v1201 = vpack.c.b16 %v1159, %v1158
      %v1202 = vpack.c.b16 %v1161, %v1160
      %v1203 = vpack.c.b16 %v1163, %v1162
      %v1204 = vpack.c.b16 %v1165, %v1164
      %v1205 = vpack.c.b16 %v1167, %v1166
      %v1206 = vpack.c.b16 %v1169, %v1168
      %v1207 = vpack.c.b16 %v1171, %v1170
      %v1208 = vpack.c.b16 %v1173, %v1172
      %v1209 = vpack.c.b16 %v1175, %v1174
      %v1210 = vpack.c.b16 %v1177, %v1176
      %v1211 = vpack.c.b16 %v1179, %v1178
      %v1212 = vpack.c.b16 %v1181, %v1180
      %v1213 = vpack.c.b16 %v1183, %v1182
      %v1214 = vpack.c.b16 %v1185, %v1184
      %v1215 = vpack.c.b16 %v1187, %v1186
      %v1216 = vpack.c.b16 %v1189, %v1188
      %v1217 = vpack.c.b16 %v1191, %v1190
      %v1218 = vpack.c.b16 %v1193, %v1192
      %v1219 = vpack.c.b16 %v1195, %v1194
      %1244 = vmatprep.subr.bf16.mxu0 0
      %1245 = vmatpush1.bf16.msra.mxu0 %v1203
      %1246 = vmatprep.subr.bf16.mxu0 0
      %1247 = vmatpush1.bf16.msra.mxu0 %v1202
      %1248 = vmatprep.subr.bf16.mxu0 0
      %1249 = vmatpush1.bf16.msra.mxu0 %v1201
      %1250 = vmatprep.subr.bf16.mxu0 0
      %1251 = vmatpush1.bf16.msra.mxu0 %v1200
      %1252 = vmatprep.subr.bf16.mxu0 0
      %1253 = vmatpush1.bf16.msra.mxu0 %v1199
      %1254 = vmatprep.subr.bf16.mxu0 0
      %1255 = vmatpush1.bf16.msra.mxu0 %v1198
      %1256 = vmatprep.subr.bf16.mxu0 0
      %1257 = vmatpush1.bf16.msra.mxu0 %v1197
      %1258 = vmatprep.subr.bf16.mxu0 0
      %1259 = vmatpush1.bf16.msra.mxu0 %v1196
      %1260 = vmatprep.subr.bf16.mxu0 0
      %1261 = vmatpush2.bf16.msra.mxu0 %v1211
      %1262 = vmatprep.subr.bf16.mxu0 0
      %1263 = vmatpush2.bf16.msra.mxu0 %v1210
      %1264 = vmatprep.subr.bf16.mxu0 0
      %1265 = vmatpush2.bf16.msra.mxu0 %v1209
      %1266 = vmatprep.subr.bf16.mxu0 0
      %1267 = vmatpush2.bf16.msra.mxu0 %v1208
      %1268 = vmatprep.subr.bf16.mxu0 0
      %1269 = vmatpush2.bf16.msra.mxu0 %v1207
      %1270 = vmatprep.subr.bf16.mxu0 0
      %1271 = vmatpush2.bf16.msra.mxu0 %v1206
      %1272 = vmatprep.subr.bf16.mxu0 0
      %1273 = vmatpush2.bf16.msra.mxu0 %v1205
      %1274 = vmatprep.subr.bf16.mxu0 0
      %1275 = vmatpush2.bf16.msra.mxu0 %v1204
      %1276 = vmatprep.mubr.bf16.mxu0 0
      %1277 = vmatmul.mubr.bf16.gmra.mxu0 %v436
      %v1278 = vpop.f32.mrf.mxu0
      %v1279 = vadd.f32 %v974, %v1278
      %v1280 = vpop.f32.mrf.mxu0
      %v1281 = vpop.f32.mrf.mxu0
      %v1282 = vadd.f32 %v977, %v1281
      %v1283 = vpop.f32.mrf.mxu0
      %1284 = vmatprep.mubr.bf16.mxu0 %v275
      %1285 = vmatmul.mubr.bf16.gmra.mxu0 %v437
      %v1286 = vpop.f32.mrf.mxu0
      %v1287 = vadd.f32 %v982, %v1286
      %v1288 = vpop.f32.mrf.mxu0
      %v1289 = vpop.f32.mrf.mxu0
      %v1290 = vadd.f32 %v985, %v1289
      %v1291 = vpop.f32.mrf.mxu0
      %1292 = vmatprep.mubr.bf16.mxu0 %v276
      %1293 = vmatmul.mubr.bf16.gmra.mxu0 %v438
      %v1294 = vpop.f32.mrf.mxu0
      %v1295 = vadd.f32 %v990, %v1294
      %v1296 = vpop.f32.mrf.mxu0
      %v1297 = vpop.f32.mrf.mxu0
      %v1298 = vadd.f32 %v993, %v1297
      %v1299 = vpop.f32.mrf.mxu0
      %1300 = vmatprep.mubr.bf16.mxu0 %v277
      %1301 = vmatmul.mubr.bf16.gmra.mxu0 %v439
      %v1302 = vpop.f32.mrf.mxu0
      %v1303 = vadd.f32 %v998, %v1302
      %v1304 = vpop.f32.mrf.mxu0
      %v1305 = vpop.f32.mrf.mxu0
      %v1306 = vadd.f32 %v1001, %v1305
      %v1307 = vpop.f32.mrf.mxu0
      %1308 = vmatprep.mubr.bf16.mxu0 %v278
      %1309 = vmatmul.mubr.bf16.gmra.mxu0 %v440
      %v1310 = vpop.f32.mrf.mxu0
      %v1311 = vadd.f32 %v1006, %v1310
      %v1312 = vpop.f32.mrf.mxu0
      %v1313 = vpop.f32.mrf.mxu0
      %v1314 = vadd.f32 %v1009, %v1313
      %v1315 = vpop.f32.mrf.mxu0
      %1316 = vmatprep.mubr.bf16.mxu0 %v279
      %1317 = vmatmul.mubr.bf16.gmra.mxu0 %v441
      %v1318 = vpop.f32.mrf.mxu0
      %v1319 = vadd.f32 %v1014, %v1318
      %v1320 = vpop.f32.mrf.mxu0
      %v1321 = vpop.f32.mrf.mxu0
      %v1322 = vadd.f32 %v1017, %v1321
      %v1323 = vpop.f32.mrf.mxu0
      %1324 = vmatprep.mubr.bf16.mxu0 %v280
      %1325 = vmatmul.mubr.bf16.gmra.mxu0 %v442
      %v1326 = vpop.f32.mrf.mxu0
      %v1327 = vadd.f32 %v1022, %v1326
      %v1328 = vpop.f32.mrf.mxu0
      %v1329 = vpop.f32.mrf.mxu0
      %v1330 = vadd.f32 %v1025, %v1329
      %v1331 = vpop.f32.mrf.mxu0
      %1332 = vmatprep.mubr.bf16.mxu0 %v281
      %1333 = vmatmul.mubr.bf16.gmra.mxu0 %v443
      %v1334 = vpop.f32.mrf.mxu0
      %v1335 = vadd.f32 %v1030, %v1334
      %v1336 = vpop.f32.mrf.mxu0
      %v1337 = vpop.f32.mrf.mxu0
      %v1338 = vadd.f32 %v1033, %v1337
      %v1339 = vpop.f32.mrf.mxu0
      %1340 = vmatprep.mubr.bf16.mxu0 %v282
      %1341 = vmatmul.mubr.bf16.gmra.mxu0 %v444
      %v1342 = vpop.f32.mrf.mxu0
      %v1343 = vadd.f32 %v1038, %v1342
      %v1344 = vpop.f32.mrf.mxu0
      %v1345 = vpop.f32.mrf.mxu0
      %v1346 = vadd.f32 %v1041, %v1345
      %v1347 = vpop.f32.mrf.mxu0
      %1348 = vmatprep.mubr.bf16.mxu0 %v283
      %1349 = vmatmul.mubr.bf16.gmra.mxu0 %v445
      %v1350 = vpop.f32.mrf.mxu0
      %v1351 = vadd.f32 %v1046, %v1350
      %v1352 = vpop.f32.mrf.mxu0
      %v1353 = vpop.f32.mrf.mxu0
      %v1354 = vadd.f32 %v1049, %v1353
      %v1355 = vpop.f32.mrf.mxu0
      %1356 = vmatprep.mubr.bf16.mxu0 %v284
      %1357 = vmatmul.mubr.bf16.gmra.mxu0 %v446
      %v1358 = vpop.f32.mrf.mxu0
      %v1359 = vadd.f32 %v1054, %v1358
      %v1360 = vpop.f32.mrf.mxu0
      %v1361 = vpop.f32.mrf.mxu0
      %v1362 = vadd.f32 %v1057, %v1361
      %v1363 = vpop.f32.mrf.mxu0
      %1364 = vmatprep.mubr.bf16.mxu0 %v285
      %1365 = vmatmul.mubr.bf16.gmra.mxu0 %v447
      %v1366 = vpop.f32.mrf.mxu0
      %v1367 = vadd.f32 %v1062, %v1366
      %v1368 = vpop.f32.mrf.mxu0
      %v1369 = vpop.f32.mrf.mxu0
      %v1370 = vadd.f32 %v1065, %v1369
      %v1371 = vpop.f32.mrf.mxu0
      %1372 = vmatprep.mubr.bf16.mxu0 %v286
      %1373 = vmatmul.mubr.bf16.gmra.mxu0 %v448
      %v1374 = vpop.f32.mrf.mxu0
      %v1375 = vadd.f32 %v1070, %v1374
      %v1376 = vpop.f32.mrf.mxu0
      %v1377 = vpop.f32.mrf.mxu0
      %v1378 = vadd.f32 %v1073, %v1377
      %v1379 = vpop.f32.mrf.mxu0
      %1380 = vmatprep.mubr.bf16.mxu0 %v287
      %1381 = vmatmul.mubr.bf16.gmra.mxu0 %v449
      %v1382 = vpop.f32.mrf.mxu0
      %v1383 = vadd.f32 %v1078, %v1382
      %v1384 = vpop.f32.mrf.mxu0
      %v1385 = vpop.f32.mrf.mxu0
      %v1386 = vadd.f32 %v1081, %v1385
      %v1387 = vpop.f32.mrf.mxu0
      %1388 = vmatprep.mubr.bf16.mxu0 %v288
      %1389 = vmatmul.mubr.bf16.gmra.mxu0 %v450
      %v1390 = vpop.f32.mrf.mxu0
      %v1391 = vadd.f32 %v1086, %v1390
      %v1392 = vpop.f32.mrf.mxu0
      %v1393 = vpop.f32.mrf.mxu0
      %v1394 = vadd.f32 %v1089, %v1393
      %v1395 = vpop.f32.mrf.mxu0
      %1396 = vmatprep.mubr.bf16.mxu0 %v289
      %1397 = vmatmul.mubr.bf16.gmra.mxu0 %v451
      %v1398 = vpop.f32.mrf.mxu0
      %v1399 = vadd.f32 %v1094, %v1398
      %v1400 = vpop.f32.mrf.mxu0
      %v1401 = vpop.f32.mrf.mxu0
      %v1402 = vadd.f32 %v1097, %v1401
      %v1403 = vpop.f32.mrf.mxu0
      %1404 = vdwg.mxu0
      %1405 = vmatprep.subr.bf16.mxu0 0
      %1406 = vmatpush1.bf16.msra.mxu0 %v1219
      %1407 = vmatprep.subr.bf16.mxu0 0
      %1408 = vmatpush1.bf16.msra.mxu0 %v1218
      %1409 = vmatprep.subr.bf16.mxu0 0
      %1410 = vmatpush1.bf16.msra.mxu0 %v1217
      %1411 = vmatprep.subr.bf16.mxu0 0
      %1412 = vmatpush1.bf16.msra.mxu0 %v1216
      %1413 = vmatprep.subr.bf16.mxu0 0
      %1414 = vmatpush1.bf16.msra.mxu0 %v1215
      %1415 = vmatprep.subr.bf16.mxu0 0
      %1416 = vmatpush1.bf16.msra.mxu0 %v1214
      %1417 = vmatprep.subr.bf16.mxu0 0
      %1418 = vmatpush1.bf16.msra.mxu0 %v1213
      %1419 = vmatprep.subr.bf16.mxu0 0
      %1420 = vmatpush1.bf16.msra.mxu0 %v1212
      %1421 = vmatprep.subr.bf16.mxu0 0
      %1422 = vmatpush2.bf16.msra.mxu0 0
      %1423 = vmatprep.subr.bf16.mxu0 0
      %1424 = vmatpush2.bf16.msra.mxu0 0
      %1425 = vmatprep.subr.bf16.mxu0 0
      %1426 = vmatpush2.bf16.msra.mxu0 0
      %1427 = vmatprep.subr.bf16.mxu0 0
      %1428 = vmatpush2.bf16.msra.mxu0 0
      %1429 = vmatprep.subr.bf16.mxu0 0
      %1430 = vmatpush2.bf16.msra.mxu0 0
      %1431 = vmatprep.subr.bf16.mxu0 0
      %1432 = vmatpush2.bf16.msra.mxu0 0
      %1433 = vmatprep.subr.bf16.mxu0 0
      %1434 = vmatpush2.bf16.msra.mxu0 0
      %1435 = vmatprep.subr.bf16.mxu0 0
      %1436 = vmatpush2.bf16.msra.mxu0 0
      %1437 = vmatprep.mubr.bf16.mxu0 0
      %1438 = vmatmul.mubr.bf16.gmra.mxu0 %v503
      %v1439 = vpop.f32.mrf.mxu0
      %v1440 = vadd.f32 %v1279, %v1439
      %v1441 = vpop.f32.mrf.mxu0
      %v1442 = vpop.f32.mrf.mxu0
      %v1443 = vadd.f32 %v1282, %v1442
      %v1444 = vpop.f32.mrf.mxu0
      %1445 = vmatprep.mubr.bf16.mxu0 0
      %1446 = vmatmul.mubr.bf16.gmra.mxu0 %v504
      %v1447 = vpop.f32.mrf.mxu0
      %v1448 = vadd.f32 %v1287, %v1447
      %v1449 = vpop.f32.mrf.mxu0
      %v1450 = vpop.f32.mrf.mxu0
      %v1451 = vadd.f32 %v1290, %v1450
      %v1452 = vpop.f32.mrf.mxu0
      %1453 = vmatprep.mubr.bf16.mxu0 0
      %1454 = vmatmul.mubr.bf16.gmra.mxu0 %v505
      %v1455 = vpop.f32.mrf.mxu0
      %v1456 = vadd.f32 %v1295, %v1455
      %v1457 = vpop.f32.mrf.mxu0
      %v1458 = vpop.f32.mrf.mxu0
      %v1459 = vadd.f32 %v1298, %v1458
      %v1460 = vpop.f32.mrf.mxu0
      %1461 = vmatprep.mubr.bf16.mxu0 0
      %1462 = vmatmul.mubr.bf16.gmra.mxu0 %v506
      %v1463 = vpop.f32.mrf.mxu0
      %v1464 = vadd.f32 %v1303, %v1463
      %v1465 = vpop.f32.mrf.mxu0
      %v1466 = vpop.f32.mrf.mxu0
      %v1467 = vadd.f32 %v1306, %v1466
      %v1468 = vpop.f32.mrf.mxu0
      %1469 = vmatprep.mubr.bf16.mxu0 0
      %1470 = vmatmul.mubr.bf16.gmra.mxu0 %v507
      %v1471 = vpop.f32.mrf.mxu0
      %v1472 = vadd.f32 %v1311, %v1471
      %v1473 = vpop.f32.mrf.mxu0
      %v1474 = vpop.f32.mrf.mxu0
      %v1475 = vadd.f32 %v1314, %v1474
      %v1476 = vpop.f32.mrf.mxu0
      %1477 = vmatprep.mubr.bf16.mxu0 0
      %1478 = vmatmul.mubr.bf16.gmra.mxu0 %v508
      %v1479 = vpop.f32.mrf.mxu0
      %v1480 = vadd.f32 %v1319, %v1479
      %v1481 = vpop.f32.mrf.mxu0
      %v1482 = vpop.f32.mrf.mxu0
      %v1483 = vadd.f32 %v1322, %v1482
      %v1484 = vpop.f32.mrf.mxu0
      %1485 = vmatprep.mubr.bf16.mxu0 0
      %1486 = vmatmul.mubr.bf16.gmra.mxu0 %v509
      %v1487 = vpop.f32.mrf.mxu0
      %v1488 = vadd.f32 %v1327, %v1487
      %v1489 = vpop.f32.mrf.mxu0
      %v1490 = vpop.f32.mrf.mxu0
      %v1491 = vadd.f32 %v1330, %v1490
      %v1492 = vpop.f32.mrf.mxu0
      %1493 = vmatprep.mubr.bf16.mxu0 0
      %1494 = vmatmul.mubr.bf16.gmra.mxu0 %v510
      %v1495 = vpop.f32.mrf.mxu0
      %v1496 = vadd.f32 %v1335, %v1495
      %v1497 = vpop.f32.mrf.mxu0
      %v1498 = vpop.f32.mrf.mxu0
      %v1499 = vadd.f32 %v1338, %v1498
      %v1500 = vpop.f32.mrf.mxu0
      %1501 = vmatprep.mubr.bf16.mxu0 0
      %1502 = vmatmul.mubr.bf16.gmra.mxu0 %v511
      %v1503 = vpop.f32.mrf.mxu0
      %v1504 = vadd.f32 %v1343, %v1503
      %v1505 = vpop.f32.mrf.mxu0
      %v1506 = vpop.f32.mrf.mxu0
      %v1507 = vadd.f32 %v1346, %v1506
      %v1508 = vpop.f32.mrf.mxu0
      %1509 = vmatprep.mubr.bf16.mxu0 0
      %1510 = vmatmul.mubr.bf16.gmra.mxu0 %v512
      %v1511 = vpop.f32.mrf.mxu0
      %v1512 = vadd.f32 %v1351, %v1511
      %v1513 = vpop.f32.mrf.mxu0
      %v1514 = vpop.f32.mrf.mxu0
      %v1515 = vadd.f32 %v1354, %v1514
      %v1516 = vpop.f32.mrf.mxu0
      %1517 = vmatprep.mubr.bf16.mxu0 0
      %1518 = vmatmul.mubr.bf16.gmra.mxu0 %v513
      %v1519 = vpop.f32.mrf.mxu0
      %v1520 = vadd.f32 %v1359, %v1519
      %v1521 = vpop.f32.mrf.mxu0
      %v1522 = vpop.f32.mrf.mxu0
      %v1523 = vadd.f32 %v1362, %v1522
      %v1524 = vpop.f32.mrf.mxu0
      %1525 = vmatprep.mubr.bf16.mxu0 0
      %1526 = vmatmul.mubr.bf16.gmra.mxu0 %v514
      %v1527 = vpop.f32.mrf.mxu0
      %v1528 = vadd.f32 %v1367, %v1527
      %v1529 = vpop.f32.mrf.mxu0
      %v1530 = vpop.f32.mrf.mxu0
      %v1531 = vadd.f32 %v1370, %v1530
      %v1532 = vpop.f32.mrf.mxu0
      %1533 = vmatprep.mubr.bf16.mxu0 0
      %1534 = vmatmul.mubr.bf16.gmra.mxu0 %v515
      %v1535 = vpop.f32.mrf.mxu0
      %v1536 = vadd.f32 %v1375, %v1535
      %v1537 = vpop.f32.mrf.mxu0
      %v1538 = vpop.f32.mrf.mxu0
      %v1539 = vadd.f32 %v1378, %v1538
      %v1540 = vpop.f32.mrf.mxu0
      %1541 = vmatprep.mubr.bf16.mxu0 0
      %1542 = vmatmul.mubr.bf16.gmra.mxu0 %v516
      %v1543 = vpop.f32.mrf.mxu0
      %v1544 = vadd.f32 %v1383, %v1543
      %v1545 = vpop.f32.mrf.mxu0
      %v1546 = vpop.f32.mrf.mxu0
      %v1547 = vadd.f32 %v1386, %v1546
      %v1548 = vpop.f32.mrf.mxu0
      %1549 = vmatprep.mubr.bf16.mxu0 0
      %1550 = vmatmul.mubr.bf16.gmra.mxu0 %v517
      %v1551 = vpop.f32.mrf.mxu0
      %v1552 = vadd.f32 %v1391, %v1551
      %v1553 = vpop.f32.mrf.mxu0
      %v1554 = vpop.f32.mrf.mxu0
      %v1555 = vadd.f32 %v1394, %v1554
      %v1556 = vpop.f32.mrf.mxu0
      %1557 = vmatprep.mubr.bf16.mxu0 0
      %1558 = vmatmul.mubr.bf16.gmra.mxu0 %v518
      %v1559 = vpop.f32.mrf.mxu0
      %v1560 = vadd.f32 %v1399, %v1559
      %v1561 = vpop.f32.mrf.mxu0
      %v1562 = vpop.f32.mrf.mxu0
      %v1563 = vadd.f32 %v1402, %v1562
      %v1564 = vpop.f32.mrf.mxu0
      %1565 = vdwg.mxu0
      %v1567 = vunpack.c.l.b16 0
      %v1568 = vpack.c.b16 %v1567, %v1567
      %v1570 = vshrl.u32 %v1568, 16
      %v1572 = vrot.slane %v1570, 7
      %v1573 = vshll.u32 %v1568, 16
      %v1575 = vor.u32 %v1572, %v1573
      %v1577 = vsel %vm435, 0, %v1575
      %v1578 = vrot.slane %v1573, 1
      %v1579 = vor.u32 %v1570, %v1578
      %v1581 = vsel %vm502, %v1579, 0
      %v1583 = vld [vmem:[%s1 + $0x180] sm:$0xf]
      %v1584 = vld [vmem:[%s1 + $0x184] sm:$0xf]
      %v1585 = vld [vmem:[%s1 + $0x188] sm:$0xf]
      %v1586 = vld [vmem:[%s1 + $0x18c] sm:$0xf]
      %v1587 = vld [vmem:[%s1 + $0x190] sm:$0xf]
      %v1588 = vld [vmem:[%s1 + $0x194] sm:$0xf]
      %v1589 = vld [vmem:[%s1 + $0x198] sm:$0xf]
      %v1590 = vld [vmem:[%s1 + $0x19c] sm:$0xf]
      %v1591 = vld [vmem:[%s1 + $0x1a0] sm:$0xf]
      %v1592 = vld [vmem:[%s1 + $0x1a4] sm:$0xf]
      %v1593 = vld [vmem:[%s1 + $0x1a8] sm:$0xf]
      %v1594 = vld [vmem:[%s1 + $0x1ac] sm:$0xf]
      %v1595 = vld [vmem:[%s1 + $0x1b0] sm:$0xf]
      %v1596 = vld [vmem:[%s1 + $0x1b4] sm:$0xf]
      %v1597 = vld [vmem:[%s1 + $0x1b8] sm:$0xf]
      %v1598 = vld [vmem:[%s1 + $0x1bc] sm:$0xf]
      %v1599 = vld [vmem:[%s1 + $0x1c0] sm:$0xf]
      %v1600 = vld [vmem:[%s1 + $0x1c4] sm:$0xf]
      %v1601 = vld [vmem:[%s1 + $0x1c8] sm:$0xf]
      %v1602 = vld [vmem:[%s1 + $0x1cc] sm:$0xf]
      %v1603 = vld [vmem:[%s1 + $0x1d0] sm:$0xf]
      %v1604 = vld [vmem:[%s1 + $0x1d4] sm:$0xf]
      %v1605 = vld [vmem:[%s1 + $0x1d8] sm:$0xf]
      %v1606 = vld [vmem:[%s1 + $0x1dc] sm:$0xf]
      %v1607 = vld [vmem:[%s1 + $0x1e0] sm:$0xf]
      %v1608 = vld [vmem:[%s1 + $0x1e4] sm:$0xf]
      %v1609 = vld [vmem:[%s1 + $0x1e8] sm:$0xf]
      %v1610 = vld [vmem:[%s1 + $0x1ec] sm:$0xf]
      %v1611 = vld [vmem:[%s1 + $0x1f0] sm:$0xf]
      %v1612 = vld [vmem:[%s1 + $0x1f4] sm:$0xf]
      %v1613 = vld [vmem:[%s1 + $0x1f8] sm:$0xf]
      %v1614 = vld [vmem:[%s1 + $0x1fc] sm:$0xf]
      %v1615 = vld [vmem:[%s1 + $0x200] sm:$0xf]
      %v1616 = vld [vmem:[%s1 + $0x204] sm:$0xf]
      %v1617 = vld [vmem:[%s1 + $0x208] sm:$0xf]
      %v1618 = vld [vmem:[%s1 + $0x20c] sm:$0xf]
      %v1619 = vld [vmem:[%s1 + $0x210] sm:$0xf]
      %v1620 = vld [vmem:[%s1 + $0x214] sm:$0xf]
      %v1621 = vld [vmem:[%s1 + $0x218] sm:$0xf]
      %v1622 = vld [vmem:[%s1 + $0x21c] sm:$0xf]
      %v1623 = vld [vmem:[%s1 + $0x220] sm:$0xf]
      %v1624 = vld [vmem:[%s1 + $0x224] sm:$0xf]
      %v1625 = vld [vmem:[%s1 + $0x228] sm:$0xf]
      %v1626 = vld [vmem:[%s1 + $0x22c] sm:$0xf]
      %v1627 = vld [vmem:[%s1 + $0x230] sm:$0xf]
      %v1628 = vld [vmem:[%s1 + $0x234] sm:$0xf]
      %v1629 = vld [vmem:[%s1 + $0x238] sm:$0xf]
      %v1630 = vld [vmem:[%s1 + $0x23c] sm:$0xf]
      %v1679 = vunpack.c.l.b16 %v1583
      %v1680 = vunpack.c.l.b16 %v1584
      %v1681 = vunpack.c.l.b16 %v1585
      %v1682 = vunpack.c.l.b16 %v1586
      %v1683 = vunpack.c.l.b16 %v1587
      %v1684 = vunpack.c.l.b16 %v1588
      %v1685 = vunpack.c.l.b16 %v1589
      %v1686 = vunpack.c.l.b16 %v1590
      %v1687 = vunpack.c.l.b16 %v1591
      %v1688 = vunpack.c.l.b16 %v1592
      %v1689 = vunpack.c.l.b16 %v1593
      %v1690 = vunpack.c.l.b16 %v1594
      %v1691 = vunpack.c.l.b16 %v1595
      %v1692 = vunpack.c.l.b16 %v1596
      %v1693 = vunpack.c.l.b16 %v1597
      %v1694 = vunpack.c.l.b16 %v1598
      %v1695 = vunpack.c.l.b16 %v1599
      %v1696 = vunpack.c.l.b16 %v1600
      %v1697 = vunpack.c.l.b16 %v1601
      %v1698 = vunpack.c.l.b16 %v1602
      %v1699 = vunpack.c.l.b16 %v1603
      %v1700 = vunpack.c.l.b16 %v1604
      %v1701 = vunpack.c.l.b16 %v1605
      %v1702 = vunpack.c.l.b16 %v1606
      %v1703 = vunpack.c.l.b16 %v1607
      %v1704 = vunpack.c.l.b16 %v1608
      %v1705 = vunpack.c.l.b16 %v1609
      %v1706 = vunpack.c.l.b16 %v1610
      %v1707 = vunpack.c.l.b16 %v1611
      %v1708 = vunpack.c.l.b16 %v1612
      %v1709 = vunpack.c.l.b16 %v1613
      %v1710 = vunpack.c.l.b16 %v1614
      %v1711 = vunpack.c.l.b16 %v1615
      %v1712 = vunpack.c.l.b16 %v1616
      %v1713 = vunpack.c.l.b16 %v1617
      %v1714 = vunpack.c.l.b16 %v1618
      %v1715 = vunpack.c.l.b16 %v1619
      %v1716 = vunpack.c.l.b16 %v1620
      %v1717 = vunpack.c.l.b16 %v1621
      %v1718 = vunpack.c.l.b16 %v1622
      %v1719 = vunpack.c.l.b16 %v1623
      %v1720 = vunpack.c.l.b16 %v1624
      %v1721 = vunpack.c.l.b16 %v1625
      %v1722 = vunpack.c.l.b16 %v1626
      %v1723 = vunpack.c.l.b16 %v1627
      %v1724 = vunpack.c.l.b16 %v1628
      %v1725 = vunpack.c.l.b16 %v1629
      %v1726 = vunpack.c.l.b16 %v1630
      %v1727 = vpack.c.b16 %v1680, %v1679
      %v1728 = vpack.c.b16 %v1682, %v1681
      %v1729 = vpack.c.b16 %v1684, %v1683
      %v1730 = vpack.c.b16 %v1686, %v1685
      %v1731 = vpack.c.b16 %v1688, %v1687
      %v1732 = vpack.c.b16 %v1690, %v1689
      %v1733 = vpack.c.b16 %v1692, %v1691
      %v1734 = vpack.c.b16 %v1694, %v1693
      %v1735 = vpack.c.b16 %v1696, %v1695
      %v1736 = vpack.c.b16 %v1698, %v1697
      %v1737 = vpack.c.b16 %v1700, %v1699
      %v1738 = vpack.c.b16 %v1702, %v1701
      %v1739 = vpack.c.b16 %v1704, %v1703
      %v1740 = vpack.c.b16 %v1706, %v1705
      %v1741 = vpack.c.b16 %v1708, %v1707
      %v1742 = vpack.c.b16 %v1710, %v1709
      %v1743 = vpack.c.b16 %v1712, %v1711
      %v1744 = vpack.c.b16 %v1714, %v1713
      %v1745 = vpack.c.b16 %v1716, %v1715
      %v1746 = vpack.c.b16 %v1718, %v1717
      %v1747 = vpack.c.b16 %v1720, %v1719
      %v1748 = vpack.c.b16 %v1722, %v1721
      %v1749 = vpack.c.b16 %v1724, %v1723
      %v1750 = vpack.c.b16 %v1726, %v1725
      %1775 = vmatprep.subr.bf16.mxu0 0
      %1776 = vmatpush1.bf16.msra.mxu0 %v1734
      %1777 = vmatprep.subr.bf16.mxu0 0
      %1778 = vmatpush1.bf16.msra.mxu0 %v1733
      %1779 = vmatprep.subr.bf16.mxu0 0
      %1780 = vmatpush1.bf16.msra.mxu0 %v1732
      %1781 = vmatprep.subr.bf16.mxu0 0
      %1782 = vmatpush1.bf16.msra.mxu0 %v1731
      %1783 = vmatprep.subr.bf16.mxu0 0
      %1784 = vmatpush1.bf16.msra.mxu0 %v1730
      %1785 = vmatprep.subr.bf16.mxu0 0
      %1786 = vmatpush1.bf16.msra.mxu0 %v1729
      %1787 = vmatprep.subr.bf16.mxu0 0
      %1788 = vmatpush1.bf16.msra.mxu0 %v1728
      %1789 = vmatprep.subr.bf16.mxu0 0
      %1790 = vmatpush1.bf16.msra.mxu0 %v1727
      %1791 = vmatprep.subr.bf16.mxu0 0
      %1792 = vmatpush2.bf16.msra.mxu0 %v1742
      %1793 = vmatprep.subr.bf16.mxu0 0
      %1794 = vmatpush2.bf16.msra.mxu0 %v1741
      %1795 = vmatprep.subr.bf16.mxu0 0
      %1796 = vmatpush2.bf16.msra.mxu0 %v1740
      %1797 = vmatprep.subr.bf16.mxu0 0
      %1798 = vmatpush2.bf16.msra.mxu0 %v1739
      %1799 = vmatprep.subr.bf16.mxu0 0
      %1800 = vmatpush2.bf16.msra.mxu0 %v1738
      %1801 = vmatprep.subr.bf16.mxu0 0
      %1802 = vmatpush2.bf16.msra.mxu0 %v1737
      %1803 = vmatprep.subr.bf16.mxu0 0
      %1804 = vmatpush2.bf16.msra.mxu0 %v1736
      %1805 = vmatprep.subr.bf16.mxu0 0
      %1806 = vmatpush2.bf16.msra.mxu0 %v1735
      %1807 = vmatprep.mubr.bf16.mxu0 %v276
      %1808 = vmatmul.mubr.bf16.gmra.mxu0 %v438
      %v1809 = vpop.f32.mrf.mxu0
      %v1810 = vadd.f32 0.0, %v1809
      %v1811 = vpop.f32.mrf.mxu0
      %v1812 = vpop.f32.mrf.mxu0
      %v1813 = vadd.f32 0.0, %v1812
      %v1814 = vpop.f32.mrf.mxu0
      %1815 = vmatprep.mubr.bf16.mxu0 %v277
      %1816 = vmatmul.mubr.bf16.gmra.mxu0 %v439
      %v1817 = vpop.f32.mrf.mxu0
      %v1818 = vadd.f32 0.0, %v1817
      %v1819 = vpop.f32.mrf.mxu0
      %v1820 = vpop.f32.mrf.mxu0
      %v1821 = vadd.f32 0.0, %v1820
      %v1822 = vpop.f32.mrf.mxu0
      %1823 = vmatprep.mubr.bf16.mxu0 %v278
      %1824 = vmatmul.mubr.bf16.gmra.mxu0 %v440
      %v1825 = vpop.f32.mrf.mxu0
      %v1826 = vadd.f32 0.0, %v1825
      %v1827 = vpop.f32.mrf.mxu0
      %v1828 = vpop.f32.mrf.mxu0
      %v1829 = vadd.f32 0.0, %v1828
      %v1830 = vpop.f32.mrf.mxu0
      %1831 = vmatprep.mubr.bf16.mxu0 %v279
      %1832 = vmatmul.mubr.bf16.gmra.mxu0 %v441
      %v1833 = vpop.f32.mrf.mxu0
      %v1834 = vadd.f32 0.0, %v1833
      %v1835 = vpop.f32.mrf.mxu0
      %v1836 = vpop.f32.mrf.mxu0
      %v1837 = vadd.f32 0.0, %v1836
      %v1838 = vpop.f32.mrf.mxu0
      %1839 = vmatprep.mubr.bf16.mxu0 %v280
      %1840 = vmatmul.mubr.bf16.gmra.mxu0 %v442
      %v1841 = vpop.f32.mrf.mxu0
      %v1842 = vadd.f32 0.0, %v1841
      %v1843 = vpop.f32.mrf.mxu0
      %v1844 = vpop.f32.mrf.mxu0
      %v1845 = vadd.f32 0.0, %v1844
      %v1846 = vpop.f32.mrf.mxu0
      %1847 = vmatprep.mubr.bf16.mxu0 %v281
      %1848 = vmatmul.mubr.bf16.gmra.mxu0 %v443
      %v1849 = vpop.f32.mrf.mxu0
      %v1850 = vadd.f32 0.0, %v1849
      %v1851 = vpop.f32.mrf.mxu0
      %v1852 = vpop.f32.mrf.mxu0
      %v1853 = vadd.f32 0.0, %v1852
      %v1854 = vpop.f32.mrf.mxu0
      %1855 = vmatprep.mubr.bf16.mxu0 %v282
      %1856 = vmatmul.mubr.bf16.gmra.mxu0 %v444
      %v1857 = vpop.f32.mrf.mxu0
      %v1858 = vadd.f32 0.0, %v1857
      %v1859 = vpop.f32.mrf.mxu0
      %v1860 = vpop.f32.mrf.mxu0
      %v1861 = vadd.f32 0.0, %v1860
      %v1862 = vpop.f32.mrf.mxu0
      %1863 = vmatprep.mubr.bf16.mxu0 %v283
      %1864 = vmatmul.mubr.bf16.gmra.mxu0 %v445
      %v1865 = vpop.f32.mrf.mxu0
      %v1866 = vadd.f32 0.0, %v1865
      %v1867 = vpop.f32.mrf.mxu0
      %v1868 = vpop.f32.mrf.mxu0
      %v1869 = vadd.f32 0.0, %v1868
      %v1870 = vpop.f32.mrf.mxu0
      %1871 = vmatprep.mubr.bf16.mxu0 %v284
      %1872 = vmatmul.mubr.bf16.gmra.mxu0 %v446
      %v1873 = vpop.f32.mrf.mxu0
      %v1874 = vadd.f32 0.0, %v1873
      %v1875 = vpop.f32.mrf.mxu0
      %v1876 = vpop.f32.mrf.mxu0
      %v1877 = vadd.f32 0.0, %v1876
      %v1878 = vpop.f32.mrf.mxu0
      %1879 = vmatprep.mubr.bf16.mxu0 %v285
      %1880 = vmatmul.mubr.bf16.gmra.mxu0 %v447
      %v1881 = vpop.f32.mrf.mxu0
      %v1882 = vadd.f32 0.0, %v1881
      %v1883 = vpop.f32.mrf.mxu0
      %v1884 = vpop.f32.mrf.mxu0
      %v1885 = vadd.f32 0.0, %v1884
      %v1886 = vpop.f32.mrf.mxu0
      %1887 = vmatprep.mubr.bf16.mxu0 %v286
      %1888 = vmatmul.mubr.bf16.gmra.mxu0 %v448
      %v1889 = vpop.f32.mrf.mxu0
      %v1890 = vadd.f32 0.0, %v1889
      %v1891 = vpop.f32.mrf.mxu0
      %v1892 = vpop.f32.mrf.mxu0
      %v1893 = vadd.f32 0.0, %v1892
      %v1894 = vpop.f32.mrf.mxu0
      %1895 = vmatprep.mubr.bf16.mxu0 %v287
      %1896 = vmatmul.mubr.bf16.gmra.mxu0 %v449
      %v1897 = vpop.f32.mrf.mxu0
      %v1898 = vadd.f32 0.0, %v1897
      %v1899 = vpop.f32.mrf.mxu0
      %v1900 = vpop.f32.mrf.mxu0
      %v1901 = vadd.f32 0.0, %v1900
      %v1902 = vpop.f32.mrf.mxu0
      %1903 = vmatprep.mubr.bf16.mxu0 %v288
      %1904 = vmatmul.mubr.bf16.gmra.mxu0 %v450
      %v1905 = vpop.f32.mrf.mxu0
      %v1906 = vadd.f32 0.0, %v1905
      %v1907 = vpop.f32.mrf.mxu0
      %v1908 = vpop.f32.mrf.mxu0
      %v1909 = vadd.f32 0.0, %v1908
      %v1910 = vpop.f32.mrf.mxu0
      %1911 = vmatprep.mubr.bf16.mxu0 %v289
      %1912 = vmatmul.mubr.bf16.gmra.mxu0 %v451
      %v1913 = vpop.f32.mrf.mxu0
      %v1914 = vadd.f32 0.0, %v1913
      %v1915 = vpop.f32.mrf.mxu0
      %v1916 = vpop.f32.mrf.mxu0
      %v1917 = vadd.f32 0.0, %v1916
      %v1918 = vpop.f32.mrf.mxu0
      %1919 = vmatprep.mubr.bf16.mxu0 %v571
      %1920 = vmatmul.mubr.bf16.gmra.mxu0 %v580
      %v1921 = vpop.f32.mrf.mxu0
      %v1922 = vadd.f32 0.0, %v1921
      %v1923 = vpop.f32.mrf.mxu0
      %v1924 = vpop.f32.mrf.mxu0
      %v1925 = vadd.f32 0.0, %v1924
      %v1926 = vpop.f32.mrf.mxu0
      %1927 = vmatprep.mubr.bf16.mxu0 %v1568
      %1928 = vmatmul.mubr.bf16.gmra.mxu0 %v1577
      %v1929 = vpop.f32.mrf.mxu0
      %v1930 = vadd.f32 0.0, %v1929
      %v1931 = vpop.f32.mrf.mxu0
      %v1932 = vpop.f32.mrf.mxu0
      %v1933 = vadd.f32 0.0, %v1932
      %v1934 = vpop.f32.mrf.mxu0
      %1935 = vdwg.mxu0
      %1936 = vmatprep.subr.bf16.mxu0 0
      %1937 = vmatpush1.bf16.msra.mxu0 %v1750
      %1938 = vmatprep.subr.bf16.mxu0 0
      %1939 = vmatpush1.bf16.msra.mxu0 %v1749
      %1940 = vmatprep.subr.bf16.mxu0 0
      %1941 = vmatpush1.bf16.msra.mxu0 %v1748
      %1942 = vmatprep.subr.bf16.mxu0 0
      %1943 = vmatpush1.bf16.msra.mxu0 %v1747
      %1944 = vmatprep.subr.bf16.mxu0 0
      %1945 = vmatpush1.bf16.msra.mxu0 %v1746
      %1946 = vmatprep.subr.bf16.mxu0 0
      %1947 = vmatpush1.bf16.msra.mxu0 %v1745
      %1948 = vmatprep.subr.bf16.mxu0 0
      %1949 = vmatpush1.bf16.msra.mxu0 %v1744
      %1950 = vmatprep.subr.bf16.mxu0 0
      %1951 = vmatpush1.bf16.msra.mxu0 %v1743
      %1952 = vmatprep.subr.bf16.mxu0 0
      %1953 = vmatpush2.bf16.msra.mxu0 0
      %1954 = vmatprep.subr.bf16.mxu0 0
      %1955 = vmatpush2.bf16.msra.mxu0 0
      %1956 = vmatprep.subr.bf16.mxu0 0
      %1957 = vmatpush2.bf16.msra.mxu0 0
      %1958 = vmatprep.subr.bf16.mxu0 0
      %1959 = vmatpush2.bf16.msra.mxu0 0
      %1960 = vmatprep.subr.bf16.mxu0 0
      %1961 = vmatpush2.bf16.msra.mxu0 0
      %1962 = vmatprep.subr.bf16.mxu0 0
      %1963 = vmatpush2.bf16.msra.mxu0 0
      %1964 = vmatprep.subr.bf16.mxu0 0
      %1965 = vmatpush2.bf16.msra.mxu0 0
      %1966 = vmatprep.subr.bf16.mxu0 0
      %1967 = vmatpush2.bf16.msra.mxu0 0
      %1968 = vmatprep.mubr.bf16.mxu0 0
      %1969 = vmatmul.mubr.bf16.gmra.mxu0 %v505
      %v1970 = vpop.f32.mrf.mxu0
      %v1971 = vadd.f32 %v1810, %v1970
      %v1972 = vpop.f32.mrf.mxu0
      %v1973 = vpop.f32.mrf.mxu0
      %v1974 = vadd.f32 %v1813, %v1973
      %v1975 = vpop.f32.mrf.mxu0
      %1976 = vmatprep.mubr.bf16.mxu0 0
      %1977 = vmatmul.mubr.bf16.gmra.mxu0 %v506
      %v1978 = vpop.f32.mrf.mxu0
      %v1979 = vadd.f32 %v1818, %v1978
      %v1980 = vpop.f32.mrf.mxu0
      %v1981 = vpop.f32.mrf.mxu0
      %v1982 = vadd.f32 %v1821, %v1981
      %v1983 = vpop.f32.mrf.mxu0
      %1984 = vmatprep.mubr.bf16.mxu0 0
      %1985 = vmatmul.mubr.bf16.gmra.mxu0 %v507
      %v1986 = vpop.f32.mrf.mxu0
      %v1987 = vadd.f32 %v1826, %v1986
      %v1988 = vpop.f32.mrf.mxu0
      %v1989 = vpop.f32.mrf.mxu0
      %v1990 = vadd.f32 %v1829, %v1989
      %v1991 = vpop.f32.mrf.mxu0
      %1992 = vmatprep.mubr.bf16.mxu0 0
      %1993 = vmatmul.mubr.bf16.gmra.mxu0 %v508
      %v1994 = vpop.f32.mrf.mxu0
      %v1995 = vadd.f32 %v1834, %v1994
      %v1996 = vpop.f32.mrf.mxu0
      %v1997 = vpop.f32.mrf.mxu0
      %v1998 = vadd.f32 %v1837, %v1997
      %v1999 = vpop.f32.mrf.mxu0
      %2000 = vmatprep.mubr.bf16.mxu0 0
      %2001 = vmatmul.mubr.bf16.gmra.mxu0 %v509
      %v2002 = vpop.f32.mrf.mxu0
      %v2003 = vadd.f32 %v1842, %v2002
      %v2004 = vpop.f32.mrf.mxu0
      %v2005 = vpop.f32.mrf.mxu0
      %v2006 = vadd.f32 %v1845, %v2005
      %v2007 = vpop.f32.mrf.mxu0
      %2008 = vmatprep.mubr.bf16.mxu0 0
      %2009 = vmatmul.mubr.bf16.gmra.mxu0 %v510
      %v2010 = vpop.f32.mrf.mxu0
      %v2011 = vadd.f32 %v1850, %v2010
      %v2012 = vpop.f32.mrf.mxu0
      %v2013 = vpop.f32.mrf.mxu0
      %v2014 = vadd.f32 %v1853, %v2013
      %v2015 = vpop.f32.mrf.mxu0
      %2016 = vmatprep.mubr.bf16.mxu0 0
      %2017 = vmatmul.mubr.bf16.gmra.mxu0 %v511
      %v2018 = vpop.f32.mrf.mxu0
      %v2019 = vadd.f32 %v1858, %v2018
      %v2020 = vpop.f32.mrf.mxu0
      %v2021 = vpop.f32.mrf.mxu0
      %v2022 = vadd.f32 %v1861, %v2021
      %v2023 = vpop.f32.mrf.mxu0
      %2024 = vmatprep.mubr.bf16.mxu0 0
      %2025 = vmatmul.mubr.bf16.gmra.mxu0 %v512
      %v2026 = vpop.f32.mrf.mxu0
      %v2027 = vadd.f32 %v1866, %v2026
      %v2028 = vpop.f32.mrf.mxu0
      %v2029 = vpop.f32.mrf.mxu0
      %v2030 = vadd.f32 %v1869, %v2029
      %v2031 = vpop.f32.mrf.mxu0
      %2032 = vmatprep.mubr.bf16.mxu0 0
      %2033 = vmatmul.mubr.bf16.gmra.mxu0 %v513
      %v2034 = vpop.f32.mrf.mxu0
      %v2035 = vadd.f32 %v1874, %v2034
      %v2036 = vpop.f32.mrf.mxu0
      %v2037 = vpop.f32.mrf.mxu0
      %v2038 = vadd.f32 %v1877, %v2037
      %v2039 = vpop.f32.mrf.mxu0
      %2040 = vmatprep.mubr.bf16.mxu0 0
      %2041 = vmatmul.mubr.bf16.gmra.mxu0 %v514
      %v2042 = vpop.f32.mrf.mxu0
      %v2043 = vadd.f32 %v1882, %v2042
      %v2044 = vpop.f32.mrf.mxu0
      %v2045 = vpop.f32.mrf.mxu0
      %v2046 = vadd.f32 %v1885, %v2045
      %v2047 = vpop.f32.mrf.mxu0
      %2048 = vmatprep.mubr.bf16.mxu0 0
      %2049 = vmatmul.mubr.bf16.gmra.mxu0 %v515
      %v2050 = vpop.f32.mrf.mxu0
      %v2051 = vadd.f32 %v1890, %v2050
      %v2052 = vpop.f32.mrf.mxu0
      %v2053 = vpop.f32.mrf.mxu0
      %v2054 = vadd.f32 %v1893, %v2053
      %v2055 = vpop.f32.mrf.mxu0
      %2056 = vmatprep.mubr.bf16.mxu0 0
      %2057 = vmatmul.mubr.bf16.gmra.mxu0 %v516
      %v2058 = vpop.f32.mrf.mxu0
      %v2059 = vadd.f32 %v1898, %v2058
      %v2060 = vpop.f32.mrf.mxu0
      %v2061 = vpop.f32.mrf.mxu0
      %v2062 = vadd.f32 %v1901, %v2061
      %v2063 = vpop.f32.mrf.mxu0
      %2064 = vmatprep.mubr.bf16.mxu0 0
      %2065 = vmatmul.mubr.bf16.gmra.mxu0 %v517
      %v2066 = vpop.f32.mrf.mxu0
      %v2067 = vadd.f32 %v1906, %v2066
      %v2068 = vpop.f32.mrf.mxu0
      %v2069 = vpop.f32.mrf.mxu0
      %v2070 = vadd.f32 %v1909, %v2069
      %v2071 = vpop.f32.mrf.mxu0
      %2072 = vmatprep.mubr.bf16.mxu0 0
      %2073 = vmatmul.mubr.bf16.gmra.mxu0 %v518
      %v2074 = vpop.f32.mrf.mxu0
      %v2075 = vadd.f32 %v1914, %v2074
      %v2076 = vpop.f32.mrf.mxu0
      %v2077 = vpop.f32.mrf.mxu0
      %v2078 = vadd.f32 %v1917, %v2077
      %v2079 = vpop.f32.mrf.mxu0
      %2080 = vmatprep.mubr.bf16.mxu0 0
      %2081 = vmatmul.mubr.bf16.gmra.mxu0 %v584
      %v2082 = vpop.f32.mrf.mxu0
      %v2083 = vadd.f32 %v1922, %v2082
      %v2084 = vpop.f32.mrf.mxu0
      %v2085 = vpop.f32.mrf.mxu0
      %v2086 = vadd.f32 %v1925, %v2085
      %v2087 = vpop.f32.mrf.mxu0
      %2088 = vmatprep.mubr.bf16.mxu0 0
      %2089 = vmatmul.mubr.bf16.gmra.mxu0 %v1581
      %v2090 = vpop.f32.mrf.mxu0
      %v2091 = vadd.f32 %v1930, %v2090
      %v2092 = vpop.f32.mrf.mxu0
      %v2093 = vpop.f32.mrf.mxu0
      %v2094 = vadd.f32 %v1933, %v2093
      %v2095 = vpop.f32.mrf.mxu0
      %2096 = vdwg.mxu0
      %v2097 = vadd.f32 %v1440, %v1971
      %v2098 = vadd.f32 %v1443, %v1974
      %v2099 = vadd.f32 %v1448, %v1979
      %v2100 = vadd.f32 %v1451, %v1982
      %v2101 = vadd.f32 %v1456, %v1987
      %v2102 = vadd.f32 %v1459, %v1990
      %v2103 = vadd.f32 %v1464, %v1995
      %v2104 = vadd.f32 %v1467, %v1998
      %v2105 = vadd.f32 %v1472, %v2003
      %v2106 = vadd.f32 %v1475, %v2006
      %v2107 = vadd.f32 %v1480, %v2011
      %v2108 = vadd.f32 %v1483, %v2014
      %v2109 = vadd.f32 %v1488, %v2019
      %v2110 = vadd.f32 %v1491, %v2022
      %v2111 = vadd.f32 %v1496, %v2027
      %v2112 = vadd.f32 %v1499, %v2030
      %v2113 = vadd.f32 %v1504, %v2035
      %v2114 = vadd.f32 %v1507, %v2038
      %v2115 = vadd.f32 %v1512, %v2043
      %v2116 = vadd.f32 %v1515, %v2046
      %v2117 = vadd.f32 %v1520, %v2051
      %v2118 = vadd.f32 %v1523, %v2054
      %v2119 = vadd.f32 %v1528, %v2059
      %v2120 = vadd.f32 %v1531, %v2062
      %v2121 = vadd.f32 %v1536, %v2067
      %v2122 = vadd.f32 %v1539, %v2070
      %v2123 = vadd.f32 %v1544, %v2075
      %v2124 = vadd.f32 %v1547, %v2078
      %v2125 = vadd.f32 %v1552, %v2083
      %v2126 = vadd.f32 %v1555, %v2086
      %v2127 = vadd.f32 %v1560, %v2091
      %v2128 = vadd.f32 %v1563, %v2094
      %v2129 = vadd.f32 %v2097, %v2098
      %v2130 = vadd.f32 %v2129, %v2099
      %v2131 = vadd.f32 %v2130, %v2100
      %v2132 = vadd.f32 %v2131, %v2101
      %v2133 = vadd.f32 %v2132, %v2102
      %v2134 = vadd.f32 %v2133, %v2103
      %v2135 = vadd.f32 %v2134, %v2104
      %v2136 = vadd.f32 %v2135, %v2105
      %v2137 = vadd.f32 %v2136, %v2106
      %v2138 = vadd.f32 %v2137, %v2107
      %v2139 = vadd.f32 %v2138, %v2108
      %v2140 = vadd.f32 %v2139, %v2109
      %v2141 = vadd.f32 %v2140, %v2110
      %v2142 = vadd.f32 %v2141, %v2111
      %v2143 = vadd.f32 %v2142, %v2112
      %v2144 = vadd.f32 %v2143, %v2113
      %v2145 = vadd.f32 %v2144, %v2114
      %v2146 = vadd.f32 %v2145, %v2115
      %v2147 = vadd.f32 %v2146, %v2116
      %v2148 = vadd.f32 %v2147, %v2117
      %v2149 = vadd.f32 %v2148, %v2118
      %v2150 = vadd.f32 %v2149, %v2119
      %v2151 = vadd.f32 %v2150, %v2120
      %v2152 = vadd.f32 %v2151, %v2121
      %v2153 = vadd.f32 %v2152, %v2122
      %v2154 = vadd.f32 %v2153, %v2123
      %v2155 = vadd.f32 %v2154, %v2124
      %v2156 = vadd.f32 %v2155, %v2125
      %v2157 = vadd.f32 %v2156, %v2126
      %v2158 = vadd.f32 %v2157, %v2127
      %v2159 = vadd.f32 %v2158, %v2128
      %v2160 = vrot.slane %v2159, 4
      %v2161 = vadd.f32 %v2159, %v2160
      %v2162 = vrot.slane %v2161, 2
      %v2163 = vadd.f32 %v2161, %v2162
      %v2164 = vrot.slane %v2163, 1
      %v2165 = vadd.f32 %v2163, %v2164
      %v2166 = vmul.f32 %v2097, %v2097
      %v2167 = vmul.f32 %v2098, %v2098
      %v2168 = vmul.f32 %v2099, %v2099
      %v2169 = vmul.f32 %v2100, %v2100
      %v2170 = vmul.f32 %v2101, %v2101
      %v2171 = vmul.f32 %v2102, %v2102
      %v2172 = vmul.f32 %v2103, %v2103
      %v2173 = vmul.f32 %v2104, %v2104
      %v2174 = vmul.f32 %v2105, %v2105
      %v2175 = vmul.f32 %v2106, %v2106
      %v2176 = vmul.f32 %v2107, %v2107
      %v2177 = vmul.f32 %v2108, %v2108
      %v2178 = vmul.f32 %v2109, %v2109
      %v2179 = vmul.f32 %v2110, %v2110
      %v2180 = vmul.f32 %v2111, %v2111
      %v2181 = vmul.f32 %v2112, %v2112
      %v2182 = vmul.f32 %v2113, %v2113
      %v2183 = vmul.f32 %v2114, %v2114
      %v2184 = vmul.f32 %v2115, %v2115
      %v2185 = vmul.f32 %v2116, %v2116
      %v2186 = vmul.f32 %v2117, %v2117
      %v2187 = vmul.f32 %v2118, %v2118
      %v2188 = vmul.f32 %v2119, %v2119
      %v2189 = vmul.f32 %v2120, %v2120
      %v2190 = vmul.f32 %v2121, %v2121
      %v2191 = vmul.f32 %v2122, %v2122
      %v2192 = vmul.f32 %v2123, %v2123
      %v2193 = vmul.f32 %v2124, %v2124
      %v2194 = vmul.f32 %v2125, %v2125
      %v2195 = vmul.f32 %v2126, %v2126
      %v2196 = vmul.f32 %v2127, %v2127
      %v2197 = vmul.f32 %v2128, %v2128
      %v2198 = vadd.f32 %v2166, %v2167
      %v2199 = vadd.f32 %v2198, %v2168
      %v2200 = vadd.f32 %v2199, %v2169
      %v2201 = vadd.f32 %v2200, %v2170
      %v2202 = vadd.f32 %v2201, %v2171
      %v2203 = vadd.f32 %v2202, %v2172
      %v2204 = vadd.f32 %v2203, %v2173
      %v2205 = vadd.f32 %v2204, %v2174
      %v2206 = vadd.f32 %v2205, %v2175
      %v2207 = vadd.f32 %v2206, %v2176
      %v2208 = vadd.f32 %v2207, %v2177
      %v2209 = vadd.f32 %v2208, %v2178
      %v2210 = vadd.f32 %v2209, %v2179
      %v2211 = vadd.f32 %v2210, %v2180
      %v2212 = vadd.f32 %v2211, %v2181
      %v2213 = vadd.f32 %v2212, %v2182
      %v2214 = vadd.f32 %v2213, %v2183
      %v2215 = vadd.f32 %v2214, %v2184
      %v2216 = vadd.f32 %v2215, %v2185
      %v2217 = vadd.f32 %v2216, %v2186
      %v2218 = vadd.f32 %v2217, %v2187
      %v2219 = vadd.f32 %v2218, %v2188
      %v2220 = vadd.f32 %v2219, %v2189
      %v2221 = vadd.f32 %v2220, %v2190
      %v2222 = vadd.f32 %v2221, %v2191
      %v2223 = vadd.f32 %v2222, %v2192
      %v2224 = vadd.f32 %v2223, %v2193
      %v2225 = vadd.f32 %v2224, %v2194
      %v2226 = vadd.f32 %v2225, %v2195
      %v2227 = vadd.f32 %v2226, %v2196
      %v2228 = vadd.f32 %v2227, %v2197
      %v2229 = vrot.slane %v2228, 4
      %v2230 = vadd.f32 %v2228, %v2229
      %v2231 = vrot.slane %v2230, 2
      %v2232 = vadd.f32 %v2230, %v2231
      %v2233 = vrot.slane %v2232, 1
      %v2234 = vadd.f32 %v2232, %v2233
      %vm2235 = vcmask 1040384
      %v2236 = vsel %vm2235, %v2165, %v2234
      %2237 = vst [vmem:[%s181] sm:$0x3] %v2236
      %v2238 = vpack.c.bf16 %v2098, %v2097
      %v2239 = vpack.c.bf16 %v2100, %v2099
      %v2240 = vpack.c.bf16 %v2102, %v2101
      %v2241 = vpack.c.bf16 %v2104, %v2103
      %v2242 = vpack.c.bf16 %v2106, %v2105
      %v2243 = vpack.c.bf16 %v2108, %v2107
      %v2244 = vpack.c.bf16 %v2110, %v2109
      %v2245 = vpack.c.bf16 %v2112, %v2111
      %v2246 = vpack.c.bf16 %v2114, %v2113
      %v2247 = vpack.c.bf16 %v2116, %v2115
      %v2248 = vpack.c.bf16 %v2118, %v2117
      %v2249 = vpack.c.bf16 %v2120, %v2119
      %v2250 = vpack.c.bf16 %v2122, %v2121
      %v2251 = vpack.c.bf16 %v2124, %v2123
      %v2252 = vpack.c.bf16 %v2126, %v2125
      %v2253 = vpack.c.bf16 %v2128, %v2127
      %v2270 = vunpack.c.l.b16 %v2238
      %v2271 = vunpack.c.h.b16 %v2238
      %v2272 = vunpack.c.l.b16 %v2239
      %v2273 = vunpack.c.h.b16 %v2239
      %v2274 = vunpack.c.l.b16 %v2240
      %v2275 = vunpack.c.h.b16 %v2240
      %v2276 = vunpack.c.l.b16 %v2241
      %v2277 = vunpack.c.h.b16 %v2241
      %v2278 = vunpack.c.l.b16 %v2242
      %v2279 = vunpack.c.h.b16 %v2242
      %v2280 = vunpack.c.l.b16 %v2243
      %v2281 = vunpack.c.h.b16 %v2243
      %v2282 = vunpack.c.l.b16 %v2244
      %v2283 = vunpack.c.h.b16 %v2244
      %v2284 = vunpack.c.l.b16 %v2245
      %v2285 = vunpack.c.h.b16 %v2245
      %v2286 = vunpack.c.l.b16 %v2246
      %v2287 = vunpack.c.h.b16 %v2246
      %v2288 = vunpack.c.l.b16 %v2247
      %v2289 = vunpack.c.h.b16 %v2247
      %v2290 = vunpack.c.l.b16 %v2248
      %v2291 = vunpack.c.h.b16 %v2248
      %v2292 = vunpack.c.l.b16 %v2249
      %v2293 = vunpack.c.h.b16 %v2249
      %v2294 = vunpack.c.l.b16 %v2250
      %v2295 = vunpack.c.h.b16 %v2250
      %v2296 = vunpack.c.l.b16 %v2251
      %v2297 = vunpack.c.h.b16 %v2251
      %v2298 = vunpack.c.l.b16 %v2252
      %v2299 = vunpack.c.h.b16 %v2252
      %v2300 = vunpack.c.l.b16 %v2253
      %v2301 = vunpack.c.h.b16 %v2253
      %v2302 = vpack.c.b16 %v2270, %v2270
      %v2303 = vpack.c.b16 %v2271, %v2271
      %v2304 = vpack.c.b16 %v2272, %v2272
      %v2305 = vpack.c.b16 %v2273, %v2273
      %v2306 = vpack.c.b16 %v2274, %v2274
      %v2307 = vpack.c.b16 %v2275, %v2275
      %v2308 = vpack.c.b16 %v2276, %v2276
      %v2309 = vpack.c.b16 %v2277, %v2277
      %v2310 = vpack.c.b16 %v2278, %v2278
      %v2311 = vpack.c.b16 %v2279, %v2279
      %v2312 = vpack.c.b16 %v2280, %v2280
      %v2313 = vpack.c.b16 %v2281, %v2281
      %v2314 = vpack.c.b16 %v2282, %v2282
      %v2315 = vpack.c.b16 %v2283, %v2283
      %v2316 = vpack.c.b16 %v2284, %v2284
      %v2317 = vpack.c.b16 %v2285, %v2285
      %v2318 = vpack.c.b16 %v2286, %v2286
      %v2319 = vpack.c.b16 %v2287, %v2287
      %v2320 = vpack.c.b16 %v2288, %v2288
      %v2321 = vpack.c.b16 %v2289, %v2289
      %v2322 = vpack.c.b16 %v2290, %v2290
      %v2323 = vpack.c.b16 %v2291, %v2291
      %v2324 = vpack.c.b16 %v2292, %v2292
      %v2325 = vpack.c.b16 %v2293, %v2293
      %v2326 = vpack.c.b16 %v2294, %v2294
      %v2327 = vpack.c.b16 %v2295, %v2295
      %v2328 = vpack.c.b16 %v2296, %v2296
      %v2329 = vpack.c.b16 %v2297, %v2297
      %v2330 = vpack.c.b16 %v2298, %v2298
      %v2331 = vpack.c.b16 %v2299, %v2299
      %v2332 = vpack.c.b16 %v2300, %v2300
      %v2333 = vpack.c.b16 %v2301, %v2301
      %2366 = vst [vmem:[%s177] sm:$0xf] %v2302
      %2367 = vst [vmem:[%s177 + $0x4] sm:$0xf] %v2303
      %2368 = vst [vmem:[%s177 + $0x8] sm:$0xf] %v2304
      %2369 = vst [vmem:[%s177 + $0xc] sm:$0xf] %v2305
      %2370 = vst [vmem:[%s177 + $0x10] sm:$0xf] %v2306
      %2371 = vst [vmem:[%s177 + $0x14] sm:$0xf] %v2307
      %2372 = vst [vmem:[%s177 + $0x18] sm:$0xf] %v2308
      %2373 = vst [vmem:[%s177 + $0x1c] sm:$0xf] %v2309
      %2374 = vst [vmem:[%s177 + $0x20] sm:$0xf] %v2310
      %2375 = vst [vmem:[%s177 + $0x24] sm:$0xf] %v2311
      %2376 = vst [vmem:[%s177 + $0x28] sm:$0xf] %v2312
      %2377 = vst [vmem:[%s177 + $0x2c] sm:$0xf] %v2313
      %2378 = vst [vmem:[%s177 + $0x30] sm:$0xf] %v2314
      %2379 = vst [vmem:[%s177 + $0x34] sm:$0xf] %v2315
      %2380 = vst [vmem:[%s177 + $0x38] sm:$0xf] %v2316
      %2381 = vst [vmem:[%s177 + $0x3c] sm:$0xf] %v2317
      %2382 = vst [vmem:[%s177 + $0x40] sm:$0xf] %v2318
      %2383 = vst [vmem:[%s177 + $0x44] sm:$0xf] %v2319
      %2384 = vst [vmem:[%s177 + $0x48] sm:$0xf] %v2320
      %2385 = vst [vmem:[%s177 + $0x4c] sm:$0xf] %v2321
      %2386 = vst [vmem:[%s177 + $0x50] sm:$0xf] %v2322
      %2387 = vst [vmem:[%s177 + $0x54] sm:$0xf] %v2323
      %2388 = vst [vmem:[%s177 + $0x58] sm:$0xf] %v2324
      %2389 = vst [vmem:[%s177 + $0x5c] sm:$0xf] %v2325
      %2390 = vst [vmem:[%s177 + $0x60] sm:$0xf] %v2326
      %2391 = vst [vmem:[%s177 + $0x64] sm:$0xf] %v2327
      %2392 = vst [vmem:[%s177 + $0x68] sm:$0xf] %v2328
      %2393 = vst [vmem:[%s177 + $0x6c] sm:$0xf] %v2329
      %2394 = vst [vmem:[%s177 + $0x70] sm:$0xf] %v2330
      %2395 = vst [vmem:[%s177 + $0x74] sm:$0xf] %v2331
      %2396 = vst [vmem:[%s177 + $0x78] sm:$0xf] %v2332
      %2397 = vst [vmem:[%s177 + $0x7c] sm:$0xf] %v2333
      %p2398 = scmp.lt.s32.totalorder %s15, 1
      %s2399 = scalar_select %p2398, %s15, 1
      %s2400 = smul.addr %s2399, 32
      %s2401 = smul.addr %s2400, 4
      %s2402 = scalar_lea.vmem %s2, %s2401
      %p2403 = scmp.lt.s32.totalorder %s15, 1
      %s2404 = scalar_select %p2403, %s15, 1
      %s2405 = smul.addr %s2404, 2
      %s2406 = scalar_lea.vmem %s3, %s2405
      // Predicated region
      $region29: #{_lambda_.3} parent=27 // pred_check
        %p2407 = pneg %p80
      $region30: #{_lambda_.3} parent=27 // pred_check_branch
        %2409 = sbr.rel (%p2407) target = $region32
      $region31: #{_lambda_.3} parent=27 // pred_region
        _
      $region32: #{_lambda_.3} parent=27 // pred_fallthru
        _
      // Predicated region
      $region33: #{_lambda_.3} parent=27 // pred_check
        %p2410 = pneg %p106
      $region34: #{_lambda_.3} parent=27 // pred_check_branch
        %2412 = sbr.rel (%p2410) target = $region36
      $region35: #{_lambda_.3} parent=27 // pred_region
        _
      $region36: #{_lambda_.3} parent=27 // pred_fallthru
        _
    $region28: #{_lambda_.3} parent=5 // pred_fallthru
      _
    %p2413 = scmp.le.s32.totalorder 2, %s10
    // Predicated region
    $region37: #{_lambda_.3} parent=5 // pred_check
      %p2414 = pneg %p2413
    $region38: #{_lambda_.3} parent=5 // pred_check_branch
      %2416 = sbr.rel (%p2414) target = $region40
    $region39: #{_lambda_.3} parent=5 // pred_region
      %s2417 = ssub.s32 %s10, 2
      // Predicated region
      $region41: #{_lambda_.3} parent=39 // pred_check
        %p2418 = pneg %p86
      $region42: #{_lambda_.3} parent=39 // pred_check_branch
        %2420 = sbr.rel (%p2418) target = $region44
      $region43: #{_lambda_.3} parent=39 // pred_region
        %p2421 = scmp.lt.s32.totalorder %s16, 1
        %s2422 = scalar_select %p2421, %s16, 1
        %s2423 = smul.addr %s2422, 32
        %s2424 = smul.addr %s2423, 4
        %s2425 = scalar_lea.vmem %s2, %s2424
      $region44: #{_lambda_.3} parent=39 // pred_fallthru
        _
      // Predicated region
      $region45: #{_lambda_.3} parent=39 // pred_check
        %p2426 = pneg %p112
      $region46: #{_lambda_.3} parent=39 // pred_check_branch
        %2428 = sbr.rel (%p2426) target = $region48
      $region47: #{_lambda_.3} parent=39 // pred_region
        %p2429 = scmp.lt.s32.totalorder %s16, 1
        %s2430 = scalar_select %p2429, %s16, 1
        %s2431 = smul.addr %s2430, 2
        %s2432 = scalar_lea.vmem %s3, %s2431
      $region48: #{_lambda_.3} parent=39 // pred_fallthru
        _
    $region40: #{_lambda_.3} parent=5 // pred_fallthru
      _
  $region6: #{_lambda_.3} parent=0 // loop_footer
    %s14 = sadd.s32 1, %s10
  $region7: #{_lambda_.3} parent=0 // loop_footer_branch
    %9 = sbr.rel target = $region3
  $region8: #{_lambda_.3} parent=0 // loop_exit
    _

// kernel: _lambda_.4
$region0: #{_lambda_.4}
  #allocation0 [shape = 'u32[]', space=smem, size = 0x4, offset = 0x4, fixed_abs, tag = 'smem constant byte address 0x4 - core index']
  #allocation1 [shape = 'u32[144,128]{1,0:T(1,128)}', space=vmem, size = 0x12000, scoped, tag = 'internal scratch']
  %s0 = inlined_call_operand.vmem [shape: bf16[2,16,16,128], index: 0, kind: input, shape index: {}]
  %s1 = inlined_call_operand.vmem [shape: f32[1,128], index: 1, kind: input, shape index: {}]
  %s2 = inlined_call_operand.vmem [shape: f32[1,128], index: 2, kind: input, shape index: {}]
  %s3 = inlined_call_operand.vmem [shape: bf16[1152,128], index: 3, kind: input, shape index: {}]
  %s4 = inlined_call_operand.vmem [shape: bf16[2,16,16,128], index: 4, kind: output, shape index: {0}]
  %s5 = inlined_call_operand.vmem [shape: f32[2,2,128], index: 5, kind: output, shape index: {1}]
  %6 = xla_tuple %s4, %s5
  %s7 = sld [smem:[#allocation0]]
  $region57: #{_lambda_.4} parent=0
    _
  %s9 = ssub.s32 1, %s7
  %s10 = scalar_select 0, %s9, %s7
  loop: start=0, step=1, limit=4
  $region2: #{_lambda_.4} parent=0 // loop_pre_header
    _
  $region3: #{_lambda_.4} parent=0 // loop_header
    %s12 = sphi 0, %s16
    %p13 = scmp.ge.s32.totalorder %s12, 4
    %s22 = sphi 0, %s24
    %s25 = sphi 0, %s22
    %s26 = sphi 0, %s25
    %s42 = sphi 0, %s26
    %s46 = sphi 0, %s46
    %s48 = sphi 0, %s46
    %s49 = sphi 0, %s48
    %s63 = sphi 0, %s49
    %s67 = sphi 0, %s67
    %s69 = sphi 0, %s67
    %s70 = sphi 0, %s69
    %s84 = sphi 0, %s70
    %s88 = sphi 0, %s88
    %s90 = sphi 0, %s88
    %s91 = sphi 0, %s90
    %s105 = sphi 0, %s91
    %s111 = sphi 0, %s113
    %s114 = sphi 0, %s111
    %s115 = sphi 0, %s114
    %s131 = sphi 0, %s115
    %s137 = sphi 0, %s139
    %s140 = sphi 0, %s137
    %s141 = sphi 0, %s140
    %s157 = sphi 0, %s141
  $region4: #{_lambda_.4} parent=0 // loop_header_branch
    %15 = sbr.rel (%p13) target = $region8
  $region5: #{_lambda_.4} parent=0 // loop_body
    %s17 = ssub.s32 %s12, 1
    %s18 = ssub.s32 %s12, 2
    %s19 = sadd.s32 %s12, 1
    %s20 = ssub.s32 %s12, %s19
    %p21 = scmp.eq.s32.totalorder %s20, 0
    %s23 = sadd.s32 %s22, 1
    %s24 = scalar_select %p21, %s22, %s23
    %p27 = pneg %p21
    %p28 = scmp.eq.s32.totalorder %s12, 1
    %p29 = por %p27, %p28
    %p30 = scmp.ne.s32.totalorder %s22, %s25
    %p31 = scmp.eq.s32.totalorder %s12, 0
    %p32 = por %p30, %p31
    %p33 = scmp.ne.s32.totalorder %s22, %s25
    %p34 = scmp.eq.s32.totalorder %s17, 1
    %p35 = por %p33, %p34
    %p36 = scmp.ne.s32.totalorder %s25, %s26
    %p37 = scmp.eq.s32.totalorder %s17, 0
    %p38 = por %p36, %p37
    %p39 = scmp.ne.s32.totalorder %s25, %s26
    %p40 = scmp.eq.s32.totalorder %s18, 1
    %p41 = por %p39, %p40
    %p43 = scmp.ne.s32.totalorder %s26, %s42
    %p44 = scmp.eq.s32.totalorder %s18, 0
    %p45 = por %p43, %p44
    %s47 = sadd.s32 %s46, 1
    %p50 = scmp.eq.s32.totalorder %s12, 1
    %p51 = scmp.ne.s32.totalorder %s46, %s48
    %p52 = scmp.eq.s32.totalorder %s12, 0
    %p53 = por %p51, %p52
    %p54 = scmp.ne.s32.totalorder %s46, %s48
    %p55 = scmp.eq.s32.totalorder %s17, 1
    %p56 = por %p54, %p55
    %p57 = scmp.ne.s32.totalorder %s48, %s49
    %p58 = scmp.eq.s32.totalorder %s17, 0
    %p59 = por %p57, %p58
    %p60 = scmp.ne.s32.totalorder %s48, %s49
    %p61 = scmp.eq.s32.totalorder %s18, 1
    %p62 = por %p60, %p61
    %p64 = scmp.ne.s32.totalorder %s49, %s63
    %p65 = scmp.eq.s32.totalorder %s18, 0
    %p66 = por %p64, %p65
    %s68 = sadd.s32 %s67, 1
    %p71 = scmp.eq.s32.totalorder %s12, 1
    %p72 = scmp.ne.s32.totalorder %s67, %s69
    %p73 = scmp.eq.s32.totalorder %s12, 0
    %p74 = por %p72, %p73
    %p75 = scmp.ne.s32.totalorder %s67, %s69
    %p76 = scmp.eq.s32.totalorder %s17, 1
    %p77 = por %p75, %p76
    %p78 = scmp.ne.s32.totalorder %s69, %s70
    %p79 = scmp.eq.s32.totalorder %s17, 0
    %p80 = por %p78, %p79
    %p81 = scmp.ne.s32.totalorder %s69, %s70
    %p82 = scmp.eq.s32.totalorder %s18, 1
    %p83 = por %p81, %p82
    %p85 = scmp.ne.s32.totalorder %s70, %s84
    %p86 = scmp.eq.s32.totalorder %s18, 0
    %p87 = por %p85, %p86
    %s89 = sadd.s32 %s88, 1
    %p92 = scmp.eq.s32.totalorder %s12, 1
    %p93 = scmp.ne.s32.totalorder %s88, %s90
    %p94 = scmp.eq.s32.totalorder %s12, 0
    %p95 = por %p93, %p94
    %p96 = scmp.ne.s32.totalorder %s88, %s90
    %p97 = scmp.eq.s32.totalorder %s17, 1
    %p98 = por %p96, %p97
    %p99 = scmp.ne.s32.totalorder %s90, %s91
    %p100 = scmp.eq.s32.totalorder %s17, 0
    %p101 = por %p99, %p100
    %p102 = scmp.ne.s32.totalorder %s90, %s91
    %p103 = scmp.eq.s32.totalorder %s18, 1
    %p104 = por %p102, %p103
    %p106 = scmp.ne.s32.totalorder %s91, %s105
    %p107 = scmp.eq.s32.totalorder %s18, 0
    %p108 = por %p106, %p107
    %s109 = ssub.s32 %s12, %s19
    %p110 = scmp.eq.s32.totalorder %s109, 0
    %s112 = sadd.s32 %s111, 1
    %s113 = scalar_select %p110, %s111, %s112
    %p116 = pneg %p110
    %p117 = scmp.eq.s32.totalorder %s12, 1
    %p118 = por %p116, %p117
    %p119 = scmp.ne.s32.totalorder %s111, %s114
    %p120 = scmp.eq.s32.totalorder %s12, 0
    %p121 = por %p119, %p120
    %p122 = scmp.ne.s32.totalorder %s111, %s114
    %p123 = scmp.eq.s32.totalorder %s17, 1
    %p124 = por %p122, %p123
    %p125 = scmp.ne.s32.totalorder %s114, %s115
    %p126 = scmp.eq.s32.totalorder %s17, 0
    %p127 = por %p125, %p126
    %p128 = scmp.ne.s32.totalorder %s114, %s115
    %p129 = scmp.eq.s32.totalorder %s18, 1
    %p130 = por %p128, %p129
    %p132 = scmp.ne.s32.totalorder %s115, %s131
    %p133 = scmp.eq.s32.totalorder %s18, 0
    %p134 = por %p132, %p133
    %s135 = ssub.s32 %s12, %s19
    %p136 = scmp.eq.s32.totalorder %s135, 0
    %s138 = sadd.s32 %s137, 1
    %s139 = scalar_select %p136, %s137, %s138
    %p142 = pneg %p136
    %p143 = scmp.eq.s32.totalorder %s12, 1
    %p144 = por %p142, %p143
    %p145 = scmp.ne.s32.totalorder %s137, %s140
    %p146 = scmp.eq.s32.totalorder %s12, 0
    %p147 = por %p145, %p146
    %p148 = scmp.ne.s32.totalorder %s137, %s140
    %p149 = scmp.eq.s32.totalorder %s17, 1
    %p150 = por %p148, %p149
    %p151 = scmp.ne.s32.totalorder %s140, %s141
    %p152 = scmp.eq.s32.totalorder %s17, 0
    %p153 = por %p151, %p152
    %p154 = scmp.ne.s32.totalorder %s140, %s141
    %p155 = scmp.eq.s32.totalorder %s18, 1
    %p156 = por %p154, %p155
    %p158 = scmp.ne.s32.totalorder %s141, %s157
    %p159 = scmp.eq.s32.totalorder %s18, 0
    %p160 = por %p158, %p159
    %p161 = scmp.le.s32.totalorder 1, %s12
    %p162 = scmp.lt.s32.totalorder %s12, 3
    %p163 = pnand %p161, %p162
    %p164 = pneg %p163
    // Predicated region
    $region9: #{_lambda_.4} parent=5 // pred_check
      _
    $region10: #{_lambda_.4} parent=5 // pred_check_branch
      %166 = sbr.rel (%p163) target = $region12
    $region11: #{_lambda_.4} parent=5 // pred_region
      %s167 = ssub.s32 %s12, 1
      // Predicated region
      $region13: #{_lambda_.4} parent=11 // pred_check
        %p168 = pneg %p59
      $region14: #{_lambda_.4} parent=11 // pred_check_branch
        %170 = sbr.rel (%p168) target = $region16
      $region15: #{_lambda_.4} parent=11 // pred_region
        _
      $region16: #{_lambda_.4} parent=11 // pred_fallthru
        _
      // Predicated region
      $region17: #{_lambda_.4} parent=11 // pred_check
        %p171 = pneg %p80
      $region18: #{_lambda_.4} parent=11 // pred_check_branch
        %173 = sbr.rel (%p171) target = $region20
      $region19: #{_lambda_.4} parent=11 // pred_region
        _
      $region20: #{_lambda_.4} parent=11 // pred_fallthru
        _
      // Predicated region
      $region21: #{_lambda_.4} parent=11 // pred_check
        %p174 = pneg %p101
      $region22: #{_lambda_.4} parent=11 // pred_check_branch
        %176 = sbr.rel (%p174) target = $region24
      $region23: #{_lambda_.4} parent=11 // pred_region
        _
      $region24: #{_lambda_.4} parent=11 // pred_fallthru
        _
    $region12: #{_lambda_.4} parent=5 // pred_fallthru
      _
    %p177 = scmp.lt.s32.totalorder %s12, 2
    // Predicated region
    $region25: #{_lambda_.4} parent=5 // pred_check
      %p178 = pneg %p177
    $region26: #{_lambda_.4} parent=5 // pred_check_branch
      %180 = sbr.rel (%p178) target = $region28
    $region27: #{_lambda_.4} parent=5 // pred_region
      // Predicated region
      $region29: #{_lambda_.4} parent=27 // pred_check
        %p181 = pneg %p32
      $region30: #{_lambda_.4} parent=27 // pred_check_branch
        %183 = sbr.rel (%p181) target = $region32
      $region31: #{_lambda_.4} parent=27 // pred_region
        %p184 = scmp.lt.s32.totalorder %s12, 1
        %s185 = scalar_select %p184, %s12, 1
        %s186 = smul.addr %s185, 32
        %s187 = smul.addr %s186, 4
        %s188 = scalar_lea.vmem %s0, %s187
      $region32: #{_lambda_.4} parent=27 // pred_fallthru
        _
    $region28: #{_lambda_.4} parent=5 // pred_fallthru
      _
    %p189 = scmp.le.s32.totalorder 1, %s12
    %p190 = scmp.lt.s32.totalorder %s12, 3
    %p191 = pnand %p189, %p190
    %p192 = pneg %p191
    // Predicated region
    $region33: #{_lambda_.4} parent=5 // pred_check
      _
    $region34: #{_lambda_.4} parent=5 // pred_check_branch
      %194 = sbr.rel (%p191) target = $region36
    $region35: #{_lambda_.4} parent=5 // pred_region
      %s195 = ssub.s32 %s12, 1
      %p196 = scmp.lt.s32.totalorder %s17, 1
      %s197 = scalar_select %p196, %s17, 1
      %s198 = smul.addr %s197, 32
      %s199 = smul.addr %s198, 4
      %s200 = scalar_lea.vmem %s0, %s199
      %p201 = pneg %p38
      %p202 = pneg %p35
      %p203 = pneg %p59
      %p204 = pneg %p56
      %p205 = pneg %p80
      %p206 = pneg %p77
      %p207 = pneg %p101
      %p208 = pneg %p98
      %p209 = pneg %p127
      %p210 = pneg %p124
      %p211 = scmp.lt.s32.totalorder %s17, 1
      %s212 = scalar_select %p211, %s17, 1
      %s213 = smul.addr %s212, 32
      %s214 = smul.addr %s213, 4
      %s215 = scalar_lea.vmem %s4, %s214
      %p216 = pneg %p153
      %p217 = pneg %p150
      %p218 = scmp.lt.s32.totalorder %s17, 1
      %s219 = scalar_select %p218, %s17, 1
      %s220 = smul.addr %s219, 2
      %s221 = scalar_lea.vmem %s5, %s220
      %p222 = scmp.lt.s32.totalorder %s17, 1
      %s223 = scalar_select %p222, %s17, 1
      %s224 = smul.addr %s223, 32
      %s225 = smul.addr %s224, 4
      %s226 = scalar_lea.vmem %s0, %s225
      %p227 = scmp.lt.s32.totalorder %s17, 1
      %s228 = scalar_select %p227, %s17, 1
      %s229 = smul.addr %s228, 32
      %s230 = smul.addr %s229, 4
      %s231 = scalar_lea.vmem %s4, %s230
      %p232 = scmp.lt.s32.totalorder %s17, 1
      %s233 = scalar_select %p232, %s17, 1
      %s234 = smul.addr %s233, 2
      %s235 = scalar_lea.vmem %s5, %s234
      %v237 = vld [vmem:[%s226] sm:$0xf]
      %v238 = vld [vmem:[%s226 + $0x4] sm:$0xf]
      %v239 = vld [vmem:[%s226 + $0x8] sm:$0xf]
      %v240 = vld [vmem:[%s226 + $0xc] sm:$0xf]
      %v241 = vld [vmem:[%s226 + $0x10] sm:$0xf]
      %v242 = vld [vmem:[%s226 + $0x14] sm:$0xf]
      %v243 = vld [vmem:[%s226 + $0x18] sm:$0xf]
      %v244 = vld [vmem:[%s226 + $0x1c] sm:$0xf]
      %v245 = vld [vmem:[%s226 + $0x20] sm:$0xf]
      %v246 = vld [vmem:[%s226 + $0x24] sm:$0xf]
      %v247 = vld [vmem:[%s226 + $0x28] sm:$0xf]
      %v248 = vld [vmem:[%s226 + $0x2c] sm:$0xf]
      %v249 = vld [vmem:[%s226 + $0x30] sm:$0xf]
      %v250 = vld [vmem:[%s226 + $0x34] sm:$0xf]
      %v251 = vld [vmem:[%s226 + $0x38] sm:$0xf]
      %v252 = vld [vmem:[%s226 + $0x3c] sm:$0xf]
      %v253 = vld [vmem:[%s226 + $0x40] sm:$0xf]
      %v254 = vld [vmem:[%s226 + $0x44] sm:$0xf]
      %v255 = vld [vmem:[%s226 + $0x48] sm:$0xf]
      %v256 = vld [vmem:[%s226 + $0x4c] sm:$0xf]
      %v257 = vld [vmem:[%s226 + $0x50] sm:$0xf]
      %v258 = vld [vmem:[%s226 + $0x54] sm:$0xf]
      %v259 = vld [vmem:[%s226 + $0x58] sm:$0xf]
      %v260 = vld [vmem:[%s226 + $0x5c] sm:$0xf]
      %v261 = vld [vmem:[%s226 + $0x60] sm:$0xf]
      %v262 = vld [vmem:[%s226 + $0x64] sm:$0xf]
      %v263 = vld [vmem:[%s226 + $0x68] sm:$0xf]
      %v264 = vld [vmem:[%s226 + $0x6c] sm:$0xf]
      %v265 = vld [vmem:[%s226 + $0x70] sm:$0xf]
      %v266 = vld [vmem:[%s226 + $0x74] sm:$0xf]
      %v267 = vld [vmem:[%s226 + $0x78] sm:$0xf]
      %v268 = vld [vmem:[%s226 + $0x7c] sm:$0xf]
      %v269 = vunpack.c.l.bf16 %v237
      %v270 = vunpack.c.l.bf16 %v238
      %v271 = vunpack.c.l.bf16 %v239
      %v272 = vunpack.c.l.bf16 %v240
      %v273 = vunpack.c.l.bf16 %v241
      %v274 = vunpack.c.l.bf16 %v242
      %v275 = vunpack.c.l.bf16 %v243
      %v276 = vunpack.c.l.bf16 %v244
      %v277 = vunpack.c.l.bf16 %v245
      %v278 = vunpack.c.l.bf16 %v246
      %v279 = vunpack.c.l.bf16 %v247
      %v280 = vunpack.c.l.bf16 %v248
      %v281 = vunpack.c.l.bf16 %v249
      %v282 = vunpack.c.l.bf16 %v250
      %v283 = vunpack.c.l.bf16 %v251
      %v284 = vunpack.c.l.bf16 %v252
      %v285 = vunpack.c.l.bf16 %v253
      %v286 = vunpack.c.l.bf16 %v254
      %v287 = vunpack.c.l.bf16 %v255
      %v288 = vunpack.c.l.bf16 %v256
      %v289 = vunpack.c.l.bf16 %v257
      %v290 = vunpack.c.l.bf16 %v258
      %v291 = vunpack.c.l.bf16 %v259
      %v292 = vunpack.c.l.bf16 %v260
      %v293 = vunpack.c.l.bf16 %v261
      %v294 = vunpack.c.l.bf16 %v262
      %v295 = vunpack.c.l.bf16 %v263
      %v296 = vunpack.c.l.bf16 %v264
      %v297 = vunpack.c.l.bf16 %v265
      %v298 = vunpack.c.l.bf16 %v266
      %v299 = vunpack.c.l.bf16 %v267
      %v300 = vunpack.c.l.bf16 %v268
      %v301 = vld [vmem:[%s1] sm:$0x1]
      %v303 = vlaneseq
      %v304 = vshrl.u32 %v303, 7
      %v305 = vsub.s32 0, %v304
      %v306 = vrot.slane %v301, %v305
      %v308 = vmul.f32 %v269, %v306
      %v309 = vmul.f32 %v270, %v306
      %v310 = vmul.f32 %v271, %v306
      %v311 = vmul.f32 %v272, %v306
      %v312 = vmul.f32 %v273, %v306
      %v313 = vmul.f32 %v274, %v306
      %v314 = vmul.f32 %v275, %v306
      %v315 = vmul.f32 %v276, %v306
      %v316 = vmul.f32 %v277, %v306
      %v317 = vmul.f32 %v278, %v306
      %v318 = vmul.f32 %v279, %v306
      %v319 = vmul.f32 %v280, %v306
      %v320 = vmul.f32 %v281, %v306
      %v321 = vmul.f32 %v282, %v306
      %v322 = vmul.f32 %v283, %v306
      %v323 = vmul.f32 %v284, %v306
      %v324 = vmul.f32 %v285, %v306
      %v325 = vmul.f32 %v286, %v306
      %v326 = vmul.f32 %v287, %v306
      %v327 = vmul.f32 %v288, %v306
      %v328 = vmul.f32 %v289, %v306
      %v329 = vmul.f32 %v290, %v306
      %v330 = vmul.f32 %v291, %v306
      %v331 = vmul.f32 %v292, %v306
      %v332 = vmul.f32 %v293, %v306
      %v333 = vmul.f32 %v294, %v306
      %v334 = vmul.f32 %v295, %v306
      %v335 = vmul.f32 %v296, %v306
      %v336 = vmul.f32 %v297, %v306
      %v337 = vmul.f32 %v298, %v306
      %v338 = vmul.f32 %v299, %v306
      %v339 = vmul.f32 %v300, %v306
      %v340 = vld [vmem:[%s2] sm:$0x1]
      %v342 = vlaneseq
      %v343 = vshrl.u32 %v342, 7
      %v344 = vsub.s32 0, %v343
      %v345 = vrot.slane %v340, %v344
      %v347 = vadd.f32 %v308, %v345
      %v348 = vadd.f32 %v309, %v345
      %v349 = vadd.f32 %v310, %v345
      %v350 = vadd.f32 %v311, %v345
      %v351 = vadd.f32 %v312, %v345
      %v352 = vadd.f32 %v313, %v345
      %v353 = vadd.f32 %v314, %v345
      %v354 = vadd.f32 %v315, %v345
      %v355 = vadd.f32 %v316, %v345
      %v356 = vadd.f32 %v317, %v345
      %v357 = vadd.f32 %v318, %v345
      %v358 = vadd.f32 %v319, %v345
      %v359 = vadd.f32 %v320, %v345
      %v360 = vadd.f32 %v321, %v345
      %v361 = vadd.f32 %v322, %v345
      %v362 = vadd.f32 %v323, %v345
      %v363 = vadd.f32 %v324, %v345
      %v364 = vadd.f32 %v325, %v345
      %v365 = vadd.f32 %v326, %v345
      %v366 = vadd.f32 %v327, %v345
      %v367 = vadd.f32 %v328, %v345
      %v368 = vadd.f32 %v329, %v345
      %v369 = vadd.f32 %v330, %v345
      %v370 = vadd.f32 %v331, %v345
      %v371 = vadd.f32 %v332, %v345
      %v372 = vadd.f32 %v333, %v345
      %v373 = vadd.f32 %v334, %v345
      %v374 = vadd.f32 %v335, %v345
      %v375 = vadd.f32 %v336, %v345
      %v376 = vadd.f32 %v337, %v345
      %v377 = vadd.f32 %v338, %v345
      %v378 = vadd.f32 %v339, %v345
      %v379 = vmax.f32 %v347, 0.0
      %v380 = vmax.f32 %v348, 0.0
      %v381 = vmax.f32 %v349, 0.0
      %v382 = vmax.f32 %v350, 0.0
      %v383 = vmax.f32 %v351, 0.0
      %v384 = vmax.f32 %v352, 0.0
      %v385 = vmax.f32 %v353, 0.0
      %v386 = vmax.f32 %v354, 0.0
      %v387 = vmax.f32 %v355, 0.0
      %v388 = vmax.f32 %v356, 0.0
      %v389 = vmax.f32 %v357, 0.0
      %v390 = vmax.f32 %v358, 0.0
      %v391 = vmax.f32 %v359, 0.0
      %v392 = vmax.f32 %v360, 0.0
      %v393 = vmax.f32 %v361, 0.0
      %v394 = vmax.f32 %v362, 0.0
      %v395 = vmax.f32 %v363, 0.0
      %v396 = vmax.f32 %v364, 0.0
      %v397 = vmax.f32 %v365, 0.0
      %v398 = vmax.f32 %v366, 0.0
      %v399 = vmax.f32 %v367, 0.0
      %v400 = vmax.f32 %v368, 0.0
      %v401 = vmax.f32 %v369, 0.0
      %v402 = vmax.f32 %v370, 0.0
      %v403 = vmax.f32 %v371, 0.0
      %v404 = vmax.f32 %v372, 0.0
      %v405 = vmax.f32 %v373, 0.0
      %v406 = vmax.f32 %v374, 0.0
      %v407 = vmax.f32 %v375, 0.0
      %v408 = vmax.f32 %v376, 0.0
      %v409 = vmax.f32 %v377, 0.0
      %v410 = vmax.f32 %v378, 0.0
      %v411 = vpack.c.bf16 %v380, %v379
      %v412 = vpack.c.bf16 %v382, %v381
      %v413 = vpack.c.bf16 %v384, %v383
      %v414 = vpack.c.bf16 %v386, %v385
      %v415 = vpack.c.bf16 %v388, %v387
      %v416 = vpack.c.bf16 %v390, %v389
      %v417 = vpack.c.bf16 %v392, %v391
      %v418 = vpack.c.bf16 %v394, %v393
      %v419 = vpack.c.bf16 %v396, %v395
      %v420 = vpack.c.bf16 %v398, %v397
      %v421 = vpack.c.bf16 %v400, %v399
      %v422 = vpack.c.bf16 %v402, %v401
      %v423 = vpack.c.bf16 %v404, %v403
      %v424 = vpack.c.bf16 %v406, %v405
      %v425 = vpack.c.bf16 %v408, %v407
      %v426 = vpack.c.bf16 %v410, %v409
      %v428 = vshrl.u32 0, 16
      %v430 = vrot.slane %v428, 7
      %v431 = vshll.u32 0, 16
      %v433 = vor.u32 %v430, %v431
      %v435 = vshrl.u32 %v411, 16
      %v437 = vrot.slane %v435, 7
      %v438 = vshll.u32 %v411, 16
      %v440 = vor.u32 %v437, %v438
      %v442 = vshrl.u32 %v412, 16
      %v444 = vrot.slane %v442, 7
      %v445 = vshll.u32 %v412, 16
      %v447 = vor.u32 %v444, %v445
      %v449 = vshrl.u32 %v413, 16
      %v451 = vrot.slane %v449, 7
      %v452 = vshll.u32 %v413, 16
      %v454 = vor.u32 %v451, %v452
      %v456 = vshrl.u32 %v414, 16
      %v458 = vrot.slane %v456, 7
      %v459 = vshll.u32 %v414, 16
      %v461 = vor.u32 %v458, %v459
      %v463 = vshrl.u32 %v415, 16
      %v465 = vrot.slane %v463, 7
      %v466 = vshll.u32 %v415, 16
      %v468 = vor.u32 %v465, %v466
      %v470 = vshrl.u32 %v416, 16
      %v472 = vrot.slane %v470, 7
      %v473 = vshll.u32 %v416, 16
      %v475 = vor.u32 %v472, %v473
      %v477 = vshrl.u32 %v417, 16
      %v479 = vrot.slane %v477, 7
      %v480 = vshll.u32 %v417, 16
      %v482 = vor.u32 %v479, %v480
      %v484 = vshrl.u32 %v418, 16
      %v486 = vrot.slane %v484, 7
      %v487 = vshll.u32 %v418, 16
      %v489 = vor.u32 %v486, %v487
      %v491 = vshrl.u32 %v419, 16
      %v493 = vrot.slane %v491, 7
      %v494 = vshll.u32 %v419, 16
      %v496 = vor.u32 %v493, %v494
      %v498 = vshrl.u32 %v420, 16
      %v500 = vrot.slane %v498, 7
      %v501 = vshll.u32 %v420, 16
      %v503 = vor.u32 %v500, %v501
      %v505 = vshrl.u32 %v421, 16
      %v507 = vrot.slane %v505, 7
      %v508 = vshll.u32 %v421, 16
      %v510 = vor.u32 %v507, %v508
      %v512 = vshrl.u32 %v422, 16
      %v514 = vrot.slane %v512, 7
      %v515 = vshll.u32 %v422, 16
      %v517 = vor.u32 %v514, %v515
      %v519 = vshrl.u32 %v423, 16
      %v521 = vrot.slane %v519, 7
      %v522 = vshll.u32 %v423, 16
      %v524 = vor.u32 %v521, %v522
      %v526 = vshrl.u32 %v424, 16
      %v528 = vrot.slane %v526, 7
      %v529 = vshll.u32 %v424, 16
      %v531 = vor.u32 %v528, %v529
      %v533 = vshrl.u32 %v425, 16
      %v535 = vrot.slane %v533, 7
      %v536 = vshll.u32 %v425, 16
      %v538 = vor.u32 %v535, %v536
      %vm555 = vcmask 1040384
      %vm556 = vsmask.f32 256
      %vm557 = vmand %vm555, %vm556
      %v558 = vsel %vm557, 0, %v433
      %v559 = vsel %vm557, 0, %v440
      %v560 = vsel %vm557, 0, %v447
      %v561 = vsel %vm557, 0, %v454
      %v562 = vsel %vm557, 0, %v461
      %v563 = vsel %vm557, 0, %v468
      %v564 = vsel %vm557, 0, %v475
      %v565 = vsel %vm557, 0, %v482
      %v566 = vsel %vm557, 0, %v489
      %v567 = vsel %vm557, 0, %v496
      %v568 = vsel %vm557, 0, %v503
      %v569 = vsel %vm557, 0, %v510
      %v570 = vsel %vm557, 0, %v517
      %v571 = vsel %vm557, 0, %v524
      %v572 = vsel %vm557, 0, %v531
      %v573 = vsel %vm557, 0, %v538
      %v574 = vrot.slane %v431, 1
      %v575 = vor.u32 %v428, %v574
      %v576 = vrot.slane %v438, 1
      %v577 = vor.u32 %v435, %v576
      %v578 = vrot.slane %v445, 1
      %v579 = vor.u32 %v442, %v578
      %v580 = vrot.slane %v452, 1
      %v581 = vor.u32 %v449, %v580
      %v582 = vrot.slane %v459, 1
      %v583 = vor.u32 %v456, %v582
      %v584 = vrot.slane %v466, 1
      %v585 = vor.u32 %v463, %v584
      %v586 = vrot.slane %v473, 1
      %v587 = vor.u32 %v470, %v586
      %v588 = vrot.slane %v480, 1
      %v589 = vor.u32 %v477, %v588
      %v590 = vrot.slane %v487, 1
      %v591 = vor.u32 %v484, %v590
      %v592 = vrot.slane %v494, 1
      %v593 = vor.u32 %v491, %v592
      %v594 = vrot.slane %v501, 1
      %v595 = vor.u32 %v498, %v594
      %v596 = vrot.slane %v508, 1
      %v597 = vor.u32 %v505, %v596
      %v598 = vrot.slane %v515, 1
      %v599 = vor.u32 %v512, %v598
      %v600 = vrot.slane %v522, 1
      %v601 = vor.u32 %v519, %v600
      %v602 = vrot.slane %v529, 1
      %v603 = vor.u32 %v526, %v602
      %v604 = vrot.slane %v536, 1
      %v605 = vor.u32 %v533, %v604
      %vm622 = vcmask 1047552
      %vm623 = vsmask.f32 7424
      %vm624 = vmand %vm622, %vm623
      %v625 = vsel %vm624, %v575, 0
      %v626 = vsel %vm624, %v577, 0
      %v627 = vsel %vm624, %v579, 0
      %v628 = vsel %vm624, %v581, 0
      %v629 = vsel %vm624, %v583, 0
      %v630 = vsel %vm624, %v585, 0
      %v631 = vsel %vm624, %v587, 0
      %v632 = vsel %vm624, %v589, 0
      %v633 = vsel %vm624, %v591, 0
      %v634 = vsel %vm624, %v593, 0
      %v635 = vsel %vm624, %v595, 0
      %v636 = vsel %vm624, %v597, 0
      %v637 = vsel %vm624, %v599, 0
      %v638 = vsel %vm624, %v601, 0
      %v639 = vsel %vm624, %v603, 0
      %v640 = vsel %vm624, %v605, 0
      %v641 = vld [vmem:[%s3] sm:$0xf]
      %v642 = vld [vmem:[%s3 + $0x4] sm:$0xf]
      %v643 = vld [vmem:[%s3 + $0x8] sm:$0xf]
      %v644 = vld [vmem:[%s3 + $0xc] sm:$0xf]
      %v645 = vld [vmem:[%s3 + $0x10] sm:$0xf]
      %v646 = vld [vmem:[%s3 + $0x14] sm:$0xf]
      %v647 = vld [vmem:[%s3 + $0x18] sm:$0xf]
      %v648 = vld [vmem:[%s3 + $0x1c] sm:$0xf]
      %v649 = vld [vmem:[%s3 + $0x20] sm:$0xf]
      %v650 = vld [vmem:[%s3 + $0x24] sm:$0xf]
      %v651 = vld [vmem:[%s3 + $0x28] sm:$0xf]
      %v652 = vld [vmem:[%s3 + $0x2c] sm:$0xf]
      %v653 = vld [vmem:[%s3 + $0x30] sm:$0xf]
      %v654 = vld [vmem:[%s3 + $0x34] sm:$0xf]
      %v655 = vld [vmem:[%s3 + $0x38] sm:$0xf]
      %v656 = vld [vmem:[%s3 + $0x3c] sm:$0xf]
      %v657 = vld [vmem:[%s3 + $0x40] sm:$0xf]
      %v658 = vld [vmem:[%s3 + $0x44] sm:$0xf]
      %v659 = vld [vmem:[%s3 + $0x48] sm:$0xf]
      %v660 = vld [vmem:[%s3 + $0x4c] sm:$0xf]
      %v661 = vld [vmem:[%s3 + $0x50] sm:$0xf]
      %v662 = vld [vmem:[%s3 + $0x54] sm:$0xf]
      %v663 = vld [vmem:[%s3 + $0x58] sm:$0xf]
      %v664 = vld [vmem:[%s3 + $0x5c] sm:$0xf]
      %v665 = vld [vmem:[%s3 + $0x60] sm:$0xf]
      %v666 = vld [vmem:[%s3 + $0x64] sm:$0xf]
      %v667 = vld [vmem:[%s3 + $0x68] sm:$0xf]
      %v668 = vld [vmem:[%s3 + $0x6c] sm:$0xf]
      %v669 = vld [vmem:[%s3 + $0x70] sm:$0xf]
      %v670 = vld [vmem:[%s3 + $0x74] sm:$0xf]
      %v671 = vld [vmem:[%s3 + $0x78] sm:$0xf]
      %v672 = vld [vmem:[%s3 + $0x7c] sm:$0xf]
      %v673 = vld [vmem:[%s3 + $0x80] sm:$0xf]
      %v674 = vld [vmem:[%s3 + $0x84] sm:$0xf]
      %v675 = vld [vmem:[%s3 + $0x88] sm:$0xf]
      %v676 = vld [vmem:[%s3 + $0x8c] sm:$0xf]
      %v677 = vld [vmem:[%s3 + $0x90] sm:$0xf]
      %v678 = vld [vmem:[%s3 + $0x94] sm:$0xf]
      %v679 = vld [vmem:[%s3 + $0x98] sm:$0xf]
      %v680 = vld [vmem:[%s3 + $0x9c] sm:$0xf]
      %v681 = vld [vmem:[%s3 + $0xa0] sm:$0xf]
      %v682 = vld [vmem:[%s3 + $0xa4] sm:$0xf]
      %v683 = vld [vmem:[%s3 + $0xa8] sm:$0xf]
      %v684 = vld [vmem:[%s3 + $0xac] sm:$0xf]
      %v685 = vld [vmem:[%s3 + $0xb0] sm:$0xf]
      %v686 = vld [vmem:[%s3 + $0xb4] sm:$0xf]
      %v687 = vld [vmem:[%s3 + $0xb8] sm:$0xf]
      %v688 = vld [vmem:[%s3 + $0xbc] sm:$0xf]
      %v690 = vshrl.u32 %v426, 16
      %v692 = vrot.slane %v690, 7
      %v693 = vshll.u32 %v426, 16
      %v695 = vor.u32 %v692, %v693
      %v697 = vsel %vm557, 0, %v695
      %v698 = vrot.slane %v693, 1
      %v699 = vor.u32 %v690, %v698
      %v701 = vsel %vm624, %v699, 0
      %v702 = vld [vmem:[%s3 + $0xc0] sm:$0xf]
      %v703 = vld [vmem:[%s3 + $0xc4] sm:$0xf]
      %v704 = vld [vmem:[%s3 + $0xc8] sm:$0xf]
      %v705 = vld [vmem:[%s3 + $0xcc] sm:$0xf]
      %v706 = vld [vmem:[%s3 + $0xd0] sm:$0xf]
      %v707 = vld [vmem:[%s3 + $0xd4] sm:$0xf]
      %v708 = vld [vmem:[%s3 + $0xd8] sm:$0xf]
      %v709 = vld [vmem:[%s3 + $0xdc] sm:$0xf]
      %v710 = vld [vmem:[%s3 + $0xe0] sm:$0xf]
      %v711 = vld [vmem:[%s3 + $0xe4] sm:$0xf]
      %v712 = vld [vmem:[%s3 + $0xe8] sm:$0xf]
      %v713 = vld [vmem:[%s3 + $0xec] sm:$0xf]
      %v714 = vld [vmem:[%s3 + $0xf0] sm:$0xf]
      %v715 = vld [vmem:[%s3 + $0xf4] sm:$0xf]
      %v716 = vld [vmem:[%s3 + $0xf8] sm:$0xf]
      %v717 = vld [vmem:[%s3 + $0xfc] sm:$0xf]
      %v718 = vld [vmem:[%s3 + $0x100] sm:$0xf]
      %v719 = vld [vmem:[%s3 + $0x104] sm:$0xf]
      %v720 = vld [vmem:[%s3 + $0x108] sm:$0xf]
      %v721 = vld [vmem:[%s3 + $0x10c] sm:$0xf]
      %v722 = vld [vmem:[%s3 + $0x110] sm:$0xf]
      %v723 = vld [vmem:[%s3 + $0x114] sm:$0xf]
      %v724 = vld [vmem:[%s3 + $0x118] sm:$0xf]
      %v725 = vld [vmem:[%s3 + $0x11c] sm:$0xf]
      %v726 = vld [vmem:[%s3 + $0x120] sm:$0xf]
      %v727 = vld [vmem:[%s3 + $0x124] sm:$0xf]
      %v728 = vld [vmem:[%s3 + $0x128] sm:$0xf]
      %v729 = vld [vmem:[%s3 + $0x12c] sm:$0xf]
      %v730 = vld [vmem:[%s3 + $0x130] sm:$0xf]
      %v731 = vld [vmem:[%s3 + $0x134] sm:$0xf]
      %v732 = vld [vmem:[%s3 + $0x138] sm:$0xf]
      %v733 = vld [vmem:[%s3 + $0x13c] sm:$0xf]
      %v734 = vld [vmem:[%s3 + $0x140] sm:$0xf]
      %v735 = vld [vmem:[%s3 + $0x144] sm:$0xf]
      %v736 = vld [vmem:[%s3 + $0x148] sm:$0xf]
      %v737 = vld [vmem:[%s3 + $0x14c] sm:$0xf]
      %v738 = vld [vmem:[%s3 + $0x150] sm:$0xf]
      %v739 = vld [vmem:[%s3 + $0x154] sm:$0xf]
      %v740 = vld [vmem:[%s3 + $0x158] sm:$0xf]
      %v741 = vld [vmem:[%s3 + $0x15c] sm:$0xf]
      %v742 = vld [vmem:[%s3 + $0x160] sm:$0xf]
      %v743 = vld [vmem:[%s3 + $0x164] sm:$0xf]
      %v744 = vld [vmem:[%s3 + $0x168] sm:$0xf]
      %v745 = vld [vmem:[%s3 + $0x16c] sm:$0xf]
      %v746 = vld [vmem:[%s3 + $0x170] sm:$0xf]
      %v747 = vld [vmem:[%s3 + $0x174] sm:$0xf]
      %v748 = vld [vmem:[%s3 + $0x178] sm:$0xf]
      %v749 = vld [vmem:[%s3 + $0x17c] sm:$0xf]
      %v798 = vunpack.c.l.b16 %v702
      %v799 = vunpack.c.l.b16 %v703
      %v800 = vunpack.c.l.b16 %v704
      %v801 = vunpack.c.l.b16 %v705
      %v802 = vunpack.c.l.b16 %v706
      %v803 = vunpack.c.l.b16 %v707
      %v804 = vunpack.c.l.b16 %v708
      %v805 = vunpack.c.l.b16 %v709
      %v806 = vunpack.c.l.b16 %v710
      %v807 = vunpack.c.l.b16 %v711
      %v808 = vunpack.c.l.b16 %v712
      %v809 = vunpack.c.l.b16 %v713
      %v810 = vunpack.c.l.b16 %v714
      %v811 = vunpack.c.l.b16 %v715
      %v812 = vunpack.c.l.b16 %v716
      %v813 = vunpack.c.l.b16 %v717
      %v814 = vunpack.c.l.b16 %v718
      %v815 = vunpack.c.l.b16 %v719
      %v816 = vunpack.c.l.b16 %v720
      %v817 = vunpack.c.l.b16 %v721
      %v818 = vunpack.c.l.b16 %v722
      %v819 = vunpack.c.l.b16 %v723
      %v820 = vunpack.c.l.b16 %v724
      %v821 = vunpack.c.l.b16 %v725
      %v822 = vunpack.c.l.b16 %v726
      %v823 = vunpack.c.l.b16 %v727
      %v824 = vunpack.c.l.b16 %v728
      %v825 = vunpack.c.l.b16 %v729
      %v826 = vunpack.c.l.b16 %v730
      %v827 = vunpack.c.l.b16 %v731
      %v828 = vunpack.c.l.b16 %v732
      %v829 = vunpack.c.l.b16 %v733
      %v830 = vunpack.c.l.b16 %v734
      %v831 = vunpack.c.l.b16 %v735
      %v832 = vunpack.c.l.b16 %v736
      %v833 = vunpack.c.l.b16 %v737
      %v834 = vunpack.c.l.b16 %v738
      %v835 = vunpack.c.l.b16 %v739
      %v836 = vunpack.c.l.b16 %v740
      %v837 = vunpack.c.l.b16 %v741
      %v838 = vunpack.c.l.b16 %v742
      %v839 = vunpack.c.l.b16 %v743
      %v840 = vunpack.c.l.b16 %v744
      %v841 = vunpack.c.l.b16 %v745
      %v842 = vunpack.c.l.b16 %v746
      %v843 = vunpack.c.l.b16 %v747
      %v844 = vunpack.c.l.b16 %v748
      %v845 = vunpack.c.l.b16 %v749
      %v846 = vpack.c.b16 %v799, %v798
      %v847 = vpack.c.b16 %v801, %v800
      %v848 = vpack.c.b16 %v803, %v802
      %v849 = vpack.c.b16 %v805, %v804
      %v850 = vpack.c.b16 %v807, %v806
      %v851 = vpack.c.b16 %v809, %v808
      %v852 = vpack.c.b16 %v811, %v810
      %v853 = vpack.c.b16 %v813, %v812
      %v854 = vpack.c.b16 %v815, %v814
      %v855 = vpack.c.b16 %v817, %v816
      %v856 = vpack.c.b16 %v819, %v818
      %v857 = vpack.c.b16 %v821, %v820
      %v858 = vpack.c.b16 %v823, %v822
      %v859 = vpack.c.b16 %v825, %v824
      %v860 = vpack.c.b16 %v827, %v826
      %v861 = vpack.c.b16 %v829, %v828
      %v862 = vpack.c.b16 %v831, %v830
      %v863 = vpack.c.b16 %v833, %v832
      %v864 = vpack.c.b16 %v835, %v834
      %v865 = vpack.c.b16 %v837, %v836
      %v866 = vpack.c.b16 %v839, %v838
      %v867 = vpack.c.b16 %v841, %v840
      %v868 = vpack.c.b16 %v843, %v842
      %v869 = vpack.c.b16 %v845, %v844
      %894 = vmatprep.subr.bf16.mxu0 0
      %895 = vmatpush1.bf16.msra.mxu0 %v853
      %896 = vmatprep.subr.bf16.mxu0 0
      %897 = vmatpush1.bf16.msra.mxu0 %v852
      %898 = vmatprep.subr.bf16.mxu0 0
      %899 = vmatpush1.bf16.msra.mxu0 %v851
      %900 = vmatprep.subr.bf16.mxu0 0
      %901 = vmatpush1.bf16.msra.mxu0 %v850
      %902 = vmatprep.subr.bf16.mxu0 0
      %903 = vmatpush1.bf16.msra.mxu0 %v849
      %904 = vmatprep.subr.bf16.mxu0 0
      %905 = vmatpush1.bf16.msra.mxu0 %v848
      %906 = vmatprep.subr.bf16.mxu0 0
      %907 = vmatpush1.bf16.msra.mxu0 %v847
      %908 = vmatprep.subr.bf16.mxu0 0
      %909 = vmatpush1.bf16.msra.mxu0 %v846
      %910 = vmatprep.subr.bf16.mxu0 0
      %911 = vmatpush2.bf16.msra.mxu0 %v861
      %912 = vmatprep.subr.bf16.mxu0 0
      %913 = vmatpush2.bf16.msra.mxu0 %v860
      %914 = vmatprep.subr.bf16.mxu0 0
      %915 = vmatpush2.bf16.msra.mxu0 %v859
      %916 = vmatprep.subr.bf16.mxu0 0
      %917 = vmatpush2.bf16.msra.mxu0 %v858
      %918 = vmatprep.subr.bf16.mxu0 0
      %919 = vmatpush2.bf16.msra.mxu0 %v857
      %920 = vmatprep.subr.bf16.mxu0 0
      %921 = vmatpush2.bf16.msra.mxu0 %v856
      %922 = vmatprep.subr.bf16.mxu0 0
      %923 = vmatpush2.bf16.msra.mxu0 %v855
      %924 = vmatprep.subr.bf16.mxu0 0
      %925 = vmatpush2.bf16.msra.mxu0 %v854
      %926 = vmatprep.mubr.bf16.mxu0 %v411
      %927 = vmatmul.mubr.bf16.gmra.mxu0 %v559
      %v928 = vpop.f32.mrf.mxu0
      %v929 = vadd.f32 0.0, %v928
      %v930 = vpop.f32.mrf.mxu0
      %v931 = vpop.f32.mrf.mxu0
      %v932 = vadd.f32 0.0, %v931
      %v933 = vpop.f32.mrf.mxu0
      %934 = vmatprep.mubr.bf16.mxu0 %v412
      %935 = vmatmul.mubr.bf16.gmra.mxu0 %v560
      %v936 = vpop.f32.mrf.mxu0
      %v937 = vadd.f32 0.0, %v936
      %v938 = vpop.f32.mrf.mxu0
      %v939 = vpop.f32.mrf.mxu0
      %v940 = vadd.f32 0.0, %v939
      %v941 = vpop.f32.mrf.mxu0
      %942 = vmatprep.mubr.bf16.mxu0 %v413
      %943 = vmatmul.mubr.bf16.gmra.mxu0 %v561
      %v944 = vpop.f32.mrf.mxu0
      %v945 = vadd.f32 0.0, %v944
      %v946 = vpop.f32.mrf.mxu0
      %v947 = vpop.f32.mrf.mxu0
      %v948 = vadd.f32 0.0, %v947
      %v949 = vpop.f32.mrf.mxu0
      %950 = vmatprep.mubr.bf16.mxu0 %v414
      %951 = vmatmul.mubr.bf16.gmra.mxu0 %v562
      %v952 = vpop.f32.mrf.mxu0
      %v953 = vadd.f32 0.0, %v952
      %v954 = vpop.f32.mrf.mxu0
      %v955 = vpop.f32.mrf.mxu0
      %v956 = vadd.f32 0.0, %v955
      %v957 = vpop.f32.mrf.mxu0
      %958 = vmatprep.mubr.bf16.mxu0 %v415
      %959 = vmatmul.mubr.bf16.gmra.mxu0 %v563
      %v960 = vpop.f32.mrf.mxu0
      %v961 = vadd.f32 0.0, %v960
      %v962 = vpop.f32.mrf.mxu0
      %v963 = vpop.f32.mrf.mxu0
      %v964 = vadd.f32 0.0, %v963
      %v965 = vpop.f32.mrf.mxu0
      %966 = vmatprep.mubr.bf16.mxu0 %v416
      %967 = vmatmul.mubr.bf16.gmra.mxu0 %v564
      %v968 = vpop.f32.mrf.mxu0
      %v969 = vadd.f32 0.0, %v968
      %v970 = vpop.f32.mrf.mxu0
      %v971 = vpop.f32.mrf.mxu0
      %v972 = vadd.f32 0.0, %v971
      %v973 = vpop.f32.mrf.mxu0
      %974 = vmatprep.mubr.bf16.mxu0 %v417
      %975 = vmatmul.mubr.bf16.gmra.mxu0 %v565
      %v976 = vpop.f32.mrf.mxu0
      %v977 = vadd.f32 0.0, %v976
      %v978 = vpop.f32.mrf.mxu0
      %v979 = vpop.f32.mrf.mxu0
      %v980 = vadd.f32 0.0, %v979
      %v981 = vpop.f32.mrf.mxu0
      %982 = vmatprep.mubr.bf16.mxu0 %v418
      %983 = vmatmul.mubr.bf16.gmra.mxu0 %v566
      %v984 = vpop.f32.mrf.mxu0
      %v985 = vadd.f32 0.0, %v984
      %v986 = vpop.f32.mrf.mxu0
      %v987 = vpop.f32.mrf.mxu0
      %v988 = vadd.f32 0.0, %v987
      %v989 = vpop.f32.mrf.mxu0
      %990 = vmatprep.mubr.bf16.mxu0 %v419
      %991 = vmatmul.mubr.bf16.gmra.mxu0 %v567
      %v992 = vpop.f32.mrf.mxu0
      %v993 = vadd.f32 0.0, %v992
      %v994 = vpop.f32.mrf.mxu0
      %v995 = vpop.f32.mrf.mxu0
      %v996 = vadd.f32 0.0, %v995
      %v997 = vpop.f32.mrf.mxu0
      %998 = vmatprep.mubr.bf16.mxu0 %v420
      %999 = vmatmul.mubr.bf16.gmra.mxu0 %v568
      %v1000 = vpop.f32.mrf.mxu0
      %v1001 = vadd.f32 0.0, %v1000
      %v1002 = vpop.f32.mrf.mxu0
      %v1003 = vpop.f32.mrf.mxu0
      %v1004 = vadd.f32 0.0, %v1003
      %v1005 = vpop.f32.mrf.mxu0
      %1006 = vmatprep.mubr.bf16.mxu0 %v421
      %1007 = vmatmul.mubr.bf16.gmra.mxu0 %v569
      %v1008 = vpop.f32.mrf.mxu0
      %v1009 = vadd.f32 0.0, %v1008
      %v1010 = vpop.f32.mrf.mxu0
      %v1011 = vpop.f32.mrf.mxu0
      %v1012 = vadd.f32 0.0, %v1011
      %v1013 = vpop.f32.mrf.mxu0
      %1014 = vmatprep.mubr.bf16.mxu0 %v422
      %1015 = vmatmul.mubr.bf16.gmra.mxu0 %v570
      %v1016 = vpop.f32.mrf.mxu0
      %v1017 = vadd.f32 0.0, %v1016
      %v1018 = vpop.f32.mrf.mxu0
      %v1019 = vpop.f32.mrf.mxu0
      %v1020 = vadd.f32 0.0, %v1019
      %v1021 = vpop.f32.mrf.mxu0
      %1022 = vmatprep.mubr.bf16.mxu0 %v423
      %1023 = vmatmul.mubr.bf16.gmra.mxu0 %v571
      %v1024 = vpop.f32.mrf.mxu0
      %v1025 = vadd.f32 0.0, %v1024
      %v1026 = vpop.f32.mrf.mxu0
      %v1027 = vpop.f32.mrf.mxu0
      %v1028 = vadd.f32 0.0, %v1027
      %v1029 = vpop.f32.mrf.mxu0
      %1030 = vmatprep.mubr.bf16.mxu0 %v424
      %1031 = vmatmul.mubr.bf16.gmra.mxu0 %v572
      %v1032 = vpop.f32.mrf.mxu0
      %v1033 = vadd.f32 0.0, %v1032
      %v1034 = vpop.f32.mrf.mxu0
      %v1035 = vpop.f32.mrf.mxu0
      %v1036 = vadd.f32 0.0, %v1035
      %v1037 = vpop.f32.mrf.mxu0
      %1038 = vmatprep.mubr.bf16.mxu0 %v425
      %1039 = vmatmul.mubr.bf16.gmra.mxu0 %v573
      %v1040 = vpop.f32.mrf.mxu0
      %v1041 = vadd.f32 0.0, %v1040
      %v1042 = vpop.f32.mrf.mxu0
      %v1043 = vpop.f32.mrf.mxu0
      %v1044 = vadd.f32 0.0, %v1043
      %v1045 = vpop.f32.mrf.mxu0
      %1046 = vmatprep.mubr.bf16.mxu0 %v426
      %1047 = vmatmul.mubr.bf16.gmra.mxu0 %v697
      %v1048 = vpop.f32.mrf.mxu0
      %v1049 = vadd.f32 0.0, %v1048
      %v1050 = vpop.f32.mrf.mxu0
      %v1051 = vpop.f32.mrf.mxu0
      %v1052 = vadd.f32 0.0, %v1051
      %v1053 = vpop.f32.mrf.mxu0
      %1054 = vdwg.mxu0
      %1055 = vmatprep.subr.bf16.mxu0 0
      %1056 = vmatpush1.bf16.msra.mxu0 %v869
      %1057 = vmatprep.subr.bf16.mxu0 0
      %1058 = vmatpush1.bf16.msra.mxu0 %v868
      %1059 = vmatprep.subr.bf16.mxu0 0
      %1060 = vmatpush1.bf16.msra.mxu0 %v867
      %1061 = vmatprep.subr.bf16.mxu0 0
      %1062 = vmatpush1.bf16.msra.mxu0 %v866
      %1063 = vmatprep.subr.bf16.mxu0 0
      %1064 = vmatpush1.bf16.msra.mxu0 %v865
      %1065 = vmatprep.subr.bf16.mxu0 0
      %1066 = vmatpush1.bf16.msra.mxu0 %v864
      %1067 = vmatprep.subr.bf16.mxu0 0
      %1068 = vmatpush1.bf16.msra.mxu0 %v863
      %1069 = vmatprep.subr.bf16.mxu0 0
      %1070 = vmatpush1.bf16.msra.mxu0 %v862
      %1071 = vmatprep.subr.bf16.mxu0 0
      %1072 = vmatpush2.bf16.msra.mxu0 0
      %1073 = vmatprep.subr.bf16.mxu0 0
      %1074 = vmatpush2.bf16.msra.mxu0 0
      %1075 = vmatprep.subr.bf16.mxu0 0
      %1076 = vmatpush2.bf16.msra.mxu0 0
      %1077 = vmatprep.subr.bf16.mxu0 0
      %1078 = vmatpush2.bf16.msra.mxu0 0
      %1079 = vmatprep.subr.bf16.mxu0 0
      %1080 = vmatpush2.bf16.msra.mxu0 0
      %1081 = vmatprep.subr.bf16.mxu0 0
      %1082 = vmatpush2.bf16.msra.mxu0 0
      %1083 = vmatprep.subr.bf16.mxu0 0
      %1084 = vmatpush2.bf16.msra.mxu0 0
      %1085 = vmatprep.subr.bf16.mxu0 0
      %1086 = vmatpush2.bf16.msra.mxu0 0
      %1087 = vmatprep.mubr.bf16.mxu0 0
      %1088 = vmatmul.mubr.bf16.gmra.mxu0 %v626
      %v1089 = vpop.f32.mrf.mxu0
      %v1090 = vadd.f32 %v929, %v1089
      %v1091 = vpop.f32.mrf.mxu0
      %v1092 = vpop.f32.mrf.mxu0
      %v1093 = vadd.f32 %v932, %v1092
      %v1094 = vpop.f32.mrf.mxu0
      %1095 = vmatprep.mubr.bf16.mxu0 0
      %1096 = vmatmul.mubr.bf16.gmra.mxu0 %v627
      %v1097 = vpop.f32.mrf.mxu0
      %v1098 = vadd.f32 %v937, %v1097
      %v1099 = vpop.f32.mrf.mxu0
      %v1100 = vpop.f32.mrf.mxu0
      %v1101 = vadd.f32 %v940, %v1100
      %v1102 = vpop.f32.mrf.mxu0
      %1103 = vmatprep.mubr.bf16.mxu0 0
      %1104 = vmatmul.mubr.bf16.gmra.mxu0 %v628
      %v1105 = vpop.f32.mrf.mxu0
      %v1106 = vadd.f32 %v945, %v1105
      %v1107 = vpop.f32.mrf.mxu0
      %v1108 = vpop.f32.mrf.mxu0
      %v1109 = vadd.f32 %v948, %v1108
      %v1110 = vpop.f32.mrf.mxu0
      %1111 = vmatprep.mubr.bf16.mxu0 0
      %1112 = vmatmul.mubr.bf16.gmra.mxu0 %v629
      %v1113 = vpop.f32.mrf.mxu0
      %v1114 = vadd.f32 %v953, %v1113
      %v1115 = vpop.f32.mrf.mxu0
      %v1116 = vpop.f32.mrf.mxu0
      %v1117 = vadd.f32 %v956, %v1116
      %v1118 = vpop.f32.mrf.mxu0
      %1119 = vmatprep.mubr.bf16.mxu0 0
      %1120 = vmatmul.mubr.bf16.gmra.mxu0 %v630
      %v1121 = vpop.f32.mrf.mxu0
      %v1122 = vadd.f32 %v961, %v1121
      %v1123 = vpop.f32.mrf.mxu0
      %v1124 = vpop.f32.mrf.mxu0
      %v1125 = vadd.f32 %v964, %v1124
      %v1126 = vpop.f32.mrf.mxu0
      %1127 = vmatprep.mubr.bf16.mxu0 0
      %1128 = vmatmul.mubr.bf16.gmra.mxu0 %v631
      %v1129 = vpop.f32.mrf.mxu0
      %v1130 = vadd.f32 %v969, %v1129
      %v1131 = vpop.f32.mrf.mxu0
      %v1132 = vpop.f32.mrf.mxu0
      %v1133 = vadd.f32 %v972, %v1132
      %v1134 = vpop.f32.mrf.mxu0
      %1135 = vmatprep.mubr.bf16.mxu0 0
      %1136 = vmatmul.mubr.bf16.gmra.mxu0 %v632
      %v1137 = vpop.f32.mrf.mxu0
      %v1138 = vadd.f32 %v977, %v1137
      %v1139 = vpop.f32.mrf.mxu0
      %v1140 = vpop.f32.mrf.mxu0
      %v1141 = vadd.f32 %v980, %v1140
      %v1142 = vpop.f32.mrf.mxu0
      %1143 = vmatprep.mubr.bf16.mxu0 0
      %1144 = vmatmul.mubr.bf16.gmra.mxu0 %v633
      %v1145 = vpop.f32.mrf.mxu0
      %v1146 = vadd.f32 %v985, %v1145
      %v1147 = vpop.f32.mrf.mxu0
      %v1148 = vpop.f32.mrf.mxu0
      %v1149 = vadd.f32 %v988, %v1148
      %v1150 = vpop.f32.mrf.mxu0
      %1151 = vmatprep.mubr.bf16.mxu0 0
      %1152 = vmatmul.mubr.bf16.gmra.mxu0 %v634
      %v1153 = vpop.f32.mrf.mxu0
      %v1154 = vadd.f32 %v993, %v1153
      %v1155 = vpop.f32.mrf.mxu0
      %v1156 = vpop.f32.mrf.mxu0
      %v1157 = vadd.f32 %v996, %v1156
      %v1158 = vpop.f32.mrf.mxu0
      %1159 = vmatprep.mubr.bf16.mxu0 0
      %1160 = vmatmul.mubr.bf16.gmra.mxu0 %v635
      %v1161 = vpop.f32.mrf.mxu0
      %v1162 = vadd.f32 %v1001, %v1161
      %v1163 = vpop.f32.mrf.mxu0
      %v1164 = vpop.f32.mrf.mxu0
      %v1165 = vadd.f32 %v1004, %v1164
      %v1166 = vpop.f32.mrf.mxu0
      %1167 = vmatprep.mubr.bf16.mxu0 0
      %1168 = vmatmul.mubr.bf16.gmra.mxu0 %v636
      %v1169 = vpop.f32.mrf.mxu0
      %v1170 = vadd.f32 %v1009, %v1169
      %v1171 = vpop.f32.mrf.mxu0
      %v1172 = vpop.f32.mrf.mxu0
      %v1173 = vadd.f32 %v1012, %v1172
      %v1174 = vpop.f32.mrf.mxu0
      %1175 = vmatprep.mubr.bf16.mxu0 0
      %1176 = vmatmul.mubr.bf16.gmra.mxu0 %v637
      %v1177 = vpop.f32.mrf.mxu0
      %v1178 = vadd.f32 %v1017, %v1177
      %v1179 = vpop.f32.mrf.mxu0
      %v1180 = vpop.f32.mrf.mxu0
      %v1181 = vadd.f32 %v1020, %v1180
      %v1182 = vpop.f32.mrf.mxu0
      %1183 = vmatprep.mubr.bf16.mxu0 0
      %1184 = vmatmul.mubr.bf16.gmra.mxu0 %v638
      %v1185 = vpop.f32.mrf.mxu0
      %v1186 = vadd.f32 %v1025, %v1185
      %v1187 = vpop.f32.mrf.mxu0
      %v1188 = vpop.f32.mrf.mxu0
      %v1189 = vadd.f32 %v1028, %v1188
      %v1190 = vpop.f32.mrf.mxu0
      %1191 = vmatprep.mubr.bf16.mxu0 0
      %1192 = vmatmul.mubr.bf16.gmra.mxu0 %v639
      %v1193 = vpop.f32.mrf.mxu0
      %v1194 = vadd.f32 %v1033, %v1193
      %v1195 = vpop.f32.mrf.mxu0
      %v1196 = vpop.f32.mrf.mxu0
      %v1197 = vadd.f32 %v1036, %v1196
      %v1198 = vpop.f32.mrf.mxu0
      %1199 = vmatprep.mubr.bf16.mxu0 0
      %1200 = vmatmul.mubr.bf16.gmra.mxu0 %v640
      %v1201 = vpop.f32.mrf.mxu0
      %v1202 = vadd.f32 %v1041, %v1201
      %v1203 = vpop.f32.mrf.mxu0
      %v1204 = vpop.f32.mrf.mxu0
      %v1205 = vadd.f32 %v1044, %v1204
      %v1206 = vpop.f32.mrf.mxu0
      %1207 = vmatprep.mubr.bf16.mxu0 0
      %1208 = vmatmul.mubr.bf16.gmra.mxu0 %v701
      %v1209 = vpop.f32.mrf.mxu0
      %v1210 = vadd.f32 %v1049, %v1209
      %v1211 = vpop.f32.mrf.mxu0
      %v1212 = vpop.f32.mrf.mxu0
      %v1213 = vadd.f32 %v1052, %v1212
      %v1214 = vpop.f32.mrf.mxu0
      %1215 = vdwg.mxu0
      %v1264 = vunpack.c.l.b16 %v641
      %v1265 = vunpack.c.l.b16 %v642
      %v1266 = vunpack.c.l.b16 %v643
      %v1267 = vunpack.c.l.b16 %v644
      %v1268 = vunpack.c.l.b16 %v645
      %v1269 = vunpack.c.l.b16 %v646
      %v1270 = vunpack.c.l.b16 %v647
      %v1271 = vunpack.c.l.b16 %v648
      %v1272 = vunpack.c.l.b16 %v649
      %v1273 = vunpack.c.l.b16 %v650
      %v1274 = vunpack.c.l.b16 %v651
      %v1275 = vunpack.c.l.b16 %v652
      %v1276 = vunpack.c.l.b16 %v653
      %v1277 = vunpack.c.l.b16 %v654
      %v1278 = vunpack.c.l.b16 %v655
      %v1279 = vunpack.c.l.b16 %v656
      %v1280 = vunpack.c.l.b16 %v657
      %v1281 = vunpack.c.l.b16 %v658
      %v1282 = vunpack.c.l.b16 %v659
      %v1283 = vunpack.c.l.b16 %v660
      %v1284 = vunpack.c.l.b16 %v661
      %v1285 = vunpack.c.l.b16 %v662
      %v1286 = vunpack.c.l.b16 %v663
      %v1287 = vunpack.c.l.b16 %v664
      %v1288 = vunpack.c.l.b16 %v665
      %v1289 = vunpack.c.l.b16 %v666
      %v1290 = vunpack.c.l.b16 %v667
      %v1291 = vunpack.c.l.b16 %v668
      %v1292 = vunpack.c.l.b16 %v669
      %v1293 = vunpack.c.l.b16 %v670
      %v1294 = vunpack.c.l.b16 %v671
      %v1295 = vunpack.c.l.b16 %v672
      %v1296 = vunpack.c.l.b16 %v673
      %v1297 = vunpack.c.l.b16 %v674
      %v1298 = vunpack.c.l.b16 %v675
      %v1299 = vunpack.c.l.b16 %v676
      %v1300 = vunpack.c.l.b16 %v677
      %v1301 = vunpack.c.l.b16 %v678
      %v1302 = vunpack.c.l.b16 %v679
      %v1303 = vunpack.c.l.b16 %v680
      %v1304 = vunpack.c.l.b16 %v681
      %v1305 = vunpack.c.l.b16 %v682
      %v1306 = vunpack.c.l.b16 %v683
      %v1307 = vunpack.c.l.b16 %v684
      %v1308 = vunpack.c.l.b16 %v685
      %v1309 = vunpack.c.l.b16 %v686
      %v1310 = vunpack.c.l.b16 %v687
      %v1311 = vunpack.c.l.b16 %v688
      %v1312 = vpack.c.b16 %v1265, %v1264
      %v1313 = vpack.c.b16 %v1267, %v1266
      %v1314 = vpack.c.b16 %v1269, %v1268
      %v1315 = vpack.c.b16 %v1271, %v1270
      %v1316 = vpack.c.b16 %v1273, %v1272
      %v1317 = vpack.c.b16 %v1275, %v1274
      %v1318 = vpack.c.b16 %v1277, %v1276
      %v1319 = vpack.c.b16 %v1279, %v1278
      %v1320 = vpack.c.b16 %v1281, %v1280
      %v1321 = vpack.c.b16 %v1283, %v1282
      %v1322 = vpack.c.b16 %v1285, %v1284
      %v1323 = vpack.c.b16 %v1287, %v1286
      %v1324 = vpack.c.b16 %v1289, %v1288
      %v1325 = vpack.c.b16 %v1291, %v1290
      %v1326 = vpack.c.b16 %v1293, %v1292
      %v1327 = vpack.c.b16 %v1295, %v1294
      %v1328 = vpack.c.b16 %v1297, %v1296
      %v1329 = vpack.c.b16 %v1299, %v1298
      %v1330 = vpack.c.b16 %v1301, %v1300
      %v1331 = vpack.c.b16 %v1303, %v1302
      %v1332 = vpack.c.b16 %v1305, %v1304
      %v1333 = vpack.c.b16 %v1307, %v1306
      %v1334 = vpack.c.b16 %v1309, %v1308
      %v1335 = vpack.c.b16 %v1311, %v1310
      %1360 = vmatprep.subr.bf16.mxu0 0
      %1361 = vmatpush1.bf16.msra.mxu0 %v1319
      %1362 = vmatprep.subr.bf16.mxu0 0
      %1363 = vmatpush1.bf16.msra.mxu0 %v1318
      %1364 = vmatprep.subr.bf16.mxu0 0
      %1365 = vmatpush1.bf16.msra.mxu0 %v1317
      %1366 = vmatprep.subr.bf16.mxu0 0
      %1367 = vmatpush1.bf16.msra.mxu0 %v1316
      %1368 = vmatprep.subr.bf16.mxu0 0
      %1369 = vmatpush1.bf16.msra.mxu0 %v1315
      %1370 = vmatprep.subr.bf16.mxu0 0
      %1371 = vmatpush1.bf16.msra.mxu0 %v1314
      %1372 = vmatprep.subr.bf16.mxu0 0
      %1373 = vmatpush1.bf16.msra.mxu0 %v1313
      %1374 = vmatprep.subr.bf16.mxu0 0
      %1375 = vmatpush1.bf16.msra.mxu0 %v1312
      %1376 = vmatprep.subr.bf16.mxu0 0
      %1377 = vmatpush2.bf16.msra.mxu0 %v1327
      %1378 = vmatprep.subr.bf16.mxu0 0
      %1379 = vmatpush2.bf16.msra.mxu0 %v1326
      %1380 = vmatprep.subr.bf16.mxu0 0
      %1381 = vmatpush2.bf16.msra.mxu0 %v1325
      %1382 = vmatprep.subr.bf16.mxu0 0
      %1383 = vmatpush2.bf16.msra.mxu0 %v1324
      %1384 = vmatprep.subr.bf16.mxu0 0
      %1385 = vmatpush2.bf16.msra.mxu0 %v1323
      %1386 = vmatprep.subr.bf16.mxu0 0
      %1387 = vmatpush2.bf16.msra.mxu0 %v1322
      %1388 = vmatprep.subr.bf16.mxu0 0
      %1389 = vmatpush2.bf16.msra.mxu0 %v1321
      %1390 = vmatprep.subr.bf16.mxu0 0
      %1391 = vmatpush2.bf16.msra.mxu0 %v1320
      %1392 = vmatprep.mubr.bf16.mxu0 0
      %1393 = vmatmul.mubr.bf16.gmra.mxu0 %v558
      %v1394 = vpop.f32.mrf.mxu0
      %v1395 = vadd.f32 %v1090, %v1394
      %v1396 = vpop.f32.mrf.mxu0
      %v1397 = vpop.f32.mrf.mxu0
      %v1398 = vadd.f32 %v1093, %v1397
      %v1399 = vpop.f32.mrf.mxu0
      %1400 = vmatprep.mubr.bf16.mxu0 %v411
      %1401 = vmatmul.mubr.bf16.gmra.mxu0 %v559
      %v1402 = vpop.f32.mrf.mxu0
      %v1403 = vadd.f32 %v1098, %v1402
      %v1404 = vpop.f32.mrf.mxu0
      %v1405 = vpop.f32.mrf.mxu0
      %v1406 = vadd.f32 %v1101, %v1405
      %v1407 = vpop.f32.mrf.mxu0
      %1408 = vmatprep.mubr.bf16.mxu0 %v412
      %1409 = vmatmul.mubr.bf16.gmra.mxu0 %v560
      %v1410 = vpop.f32.mrf.mxu0
      %v1411 = vadd.f32 %v1106, %v1410
      %v1412 = vpop.f32.mrf.mxu0
      %v1413 = vpop.f32.mrf.mxu0
      %v1414 = vadd.f32 %v1109, %v1413
      %v1415 = vpop.f32.mrf.mxu0
      %1416 = vmatprep.mubr.bf16.mxu0 %v413
      %1417 = vmatmul.mubr.bf16.gmra.mxu0 %v561
      %v1418 = vpop.f32.mrf.mxu0
      %v1419 = vadd.f32 %v1114, %v1418
      %v1420 = vpop.f32.mrf.mxu0
      %v1421 = vpop.f32.mrf.mxu0
      %v1422 = vadd.f32 %v1117, %v1421
      %v1423 = vpop.f32.mrf.mxu0
      %1424 = vmatprep.mubr.bf16.mxu0 %v414
      %1425 = vmatmul.mubr.bf16.gmra.mxu0 %v562
      %v1426 = vpop.f32.mrf.mxu0
      %v1427 = vadd.f32 %v1122, %v1426
      %v1428 = vpop.f32.mrf.mxu0
      %v1429 = vpop.f32.mrf.mxu0
      %v1430 = vadd.f32 %v1125, %v1429
      %v1431 = vpop.f32.mrf.mxu0
      %1432 = vmatprep.mubr.bf16.mxu0 %v415
      %1433 = vmatmul.mubr.bf16.gmra.mxu0 %v563
      %v1434 = vpop.f32.mrf.mxu0
      %v1435 = vadd.f32 %v1130, %v1434
      %v1436 = vpop.f32.mrf.mxu0
      %v1437 = vpop.f32.mrf.mxu0
      %v1438 = vadd.f32 %v1133, %v1437
      %v1439 = vpop.f32.mrf.mxu0
      %1440 = vmatprep.mubr.bf16.mxu0 %v416
      %1441 = vmatmul.mubr.bf16.gmra.mxu0 %v564
      %v1442 = vpop.f32.mrf.mxu0
      %v1443 = vadd.f32 %v1138, %v1442
      %v1444 = vpop.f32.mrf.mxu0
      %v1445 = vpop.f32.mrf.mxu0
      %v1446 = vadd.f32 %v1141, %v1445
      %v1447 = vpop.f32.mrf.mxu0
      %1448 = vmatprep.mubr.bf16.mxu0 %v417
      %1449 = vmatmul.mubr.bf16.gmra.mxu0 %v565
      %v1450 = vpop.f32.mrf.mxu0
      %v1451 = vadd.f32 %v1146, %v1450
      %v1452 = vpop.f32.mrf.mxu0
      %v1453 = vpop.f32.mrf.mxu0
      %v1454 = vadd.f32 %v1149, %v1453
      %v1455 = vpop.f32.mrf.mxu0
      %1456 = vmatprep.mubr.bf16.mxu0 %v418
      %1457 = vmatmul.mubr.bf16.gmra.mxu0 %v566
      %v1458 = vpop.f32.mrf.mxu0
      %v1459 = vadd.f32 %v1154, %v1458
      %v1460 = vpop.f32.mrf.mxu0
      %v1461 = vpop.f32.mrf.mxu0
      %v1462 = vadd.f32 %v1157, %v1461
      %v1463 = vpop.f32.mrf.mxu0
      %1464 = vmatprep.mubr.bf16.mxu0 %v419
      %1465 = vmatmul.mubr.bf16.gmra.mxu0 %v567
      %v1466 = vpop.f32.mrf.mxu0
      %v1467 = vadd.f32 %v1162, %v1466
      %v1468 = vpop.f32.mrf.mxu0
      %v1469 = vpop.f32.mrf.mxu0
      %v1470 = vadd.f32 %v1165, %v1469
      %v1471 = vpop.f32.mrf.mxu0
      %1472 = vmatprep.mubr.bf16.mxu0 %v420
      %1473 = vmatmul.mubr.bf16.gmra.mxu0 %v568
      %v1474 = vpop.f32.mrf.mxu0
      %v1475 = vadd.f32 %v1170, %v1474
      %v1476 = vpop.f32.mrf.mxu0
      %v1477 = vpop.f32.mrf.mxu0
      %v1478 = vadd.f32 %v1173, %v1477
      %v1479 = vpop.f32.mrf.mxu0
      %1480 = vmatprep.mubr.bf16.mxu0 %v421
      %1481 = vmatmul.mubr.bf16.gmra.mxu0 %v569
      %v1482 = vpop.f32.mrf.mxu0
      %v1483 = vadd.f32 %v1178, %v1482
      %v1484 = vpop.f32.mrf.mxu0
      %v1485 = vpop.f32.mrf.mxu0
      %v1486 = vadd.f32 %v1181, %v1485
      %v1487 = vpop.f32.mrf.mxu0
      %1488 = vmatprep.mubr.bf16.mxu0 %v422
      %1489 = vmatmul.mubr.bf16.gmra.mxu0 %v570
      %v1490 = vpop.f32.mrf.mxu0
      %v1491 = vadd.f32 %v1186, %v1490
      %v1492 = vpop.f32.mrf.mxu0
      %v1493 = vpop.f32.mrf.mxu0
      %v1494 = vadd.f32 %v1189, %v1493
      %v1495 = vpop.f32.mrf.mxu0
      %1496 = vmatprep.mubr.bf16.mxu0 %v423
      %1497 = vmatmul.mubr.bf16.gmra.mxu0 %v571
      %v1498 = vpop.f32.mrf.mxu0
      %v1499 = vadd.f32 %v1194, %v1498
      %v1500 = vpop.f32.mrf.mxu0
      %v1501 = vpop.f32.mrf.mxu0
      %v1502 = vadd.f32 %v1197, %v1501
      %v1503 = vpop.f32.mrf.mxu0
      %1504 = vmatprep.mubr.bf16.mxu0 %v424
      %1505 = vmatmul.mubr.bf16.gmra.mxu0 %v572
      %v1506 = vpop.f32.mrf.mxu0
      %v1507 = vadd.f32 %v1202, %v1506
      %v1508 = vpop.f32.mrf.mxu0
      %v1509 = vpop.f32.mrf.mxu0
      %v1510 = vadd.f32 %v1205, %v1509
      %v1511 = vpop.f32.mrf.mxu0
      %1512 = vmatprep.mubr.bf16.mxu0 %v425
      %1513 = vmatmul.mubr.bf16.gmra.mxu0 %v573
      %v1514 = vpop.f32.mrf.mxu0
      %v1515 = vadd.f32 %v1210, %v1514
      %v1516 = vpop.f32.mrf.mxu0
      %v1517 = vpop.f32.mrf.mxu0
      %v1518 = vadd.f32 %v1213, %v1517
      %v1519 = vpop.f32.mrf.mxu0
      %1520 = vdwg.mxu0
      %1521 = vmatprep.subr.bf16.mxu0 0
      %1522 = vmatpush1.bf16.msra.mxu0 %v1335
      %1523 = vmatprep.subr.bf16.mxu0 0
      %1524 = vmatpush1.bf16.msra.mxu0 %v1334
      %1525 = vmatprep.subr.bf16.mxu0 0
      %1526 = vmatpush1.bf16.msra.mxu0 %v1333
      %1527 = vmatprep.subr.bf16.mxu0 0
      %1528 = vmatpush1.bf16.msra.mxu0 %v1332
      %1529 = vmatprep.subr.bf16.mxu0 0
      %1530 = vmatpush1.bf16.msra.mxu0 %v1331
      %1531 = vmatprep.subr.bf16.mxu0 0
      %1532 = vmatpush1.bf16.msra.mxu0 %v1330
      %1533 = vmatprep.subr.bf16.mxu0 0
      %1534 = vmatpush1.bf16.msra.mxu0 %v1329
      %1535 = vmatprep.subr.bf16.mxu0 0
      %1536 = vmatpush1.bf16.msra.mxu0 %v1328
      %1537 = vmatprep.subr.bf16.mxu0 0
      %1538 = vmatpush2.bf16.msra.mxu0 0
      %1539 = vmatprep.subr.bf16.mxu0 0
      %1540 = vmatpush2.bf16.msra.mxu0 0
      %1541 = vmatprep.subr.bf16.mxu0 0
      %1542 = vmatpush2.bf16.msra.mxu0 0
      %1543 = vmatprep.subr.bf16.mxu0 0
      %1544 = vmatpush2.bf16.msra.mxu0 0
      %1545 = vmatprep.subr.bf16.mxu0 0
      %1546 = vmatpush2.bf16.msra.mxu0 0
      %1547 = vmatprep.subr.bf16.mxu0 0
      %1548 = vmatpush2.bf16.msra.mxu0 0
      %1549 = vmatprep.subr.bf16.mxu0 0
      %1550 = vmatpush2.bf16.msra.mxu0 0
      %1551 = vmatprep.subr.bf16.mxu0 0
      %1552 = vmatpush2.bf16.msra.mxu0 0
      %1553 = vmatprep.mubr.bf16.mxu0 0
      %1554 = vmatmul.mubr.bf16.gmra.mxu0 %v625
      %v1555 = vpop.f32.mrf.mxu0
      %v1556 = vadd.f32 %v1395, %v1555
      %v1557 = vpop.f32.mrf.mxu0
      %v1558 = vpop.f32.mrf.mxu0
      %v1559 = vadd.f32 %v1398, %v1558
      %v1560 = vpop.f32.mrf.mxu0
      %1561 = vmatprep.mubr.bf16.mxu0 0
      %1562 = vmatmul.mubr.bf16.gmra.mxu0 %v626
      %v1563 = vpop.f32.mrf.mxu0
      %v1564 = vadd.f32 %v1403, %v1563
      %v1565 = vpop.f32.mrf.mxu0
      %v1566 = vpop.f32.mrf.mxu0
      %v1567 = vadd.f32 %v1406, %v1566
      %v1568 = vpop.f32.mrf.mxu0
      %1569 = vmatprep.mubr.bf16.mxu0 0
      %1570 = vmatmul.mubr.bf16.gmra.mxu0 %v627
      %v1571 = vpop.f32.mrf.mxu0
      %v1572 = vadd.f32 %v1411, %v1571
      %v1573 = vpop.f32.mrf.mxu0
      %v1574 = vpop.f32.mrf.mxu0
      %v1575 = vadd.f32 %v1414, %v1574
      %v1576 = vpop.f32.mrf.mxu0
      %1577 = vmatprep.mubr.bf16.mxu0 0
      %1578 = vmatmul.mubr.bf16.gmra.mxu0 %v628
      %v1579 = vpop.f32.mrf.mxu0
      %v1580 = vadd.f32 %v1419, %v1579
      %v1581 = vpop.f32.mrf.mxu0
      %v1582 = vpop.f32.mrf.mxu0
      %v1583 = vadd.f32 %v1422, %v1582
      %v1584 = vpop.f32.mrf.mxu0
      %1585 = vmatprep.mubr.bf16.mxu0 0
      %1586 = vmatmul.mubr.bf16.gmra.mxu0 %v629
      %v1587 = vpop.f32.mrf.mxu0
      %v1588 = vadd.f32 %v1427, %v1587
      %v1589 = vpop.f32.mrf.mxu0
      %v1590 = vpop.f32.mrf.mxu0
      %v1591 = vadd.f32 %v1430, %v1590
      %v1592 = vpop.f32.mrf.mxu0
      %1593 = vmatprep.mubr.bf16.mxu0 0
      %1594 = vmatmul.mubr.bf16.gmra.mxu0 %v630
      %v1595 = vpop.f32.mrf.mxu0
      %v1596 = vadd.f32 %v1435, %v1595
      %v1597 = vpop.f32.mrf.mxu0
      %v1598 = vpop.f32.mrf.mxu0
      %v1599 = vadd.f32 %v1438, %v1598
      %v1600 = vpop.f32.mrf.mxu0
      %1601 = vmatprep.mubr.bf16.mxu0 0
      %1602 = vmatmul.mubr.bf16.gmra.mxu0 %v631
      %v1603 = vpop.f32.mrf.mxu0
      %v1604 = vadd.f32 %v1443, %v1603
      %v1605 = vpop.f32.mrf.mxu0
      %v1606 = vpop.f32.mrf.mxu0
      %v1607 = vadd.f32 %v1446, %v1606
      %v1608 = vpop.f32.mrf.mxu0
      %1609 = vmatprep.mubr.bf16.mxu0 0
      %1610 = vmatmul.mubr.bf16.gmra.mxu0 %v632
      %v1611 = vpop.f32.mrf.mxu0
      %v1612 = vadd.f32 %v1451, %v1611
      %v1613 = vpop.f32.mrf.mxu0
      %v1614 = vpop.f32.mrf.mxu0
      %v1615 = vadd.f32 %v1454, %v1614
      %v1616 = vpop.f32.mrf.mxu0
      %1617 = vmatprep.mubr.bf16.mxu0 0
      %1618 = vmatmul.mubr.bf16.gmra.mxu0 %v633
      %v1619 = vpop.f32.mrf.mxu0
      %v1620 = vadd.f32 %v1459, %v1619
      %v1621 = vpop.f32.mrf.mxu0
      %v1622 = vpop.f32.mrf.mxu0
      %v1623 = vadd.f32 %v1462, %v1622
      %v1624 = vpop.f32.mrf.mxu0
      %1625 = vmatprep.mubr.bf16.mxu0 0
      %1626 = vmatmul.mubr.bf16.gmra.mxu0 %v634
      %v1627 = vpop.f32.mrf.mxu0
      %v1628 = vadd.f32 %v1467, %v1627
      %v1629 = vpop.f32.mrf.mxu0
      %v1630 = vpop.f32.mrf.mxu0
      %v1631 = vadd.f32 %v1470, %v1630
      %v1632 = vpop.f32.mrf.mxu0
      %1633 = vmatprep.mubr.bf16.mxu0 0
      %1634 = vmatmul.mubr.bf16.gmra.mxu0 %v635
      %v1635 = vpop.f32.mrf.mxu0
      %v1636 = vadd.f32 %v1475, %v1635
      %v1637 = vpop.f32.mrf.mxu0
      %v1638 = vpop.f32.mrf.mxu0
      %v1639 = vadd.f32 %v1478, %v1638
      %v1640 = vpop.f32.mrf.mxu0
      %1641 = vmatprep.mubr.bf16.mxu0 0
      %1642 = vmatmul.mubr.bf16.gmra.mxu0 %v636
      %v1643 = vpop.f32.mrf.mxu0
      %v1644 = vadd.f32 %v1483, %v1643
      %v1645 = vpop.f32.mrf.mxu0
      %v1646 = vpop.f32.mrf.mxu0
      %v1647 = vadd.f32 %v1486, %v1646
      %v1648 = vpop.f32.mrf.mxu0
      %1649 = vmatprep.mubr.bf16.mxu0 0
      %1650 = vmatmul.mubr.bf16.gmra.mxu0 %v637
      %v1651 = vpop.f32.mrf.mxu0
      %v1652 = vadd.f32 %v1491, %v1651
      %v1653 = vpop.f32.mrf.mxu0
      %v1654 = vpop.f32.mrf.mxu0
      %v1655 = vadd.f32 %v1494, %v1654
      %v1656 = vpop.f32.mrf.mxu0
      %1657 = vmatprep.mubr.bf16.mxu0 0
      %1658 = vmatmul.mubr.bf16.gmra.mxu0 %v638
      %v1659 = vpop.f32.mrf.mxu0
      %v1660 = vadd.f32 %v1499, %v1659
      %v1661 = vpop.f32.mrf.mxu0
      %v1662 = vpop.f32.mrf.mxu0
      %v1663 = vadd.f32 %v1502, %v1662
      %v1664 = vpop.f32.mrf.mxu0
      %1665 = vmatprep.mubr.bf16.mxu0 0
      %1666 = vmatmul.mubr.bf16.gmra.mxu0 %v639
      %v1667 = vpop.f32.mrf.mxu0
      %v1668 = vadd.f32 %v1507, %v1667
      %v1669 = vpop.f32.mrf.mxu0
      %v1670 = vpop.f32.mrf.mxu0
      %v1671 = vadd.f32 %v1510, %v1670
      %v1672 = vpop.f32.mrf.mxu0
      %1673 = vmatprep.mubr.bf16.mxu0 0
      %1674 = vmatmul.mubr.bf16.gmra.mxu0 %v640
      %v1675 = vpop.f32.mrf.mxu0
      %v1676 = vadd.f32 %v1515, %v1675
      %v1677 = vpop.f32.mrf.mxu0
      %v1678 = vpop.f32.mrf.mxu0
      %v1679 = vadd.f32 %v1518, %v1678
      %v1680 = vpop.f32.mrf.mxu0
      %1681 = vdwg.mxu0
      %v1682 = vld [vmem:[%s3 + $0x180] sm:$0xf]
      %v1683 = vld [vmem:[%s3 + $0x184] sm:$0xf]
      %v1684 = vld [vmem:[%s3 + $0x188] sm:$0xf]
      %v1685 = vld [vmem:[%s3 + $0x18c] sm:$0xf]
      %v1686 = vld [vmem:[%s3 + $0x190] sm:$0xf]
      %v1687 = vld [vmem:[%s3 + $0x194] sm:$0xf]
      %v1688 = vld [vmem:[%s3 + $0x198] sm:$0xf]
      %v1689 = vld [vmem:[%s3 + $0x19c] sm:$0xf]
      %v1690 = vld [vmem:[%s3 + $0x1a0] sm:$0xf]
      %v1691 = vld [vmem:[%s3 + $0x1a4] sm:$0xf]
      %v1692 = vld [vmem:[%s3 + $0x1a8] sm:$0xf]
      %v1693 = vld [vmem:[%s3 + $0x1ac] sm:$0xf]
      %v1694 = vld [vmem:[%s3 + $0x1b0] sm:$0xf]
      %v1695 = vld [vmem:[%s3 + $0x1b4] sm:$0xf]
      %v1696 = vld [vmem:[%s3 + $0x1b8] sm:$0xf]
      %v1697 = vld [vmem:[%s3 + $0x1bc] sm:$0xf]
      %v1698 = vld [vmem:[%s3 + $0x1c0] sm:$0xf]
      %v1699 = vld [vmem:[%s3 + $0x1c4] sm:$0xf]
      %v1700 = vld [vmem:[%s3 + $0x1c8] sm:$0xf]
      %v1701 = vld [vmem:[%s3 + $0x1cc] sm:$0xf]
      %v1702 = vld [vmem:[%s3 + $0x1d0] sm:$0xf]
      %v1703 = vld [vmem:[%s3 + $0x1d4] sm:$0xf]
      %v1704 = vld [vmem:[%s3 + $0x1d8] sm:$0xf]
      %v1705 = vld [vmem:[%s3 + $0x1dc] sm:$0xf]
      %v1706 = vld [vmem:[%s3 + $0x1e0] sm:$0xf]
      %v1707 = vld [vmem:[%s3 + $0x1e4] sm:$0xf]
      %v1708 = vld [vmem:[%s3 + $0x1e8] sm:$0xf]
      %v1709 = vld [vmem:[%s3 + $0x1ec] sm:$0xf]
      %v1710 = vld [vmem:[%s3 + $0x1f0] sm:$0xf]
      %v1711 = vld [vmem:[%s3 + $0x1f4] sm:$0xf]
      %v1712 = vld [vmem:[%s3 + $0x1f8] sm:$0xf]
      %v1713 = vld [vmem:[%s3 + $0x1fc] sm:$0xf]
      %v1714 = vld [vmem:[%s3 + $0x200] sm:$0xf]
      %v1715 = vld [vmem:[%s3 + $0x204] sm:$0xf]
      %v1716 = vld [vmem:[%s3 + $0x208] sm:$0xf]
      %v1717 = vld [vmem:[%s3 + $0x20c] sm:$0xf]
      %v1718 = vld [vmem:[%s3 + $0x210] sm:$0xf]
      %v1719 = vld [vmem:[%s3 + $0x214] sm:$0xf]
      %v1720 = vld [vmem:[%s3 + $0x218] sm:$0xf]
      %v1721 = vld [vmem:[%s3 + $0x21c] sm:$0xf]
      %v1722 = vld [vmem:[%s3 + $0x220] sm:$0xf]
      %v1723 = vld [vmem:[%s3 + $0x224] sm:$0xf]
      %v1724 = vld [vmem:[%s3 + $0x228] sm:$0xf]
      %v1725 = vld [vmem:[%s3 + $0x22c] sm:$0xf]
      %v1726 = vld [vmem:[%s3 + $0x230] sm:$0xf]
      %v1727 = vld [vmem:[%s3 + $0x234] sm:$0xf]
      %v1728 = vld [vmem:[%s3 + $0x238] sm:$0xf]
      %v1729 = vld [vmem:[%s3 + $0x23c] sm:$0xf]
      %v1778 = vunpack.c.l.b16 %v1682
      %v1779 = vunpack.c.l.b16 %v1683
      %v1780 = vunpack.c.l.b16 %v1684
      %v1781 = vunpack.c.l.b16 %v1685
      %v1782 = vunpack.c.l.b16 %v1686
      %v1783 = vunpack.c.l.b16 %v1687
      %v1784 = vunpack.c.l.b16 %v1688
      %v1785 = vunpack.c.l.b16 %v1689
      %v1786 = vunpack.c.l.b16 %v1690
      %v1787 = vunpack.c.l.b16 %v1691
      %v1788 = vunpack.c.l.b16 %v1692
      %v1789 = vunpack.c.l.b16 %v1693
      %v1790 = vunpack.c.l.b16 %v1694
      %v1791 = vunpack.c.l.b16 %v1695
      %v1792 = vunpack.c.l.b16 %v1696
      %v1793 = vunpack.c.l.b16 %v1697
      %v1794 = vunpack.c.l.b16 %v1698
      %v1795 = vunpack.c.l.b16 %v1699
      %v1796 = vunpack.c.l.b16 %v1700
      %v1797 = vunpack.c.l.b16 %v1701
      %v1798 = vunpack.c.l.b16 %v1702
      %v1799 = vunpack.c.l.b16 %v1703
      %v1800 = vunpack.c.l.b16 %v1704
      %v1801 = vunpack.c.l.b16 %v1705
      %v1802 = vunpack.c.l.b16 %v1706
      %v1803 = vunpack.c.l.b16 %v1707
      %v1804 = vunpack.c.l.b16 %v1708
      %v1805 = vunpack.c.l.b16 %v1709
      %v1806 = vunpack.c.l.b16 %v1710
      %v1807 = vunpack.c.l.b16 %v1711
      %v1808 = vunpack.c.l.b16 %v1712
      %v1809 = vunpack.c.l.b16 %v1713
      %v1810 = vunpack.c.l.b16 %v1714
      %v1811 = vunpack.c.l.b16 %v1715
      %v1812 = vunpack.c.l.b16 %v1716
      %v1813 = vunpack.c.l.b16 %v1717
      %v1814 = vunpack.c.l.b16 %v1718
      %v1815 = vunpack.c.l.b16 %v1719
      %v1816 = vunpack.c.l.b16 %v1720
      %v1817 = vunpack.c.l.b16 %v1721
      %v1818 = vunpack.c.l.b16 %v1722
      %v1819 = vunpack.c.l.b16 %v1723
      %v1820 = vunpack.c.l.b16 %v1724
      %v1821 = vunpack.c.l.b16 %v1725
      %v1822 = vunpack.c.l.b16 %v1726
      %v1823 = vunpack.c.l.b16 %v1727
      %v1824 = vunpack.c.l.b16 %v1728
      %v1825 = vunpack.c.l.b16 %v1729
      %v1826 = vpack.c.b16 %v1779, %v1778
      %v1827 = vpack.c.b16 %v1781, %v1780
      %v1828 = vpack.c.b16 %v1783, %v1782
      %v1829 = vpack.c.b16 %v1785, %v1784
      %v1830 = vpack.c.b16 %v1787, %v1786
      %v1831 = vpack.c.b16 %v1789, %v1788
      %v1832 = vpack.c.b16 %v1791, %v1790
      %v1833 = vpack.c.b16 %v1793, %v1792
      %v1834 = vpack.c.b16 %v1795, %v1794
      %v1835 = vpack.c.b16 %v1797, %v1796
      %v1836 = vpack.c.b16 %v1799, %v1798
      %v1837 = vpack.c.b16 %v1801, %v1800
      %v1838 = vpack.c.b16 %v1803, %v1802
      %v1839 = vpack.c.b16 %v1805, %v1804
      %v1840 = vpack.c.b16 %v1807, %v1806
      %v1841 = vpack.c.b16 %v1809, %v1808
      %v1842 = vpack.c.b16 %v1811, %v1810
      %v1843 = vpack.c.b16 %v1813, %v1812
      %v1844 = vpack.c.b16 %v1815, %v1814
      %v1845 = vpack.c.b16 %v1817, %v1816
      %v1846 = vpack.c.b16 %v1819, %v1818
      %v1847 = vpack.c.b16 %v1821, %v1820
      %v1848 = vpack.c.b16 %v1823, %v1822
      %v1849 = vpack.c.b16 %v1825, %v1824
      %1874 = vmatprep.subr.bf16.mxu0 0
      %1875 = vmatpush1.bf16.msra.mxu0 %v1833
      %1876 = vmatprep.subr.bf16.mxu0 0
      %1877 = vmatpush1.bf16.msra.mxu0 %v1832
      %1878 = vmatprep.subr.bf16.mxu0 0
      %1879 = vmatpush1.bf16.msra.mxu0 %v1831
      %1880 = vmatprep.subr.bf16.mxu0 0
      %1881 = vmatpush1.bf16.msra.mxu0 %v1830
      %1882 = vmatprep.subr.bf16.mxu0 0
      %1883 = vmatpush1.bf16.msra.mxu0 %v1829
      %1884 = vmatprep.subr.bf16.mxu0 0
      %1885 = vmatpush1.bf16.msra.mxu0 %v1828
      %1886 = vmatprep.subr.bf16.mxu0 0
      %1887 = vmatpush1.bf16.msra.mxu0 %v1827
      %1888 = vmatprep.subr.bf16.mxu0 0
      %1889 = vmatpush1.bf16.msra.mxu0 %v1826
      %1890 = vmatprep.subr.bf16.mxu0 0
      %1891 = vmatpush2.bf16.msra.mxu0 %v1841
      %1892 = vmatprep.subr.bf16.mxu0 0
      %1893 = vmatpush2.bf16.msra.mxu0 %v1840
      %1894 = vmatprep.subr.bf16.mxu0 0
      %1895 = vmatpush2.bf16.msra.mxu0 %v1839
      %1896 = vmatprep.subr.bf16.mxu0 0
      %1897 = vmatpush2.bf16.msra.mxu0 %v1838
      %1898 = vmatprep.subr.bf16.mxu0 0
      %1899 = vmatpush2.bf16.msra.mxu0 %v1837
      %1900 = vmatprep.subr.bf16.mxu0 0
      %1901 = vmatpush2.bf16.msra.mxu0 %v1836
      %1902 = vmatprep.subr.bf16.mxu0 0
      %1903 = vmatpush2.bf16.msra.mxu0 %v1835
      %1904 = vmatprep.subr.bf16.mxu0 0
      %1905 = vmatpush2.bf16.msra.mxu0 %v1834
      %1906 = vmatprep.mubr.bf16.mxu0 %v412
      %1907 = vmatmul.mubr.bf16.gmra.mxu0 %v560
      %v1908 = vpop.f32.mrf.mxu0
      %v1909 = vadd.f32 0.0, %v1908
      %v1910 = vpop.f32.mrf.mxu0
      %v1911 = vpop.f32.mrf.mxu0
      %v1912 = vadd.f32 0.0, %v1911
      %v1913 = vpop.f32.mrf.mxu0
      %1914 = vmatprep.mubr.bf16.mxu0 %v413
      %1915 = vmatmul.mubr.bf16.gmra.mxu0 %v561
      %v1916 = vpop.f32.mrf.mxu0
      %v1917 = vadd.f32 0.0, %v1916
      %v1918 = vpop.f32.mrf.mxu0
      %v1919 = vpop.f32.mrf.mxu0
      %v1920 = vadd.f32 0.0, %v1919
      %v1921 = vpop.f32.mrf.mxu0
      %1922 = vmatprep.mubr.bf16.mxu0 %v414
      %1923 = vmatmul.mubr.bf16.gmra.mxu0 %v562
      %v1924 = vpop.f32.mrf.mxu0
      %v1925 = vadd.f32 0.0, %v1924
      %v1926 = vpop.f32.mrf.mxu0
      %v1927 = vpop.f32.mrf.mxu0
      %v1928 = vadd.f32 0.0, %v1927
      %v1929 = vpop.f32.mrf.mxu0
      %1930 = vmatprep.mubr.bf16.mxu0 %v415
      %1931 = vmatmul.mubr.bf16.gmra.mxu0 %v563
      %v1932 = vpop.f32.mrf.mxu0
      %v1933 = vadd.f32 0.0, %v1932
      %v1934 = vpop.f32.mrf.mxu0
      %v1935 = vpop.f32.mrf.mxu0
      %v1936 = vadd.f32 0.0, %v1935
      %v1937 = vpop.f32.mrf.mxu0
      %1938 = vmatprep.mubr.bf16.mxu0 %v416
      %1939 = vmatmul.mubr.bf16.gmra.mxu0 %v564
      %v1940 = vpop.f32.mrf.mxu0
      %v1941 = vadd.f32 0.0, %v1940
      %v1942 = vpop.f32.mrf.mxu0
      %v1943 = vpop.f32.mrf.mxu0
      %v1944 = vadd.f32 0.0, %v1943
      %v1945 = vpop.f32.mrf.mxu0
      %1946 = vmatprep.mubr.bf16.mxu0 %v417
      %1947 = vmatmul.mubr.bf16.gmra.mxu0 %v565
      %v1948 = vpop.f32.mrf.mxu0
      %v1949 = vadd.f32 0.0, %v1948
      %v1950 = vpop.f32.mrf.mxu0
      %v1951 = vpop.f32.mrf.mxu0
      %v1952 = vadd.f32 0.0, %v1951
      %v1953 = vpop.f32.mrf.mxu0
      %1954 = vmatprep.mubr.bf16.mxu0 %v418
      %1955 = vmatmul.mubr.bf16.gmra.mxu0 %v566
      %v1956 = vpop.f32.mrf.mxu0
      %v1957 = vadd.f32 0.0, %v1956
      %v1958 = vpop.f32.mrf.mxu0
      %v1959 = vpop.f32.mrf.mxu0
      %v1960 = vadd.f32 0.0, %v1959
      %v1961 = vpop.f32.mrf.mxu0
      %1962 = vmatprep.mubr.bf16.mxu0 %v419
      %1963 = vmatmul.mubr.bf16.gmra.mxu0 %v567
      %v1964 = vpop.f32.mrf.mxu0
      %v1965 = vadd.f32 0.0, %v1964
      %v1966 = vpop.f32.mrf.mxu0
      %v1967 = vpop.f32.mrf.mxu0
      %v1968 = vadd.f32 0.0, %v1967
      %v1969 = vpop.f32.mrf.mxu0
      %1970 = vmatprep.mubr.bf16.mxu0 %v420
      %1971 = vmatmul.mubr.bf16.gmra.mxu0 %v568
      %v1972 = vpop.f32.mrf.mxu0
      %v1973 = vadd.f32 0.0, %v1972
      %v1974 = vpop.f32.mrf.mxu0
      %v1975 = vpop.f32.mrf.mxu0
      %v1976 = vadd.f32 0.0, %v1975
      %v1977 = vpop.f32.mrf.mxu0
      %1978 = vmatprep.mubr.bf16.mxu0 %v421
      %1979 = vmatmul.mubr.bf16.gmra.mxu0 %v569
      %v1980 = vpop.f32.mrf.mxu0
      %v1981 = vadd.f32 0.0, %v1980
      %v1982 = vpop.f32.mrf.mxu0
      %v1983 = vpop.f32.mrf.mxu0
      %v1984 = vadd.f32 0.0, %v1983
      %v1985 = vpop.f32.mrf.mxu0
      %1986 = vmatprep.mubr.bf16.mxu0 %v422
      %1987 = vmatmul.mubr.bf16.gmra.mxu0 %v570
      %v1988 = vpop.f32.mrf.mxu0
      %v1989 = vadd.f32 0.0, %v1988
      %v1990 = vpop.f32.mrf.mxu0
      %v1991 = vpop.f32.mrf.mxu0
      %v1992 = vadd.f32 0.0, %v1991
      %v1993 = vpop.f32.mrf.mxu0
      %1994 = vmatprep.mubr.bf16.mxu0 %v423
      %1995 = vmatmul.mubr.bf16.gmra.mxu0 %v571
      %v1996 = vpop.f32.mrf.mxu0
      %v1997 = vadd.f32 0.0, %v1996
      %v1998 = vpop.f32.mrf.mxu0
      %v1999 = vpop.f32.mrf.mxu0
      %v2000 = vadd.f32 0.0, %v1999
      %v2001 = vpop.f32.mrf.mxu0
      %2002 = vmatprep.mubr.bf16.mxu0 %v424
      %2003 = vmatmul.mubr.bf16.gmra.mxu0 %v572
      %v2004 = vpop.f32.mrf.mxu0
      %v2005 = vadd.f32 0.0, %v2004
      %v2006 = vpop.f32.mrf.mxu0
      %v2007 = vpop.f32.mrf.mxu0
      %v2008 = vadd.f32 0.0, %v2007
      %v2009 = vpop.f32.mrf.mxu0
      %2010 = vmatprep.mubr.bf16.mxu0 %v425
      %2011 = vmatmul.mubr.bf16.gmra.mxu0 %v573
      %v2012 = vpop.f32.mrf.mxu0
      %v2013 = vadd.f32 0.0, %v2012
      %v2014 = vpop.f32.mrf.mxu0
      %v2015 = vpop.f32.mrf.mxu0
      %v2016 = vadd.f32 0.0, %v2015
      %v2017 = vpop.f32.mrf.mxu0
      %2018 = vmatprep.mubr.bf16.mxu0 %v426
      %2019 = vmatmul.mubr.bf16.gmra.mxu0 %v697
      %v2020 = vpop.f32.mrf.mxu0
      %v2021 = vadd.f32 0.0, %v2020
      %v2022 = vpop.f32.mrf.mxu0
      %v2023 = vpop.f32.mrf.mxu0
      %v2024 = vadd.f32 0.0, %v2023
      %v2025 = vpop.f32.mrf.mxu0
      %2026 = vmatprep.mubr.bf16.mxu0 0
      %2027 = vmatmul.mubr.bf16.gmra.mxu0 %v558
      %v2028 = vpop.f32.mrf.mxu0
      %v2029 = vadd.f32 0.0, %v2028
      %v2030 = vpop.f32.mrf.mxu0
      %v2031 = vpop.f32.mrf.mxu0
      %v2032 = vadd.f32 0.0, %v2031
      %v2033 = vpop.f32.mrf.mxu0
      %2034 = vdwg.mxu0
      %2035 = vmatprep.subr.bf16.mxu0 0
      %2036 = vmatpush1.bf16.msra.mxu0 %v1849
      %2037 = vmatprep.subr.bf16.mxu0 0
      %2038 = vmatpush1.bf16.msra.mxu0 %v1848
      %2039 = vmatprep.subr.bf16.mxu0 0
      %2040 = vmatpush1.bf16.msra.mxu0 %v1847
      %2041 = vmatprep.subr.bf16.mxu0 0
      %2042 = vmatpush1.bf16.msra.mxu0 %v1846
      %2043 = vmatprep.subr.bf16.mxu0 0
      %2044 = vmatpush1.bf16.msra.mxu0 %v1845
      %2045 = vmatprep.subr.bf16.mxu0 0
      %2046 = vmatpush1.bf16.msra.mxu0 %v1844
      %2047 = vmatprep.subr.bf16.mxu0 0
      %2048 = vmatpush1.bf16.msra.mxu0 %v1843
      %2049 = vmatprep.subr.bf16.mxu0 0
      %2050 = vmatpush1.bf16.msra.mxu0 %v1842
      %2051 = vmatprep.subr.bf16.mxu0 0
      %2052 = vmatpush2.bf16.msra.mxu0 0
      %2053 = vmatprep.subr.bf16.mxu0 0
      %2054 = vmatpush2.bf16.msra.mxu0 0
      %2055 = vmatprep.subr.bf16.mxu0 0
      %2056 = vmatpush2.bf16.msra.mxu0 0
      %2057 = vmatprep.subr.bf16.mxu0 0
      %2058 = vmatpush2.bf16.msra.mxu0 0
      %2059 = vmatprep.subr.bf16.mxu0 0
      %2060 = vmatpush2.bf16.msra.mxu0 0
      %2061 = vmatprep.subr.bf16.mxu0 0
      %2062 = vmatpush2.bf16.msra.mxu0 0
      %2063 = vmatprep.subr.bf16.mxu0 0
      %2064 = vmatpush2.bf16.msra.mxu0 0
      %2065 = vmatprep.subr.bf16.mxu0 0
      %2066 = vmatpush2.bf16.msra.mxu0 0
      %2067 = vmatprep.mubr.bf16.mxu0 0
      %2068 = vmatmul.mubr.bf16.gmra.mxu0 %v627
      %v2069 = vpop.f32.mrf.mxu0
      %v2070 = vadd.f32 %v1909, %v2069
      %v2071 = vpop.f32.mrf.mxu0
      %v2072 = vpop.f32.mrf.mxu0
      %v2073 = vadd.f32 %v1912, %v2072
      %v2074 = vpop.f32.mrf.mxu0
      %2075 = vmatprep.mubr.bf16.mxu0 0
      %2076 = vmatmul.mubr.bf16.gmra.mxu0 %v628
      %v2077 = vpop.f32.mrf.mxu0
      %v2078 = vadd.f32 %v1917, %v2077
      %v2079 = vpop.f32.mrf.mxu0
      %v2080 = vpop.f32.mrf.mxu0
      %v2081 = vadd.f32 %v1920, %v2080
      %v2082 = vpop.f32.mrf.mxu0
      %2083 = vmatprep.mubr.bf16.mxu0 0
      %2084 = vmatmul.mubr.bf16.gmra.mxu0 %v629
      %v2085 = vpop.f32.mrf.mxu0
      %v2086 = vadd.f32 %v1925, %v2085
      %v2087 = vpop.f32.mrf.mxu0
      %v2088 = vpop.f32.mrf.mxu0
      %v2089 = vadd.f32 %v1928, %v2088
      %v2090 = vpop.f32.mrf.mxu0
      %2091 = vmatprep.mubr.bf16.mxu0 0
      %2092 = vmatmul.mubr.bf16.gmra.mxu0 %v630
      %v2093 = vpop.f32.mrf.mxu0
      %v2094 = vadd.f32 %v1933, %v2093
      %v2095 = vpop.f32.mrf.mxu0
      %v2096 = vpop.f32.mrf.mxu0
      %v2097 = vadd.f32 %v1936, %v2096
      %v2098 = vpop.f32.mrf.mxu0
      %2099 = vmatprep.mubr.bf16.mxu0 0
      %2100 = vmatmul.mubr.bf16.gmra.mxu0 %v631
      %v2101 = vpop.f32.mrf.mxu0
      %v2102 = vadd.f32 %v1941, %v2101
      %v2103 = vpop.f32.mrf.mxu0
      %v2104 = vpop.f32.mrf.mxu0
      %v2105 = vadd.f32 %v1944, %v2104
      %v2106 = vpop.f32.mrf.mxu0
      %2107 = vmatprep.mubr.bf16.mxu0 0
      %2108 = vmatmul.mubr.bf16.gmra.mxu0 %v632
      %v2109 = vpop.f32.mrf.mxu0
      %v2110 = vadd.f32 %v1949, %v2109
      %v2111 = vpop.f32.mrf.mxu0
      %v2112 = vpop.f32.mrf.mxu0
      %v2113 = vadd.f32 %v1952, %v2112
      %v2114 = vpop.f32.mrf.mxu0
      %2115 = vmatprep.mubr.bf16.mxu0 0
      %2116 = vmatmul.mubr.bf16.gmra.mxu0 %v633
      %v2117 = vpop.f32.mrf.mxu0
      %v2118 = vadd.f32 %v1957, %v2117
      %v2119 = vpop.f32.mrf.mxu0
      %v2120 = vpop.f32.mrf.mxu0
      %v2121 = vadd.f32 %v1960, %v2120
      %v2122 = vpop.f32.mrf.mxu0
      %2123 = vmatprep.mubr.bf16.mxu0 0
      %2124 = vmatmul.mubr.bf16.gmra.mxu0 %v634
      %v2125 = vpop.f32.mrf.mxu0
      %v2126 = vadd.f32 %v1965, %v2125
      %v2127 = vpop.f32.mrf.mxu0
      %v2128 = vpop.f32.mrf.mxu0
      %v2129 = vadd.f32 %v1968, %v2128
      %v2130 = vpop.f32.mrf.mxu0
      %2131 = vmatprep.mubr.bf16.mxu0 0
      %2132 = vmatmul.mubr.bf16.gmra.mxu0 %v635
      %v2133 = vpop.f32.mrf.mxu0
      %v2134 = vadd.f32 %v1973, %v2133
      %v2135 = vpop.f32.mrf.mxu0
      %v2136 = vpop.f32.mrf.mxu0
      %v2137 = vadd.f32 %v1976, %v2136
      %v2138 = vpop.f32.mrf.mxu0
      %2139 = vmatprep.mubr.bf16.mxu0 0
      %2140 = vmatmul.mubr.bf16.gmra.mxu0 %v636
      %v2141 = vpop.f32.mrf.mxu0
      %v2142 = vadd.f32 %v1981, %v2141
      %v2143 = vpop.f32.mrf.mxu0
      %v2144 = vpop.f32.mrf.mxu0
      %v2145 = vadd.f32 %v1984, %v2144
      %v2146 = vpop.f32.mrf.mxu0
      %2147 = vmatprep.mubr.bf16.mxu0 0
      %2148 = vmatmul.mubr.bf16.gmra.mxu0 %v637
      %v2149 = vpop.f32.mrf.mxu0
      %v2150 = vadd.f32 %v1989, %v2149
      %v2151 = vpop.f32.mrf.mxu0
      %v2152 = vpop.f32.mrf.mxu0
      %v2153 = vadd.f32 %v1992, %v2152
      %v2154 = vpop.f32.mrf.mxu0
      %2155 = vmatprep.mubr.bf16.mxu0 0
      %2156 = vmatmul.mubr.bf16.gmra.mxu0 %v638
      %v2157 = vpop.f32.mrf.mxu0
      %v2158 = vadd.f32 %v1997, %v2157
      %v2159 = vpop.f32.mrf.mxu0
      %v2160 = vpop.f32.mrf.mxu0
      %v2161 = vadd.f32 %v2000, %v2160
      %v2162 = vpop.f32.mrf.mxu0
      %2163 = vmatprep.mubr.bf16.mxu0 0
      %2164 = vmatmul.mubr.bf16.gmra.mxu0 %v639
      %v2165 = vpop.f32.mrf.mxu0
      %v2166 = vadd.f32 %v2005, %v2165
      %v2167 = vpop.f32.mrf.mxu0
      %v2168 = vpop.f32.mrf.mxu0
      %v2169 = vadd.f32 %v2008, %v2168
      %v2170 = vpop.f32.mrf.mxu0
      %2171 = vmatprep.mubr.bf16.mxu0 0
      %2172 = vmatmul.mubr.bf16.gmra.mxu0 %v640
      %v2173 = vpop.f32.mrf.mxu0
      %v2174 = vadd.f32 %v2013, %v2173
      %v2175 = vpop.f32.mrf.mxu0
      %v2176 = vpop.f32.mrf.mxu0
      %v2177 = vadd.f32 %v2016, %v2176
      %v2178 = vpop.f32.mrf.mxu0
      %2179 = vmatprep.mubr.bf16.mxu0 0
      %2180 = vmatmul.mubr.bf16.gmra.mxu0 %v701
      %v2181 = vpop.f32.mrf.mxu0
      %v2182 = vadd.f32 %v2021, %v2181
      %v2183 = vpop.f32.mrf.mxu0
      %v2184 = vpop.f32.mrf.mxu0
      %v2185 = vadd.f32 %v2024, %v2184
      %v2186 = vpop.f32.mrf.mxu0
      %2187 = vmatprep.mubr.bf16.mxu0 0
      %2188 = vmatmul.mubr.bf16.gmra.mxu0 %v625
      %v2189 = vpop.f32.mrf.mxu0
      %v2190 = vadd.f32 %v2029, %v2189
      %v2191 = vpop.f32.mrf.mxu0
      %v2192 = vpop.f32.mrf.mxu0
      %v2193 = vadd.f32 %v2032, %v2192
      %v2194 = vpop.f32.mrf.mxu0
      %2195 = vdwg.mxu0
      %v2196 = vadd.f32 %v1556, %v2070
      %v2197 = vadd.f32 %v1559, %v2073
      %v2198 = vadd.f32 %v1564, %v2078
      %v2199 = vadd.f32 %v1567, %v2081
      %v2200 = vadd.f32 %v1572, %v2086
      %v2201 = vadd.f32 %v1575, %v2089
      %v2202 = vadd.f32 %v1580, %v2094
      %v2203 = vadd.f32 %v1583, %v2097
      %v2204 = vadd.f32 %v1588, %v2102
      %v2205 = vadd.f32 %v1591, %v2105
      %v2206 = vadd.f32 %v1596, %v2110
      %v2207 = vadd.f32 %v1599, %v2113
      %v2208 = vadd.f32 %v1604, %v2118
      %v2209 = vadd.f32 %v1607, %v2121
      %v2210 = vadd.f32 %v1612, %v2126
      %v2211 = vadd.f32 %v1615, %v2129
      %v2212 = vadd.f32 %v1620, %v2134
      %v2213 = vadd.f32 %v1623, %v2137
      %v2214 = vadd.f32 %v1628, %v2142
      %v2215 = vadd.f32 %v1631, %v2145
      %v2216 = vadd.f32 %v1636, %v2150
      %v2217 = vadd.f32 %v1639, %v2153
      %v2218 = vadd.f32 %v1644, %v2158
      %v2219 = vadd.f32 %v1647, %v2161
      %v2220 = vadd.f32 %v1652, %v2166
      %v2221 = vadd.f32 %v1655, %v2169
      %v2222 = vadd.f32 %v1660, %v2174
      %v2223 = vadd.f32 %v1663, %v2177
      %v2224 = vadd.f32 %v1668, %v2182
      %v2225 = vadd.f32 %v1671, %v2185
      %v2226 = vadd.f32 %v1676, %v2190
      %v2227 = vadd.f32 %v1679, %v2193
      %v2228 = vadd.f32 %v2196, %v2197
      %v2229 = vadd.f32 %v2228, %v2198
      %v2230 = vadd.f32 %v2229, %v2199
      %v2231 = vadd.f32 %v2230, %v2200
      %v2232 = vadd.f32 %v2231, %v2201
      %v2233 = vadd.f32 %v2232, %v2202
      %v2234 = vadd.f32 %v2233, %v2203
      %v2235 = vadd.f32 %v2234, %v2204
      %v2236 = vadd.f32 %v2235, %v2205
      %v2237 = vadd.f32 %v2236, %v2206
      %v2238 = vadd.f32 %v2237, %v2207
      %v2239 = vadd.f32 %v2238, %v2208
      %v2240 = vadd.f32 %v2239, %v2209
      %v2241 = vadd.f32 %v2240, %v2210
      %v2242 = vadd.f32 %v2241, %v2211
      %v2243 = vadd.f32 %v2242, %v2212
      %v2244 = vadd.f32 %v2243, %v2213
      %v2245 = vadd.f32 %v2244, %v2214
      %v2246 = vadd.f32 %v2245, %v2215
      %v2247 = vadd.f32 %v2246, %v2216
      %v2248 = vadd.f32 %v2247, %v2217
      %v2249 = vadd.f32 %v2248, %v2218
      %v2250 = vadd.f32 %v2249, %v2219
      %v2251 = vadd.f32 %v2250, %v2220
      %v2252 = vadd.f32 %v2251, %v2221
      %v2253 = vadd.f32 %v2252, %v2222
      %v2254 = vadd.f32 %v2253, %v2223
      %v2255 = vadd.f32 %v2254, %v2224
      %v2256 = vadd.f32 %v2255, %v2225
      %v2257 = vadd.f32 %v2256, %v2226
      %v2258 = vadd.f32 %v2257, %v2227
      %v2259 = vrot.slane %v2258, 4
      %v2260 = vadd.f32 %v2258, %v2259
      %v2261 = vrot.slane %v2260, 2
      %v2262 = vadd.f32 %v2260, %v2261
      %v2263 = vrot.slane %v2262, 1
      %v2264 = vadd.f32 %v2262, %v2263
      %v2265 = vmul.f32 %v2196, %v2196
      %v2266 = vmul.f32 %v2197, %v2197
      %v2267 = vmul.f32 %v2198, %v2198
      %v2268 = vmul.f32 %v2199, %v2199
      %v2269 = vmul.f32 %v2200, %v2200
      %v2270 = vmul.f32 %v2201, %v2201
      %v2271 = vmul.f32 %v2202, %v2202
      %v2272 = vmul.f32 %v2203, %v2203
      %v2273 = vmul.f32 %v2204, %v2204
      %v2274 = vmul.f32 %v2205, %v2205
      %v2275 = vmul.f32 %v2206, %v2206
      %v2276 = vmul.f32 %v2207, %v2207
      %v2277 = vmul.f32 %v2208, %v2208
      %v2278 = vmul.f32 %v2209, %v2209
      %v2279 = vmul.f32 %v2210, %v2210
      %v2280 = vmul.f32 %v2211, %v2211
      %v2281 = vmul.f32 %v2212, %v2212
      %v2282 = vmul.f32 %v2213, %v2213
      %v2283 = vmul.f32 %v2214, %v2214
      %v2284 = vmul.f32 %v2215, %v2215
      %v2285 = vmul.f32 %v2216, %v2216
      %v2286 = vmul.f32 %v2217, %v2217
      %v2287 = vmul.f32 %v2218, %v2218
      %v2288 = vmul.f32 %v2219, %v2219
      %v2289 = vmul.f32 %v2220, %v2220
      %v2290 = vmul.f32 %v2221, %v2221
      %v2291 = vmul.f32 %v2222, %v2222
      %v2292 = vmul.f32 %v2223, %v2223
      %v2293 = vmul.f32 %v2224, %v2224
      %v2294 = vmul.f32 %v2225, %v2225
      %v2295 = vmul.f32 %v2226, %v2226
      %v2296 = vmul.f32 %v2227, %v2227
      %v2297 = vadd.f32 %v2265, %v2266
      %v2298 = vadd.f32 %v2297, %v2267
      %v2299 = vadd.f32 %v2298, %v2268
      %v2300 = vadd.f32 %v2299, %v2269
      %v2301 = vadd.f32 %v2300, %v2270
      %v2302 = vadd.f32 %v2301, %v2271
      %v2303 = vadd.f32 %v2302, %v2272
      %v2304 = vadd.f32 %v2303, %v2273
      %v2305 = vadd.f32 %v2304, %v2274
      %v2306 = vadd.f32 %v2305, %v2275
      %v2307 = vadd.f32 %v2306, %v2276
      %v2308 = vadd.f32 %v2307, %v2277
      %v2309 = vadd.f32 %v2308, %v2278
      %v2310 = vadd.f32 %v2309, %v2279
      %v2311 = vadd.f32 %v2310, %v2280
      %v2312 = vadd.f32 %v2311, %v2281
      %v2313 = vadd.f32 %v2312, %v2282
      %v2314 = vadd.f32 %v2313, %v2283
      %v2315 = vadd.f32 %v2314, %v2284
      %v2316 = vadd.f32 %v2315, %v2285
      %v2317 = vadd.f32 %v2316, %v2286
      %v2318 = vadd.f32 %v2317, %v2287
      %v2319 = vadd.f32 %v2318, %v2288
      %v2320 = vadd.f32 %v2319, %v2289
      %v2321 = vadd.f32 %v2320, %v2290
      %v2322 = vadd.f32 %v2321, %v2291
      %v2323 = vadd.f32 %v2322, %v2292
      %v2324 = vadd.f32 %v2323, %v2293
      %v2325 = vadd.f32 %v2324, %v2294
      %v2326 = vadd.f32 %v2325, %v2295
      %v2327 = vadd.f32 %v2326, %v2296
      %v2328 = vrot.slane %v2327, 4
      %v2329 = vadd.f32 %v2327, %v2328
      %v2330 = vrot.slane %v2329, 2
      %v2331 = vadd.f32 %v2329, %v2330
      %v2332 = vrot.slane %v2331, 1
      %v2333 = vadd.f32 %v2331, %v2332
      %vm2334 = vcmask 1040384
      %v2335 = vsel %vm2334, %v2264, %v2333
      %2336 = vst [vmem:[%s235] sm:$0x3] %v2335
      %v2337 = vpack.c.bf16 %v2197, %v2196
      %v2338 = vpack.c.bf16 %v2199, %v2198
      %v2339 = vpack.c.bf16 %v2201, %v2200
      %v2340 = vpack.c.bf16 %v2203, %v2202
      %v2341 = vpack.c.bf16 %v2205, %v2204
      %v2342 = vpack.c.bf16 %v2207, %v2206
      %v2343 = vpack.c.bf16 %v2209, %v2208
      %v2344 = vpack.c.bf16 %v2211, %v2210
      %v2345 = vpack.c.bf16 %v2213, %v2212
      %v2346 = vpack.c.bf16 %v2215, %v2214
      %v2347 = vpack.c.bf16 %v2217, %v2216
      %v2348 = vpack.c.bf16 %v2219, %v2218
      %v2349 = vpack.c.bf16 %v2221, %v2220
      %v2350 = vpack.c.bf16 %v2223, %v2222
      %v2351 = vpack.c.bf16 %v2225, %v2224
      %v2352 = vpack.c.bf16 %v2227, %v2226
      %v2369 = vunpack.c.l.b16 %v2337
      %v2370 = vunpack.c.h.b16 %v2337
      %v2371 = vunpack.c.l.b16 %v2338
      %v2372 = vunpack.c.h.b16 %v2338
      %v2373 = vunpack.c.l.b16 %v2339
      %v2374 = vunpack.c.h.b16 %v2339
      %v2375 = vunpack.c.l.b16 %v2340
      %v2376 = vunpack.c.h.b16 %v2340
      %v2377 = vunpack.c.l.b16 %v2341
      %v2378 = vunpack.c.h.b16 %v2341
      %v2379 = vunpack.c.l.b16 %v2342
      %v2380 = vunpack.c.h.b16 %v2342
      %v2381 = vunpack.c.l.b16 %v2343
      %v2382 = vunpack.c.h.b16 %v2343
      %v2383 = vunpack.c.l.b16 %v2344
      %v2384 = vunpack.c.h.b16 %v2344
      %v2385 = vunpack.c.l.b16 %v2345
      %v2386 = vunpack.c.h.b16 %v2345
      %v2387 = vunpack.c.l.b16 %v2346
      %v2388 = vunpack.c.h.b16 %v2346
      %v2389 = vunpack.c.l.b16 %v2347
      %v2390 = vunpack.c.h.b16 %v2347
      %v2391 = vunpack.c.l.b16 %v2348
      %v2392 = vunpack.c.h.b16 %v2348
      %v2393 = vunpack.c.l.b16 %v2349
      %v2394 = vunpack.c.h.b16 %v2349
      %v2395 = vunpack.c.l.b16 %v2350
      %v2396 = vunpack.c.h.b16 %v2350
      %v2397 = vunpack.c.l.b16 %v2351
      %v2398 = vunpack.c.h.b16 %v2351
      %v2399 = vunpack.c.l.b16 %v2352
      %v2400 = vunpack.c.h.b16 %v2352
      %v2401 = vpack.c.b16 %v2369, %v2369
      %v2402 = vpack.c.b16 %v2370, %v2370
      %v2403 = vpack.c.b16 %v2371, %v2371
      %v2404 = vpack.c.b16 %v2372, %v2372
      %v2405 = vpack.c.b16 %v2373, %v2373
      %v2406 = vpack.c.b16 %v2374, %v2374
      %v2407 = vpack.c.b16 %v2375, %v2375
      %v2408 = vpack.c.b16 %v2376, %v2376
      %v2409 = vpack.c.b16 %v2377, %v2377
      %v2410 = vpack.c.b16 %v2378, %v2378
      %v2411 = vpack.c.b16 %v2379, %v2379
      %v2412 = vpack.c.b16 %v2380, %v2380
      %v2413 = vpack.c.b16 %v2381, %v2381
      %v2414 = vpack.c.b16 %v2382, %v2382
      %v2415 = vpack.c.b16 %v2383, %v2383
      %v2416 = vpack.c.b16 %v2384, %v2384
      %v2417 = vpack.c.b16 %v2385, %v2385
      %v2418 = vpack.c.b16 %v2386, %v2386
      %v2419 = vpack.c.b16 %v2387, %v2387
      %v2420 = vpack.c.b16 %v2388, %v2388
      %v2421 = vpack.c.b16 %v2389, %v2389
      %v2422 = vpack.c.b16 %v2390, %v2390
      %v2423 = vpack.c.b16 %v2391, %v2391
      %v2424 = vpack.c.b16 %v2392, %v2392
      %v2425 = vpack.c.b16 %v2393, %v2393
      %v2426 = vpack.c.b16 %v2394, %v2394
      %v2427 = vpack.c.b16 %v2395, %v2395
      %v2428 = vpack.c.b16 %v2396, %v2396
      %v2429 = vpack.c.b16 %v2397, %v2397
      %v2430 = vpack.c.b16 %v2398, %v2398
      %v2431 = vpack.c.b16 %v2399, %v2399
      %v2432 = vpack.c.b16 %v2400, %v2400
      %2465 = vst [vmem:[%s231] sm:$0xf] %v2401
      %2466 = vst [vmem:[%s231 + $0x4] sm:$0xf] %v2402
      %2467 = vst [vmem:[%s231 + $0x8] sm:$0xf] %v2403
      %2468 = vst [vmem:[%s231 + $0xc] sm:$0xf] %v2404
      %2469 = vst [vmem:[%s231 + $0x10] sm:$0xf] %v2405
      %2470 = vst [vmem:[%s231 + $0x14] sm:$0xf] %v2406
      %2471 = vst [vmem:[%s231 + $0x18] sm:$0xf] %v2407
      %2472 = vst [vmem:[%s231 + $0x1c] sm:$0xf] %v2408
      %2473 = vst [vmem:[%s231 + $0x20] sm:$0xf] %v2409
      %2474 = vst [vmem:[%s231 + $0x24] sm:$0xf] %v2410
      %2475 = vst [vmem:[%s231 + $0x28] sm:$0xf] %v2411
      %2476 = vst [vmem:[%s231 + $0x2c] sm:$0xf] %v2412
      %2477 = vst [vmem:[%s231 + $0x30] sm:$0xf] %v2413
      %2478 = vst [vmem:[%s231 + $0x34] sm:$0xf] %v2414
      %2479 = vst [vmem:[%s231 + $0x38] sm:$0xf] %v2415
      %2480 = vst [vmem:[%s231 + $0x3c] sm:$0xf] %v2416
      %2481 = vst [vmem:[%s231 + $0x40] sm:$0xf] %v2417
      %2482 = vst [vmem:[%s231 + $0x44] sm:$0xf] %v2418
      %2483 = vst [vmem:[%s231 + $0x48] sm:$0xf] %v2419
      %2484 = vst [vmem:[%s231 + $0x4c] sm:$0xf] %v2420
      %2485 = vst [vmem:[%s231 + $0x50] sm:$0xf] %v2421
      %2486 = vst [vmem:[%s231 + $0x54] sm:$0xf] %v2422
      %2487 = vst [vmem:[%s231 + $0x58] sm:$0xf] %v2423
      %2488 = vst [vmem:[%s231 + $0x5c] sm:$0xf] %v2424
      %2489 = vst [vmem:[%s231 + $0x60] sm:$0xf] %v2425
      %2490 = vst [vmem:[%s231 + $0x64] sm:$0xf] %v2426
      %2491 = vst [vmem:[%s231 + $0x68] sm:$0xf] %v2427
      %2492 = vst [vmem:[%s231 + $0x6c] sm:$0xf] %v2428
      %2493 = vst [vmem:[%s231 + $0x70] sm:$0xf] %v2429
      %2494 = vst [vmem:[%s231 + $0x74] sm:$0xf] %v2430
      %2495 = vst [vmem:[%s231 + $0x78] sm:$0xf] %v2431
      %2496 = vst [vmem:[%s231 + $0x7c] sm:$0xf] %v2432
      %p2497 = scmp.lt.s32.totalorder %s17, 1
      %s2498 = scalar_select %p2497, %s17, 1
      %s2499 = smul.addr %s2498, 32
      %s2500 = smul.addr %s2499, 4
      %s2501 = scalar_lea.vmem %s4, %s2500
      %p2502 = scmp.lt.s32.totalorder %s17, 1
      %s2503 = scalar_select %p2502, %s17, 1
      %s2504 = smul.addr %s2503, 2
      %s2505 = scalar_lea.vmem %s5, %s2504
      // Predicated region
      $region37: #{_lambda_.4} parent=35 // pred_check
        %p2506 = pneg %p124
      $region38: #{_lambda_.4} parent=35 // pred_check_branch
        %2508 = sbr.rel (%p2506) target = $region40
      $region39: #{_lambda_.4} parent=35 // pred_region
        _
      $region40: #{_lambda_.4} parent=35 // pred_fallthru
        _
      // Predicated region
      $region41: #{_lambda_.4} parent=35 // pred_check
        %p2509 = pneg %p150
      $region42: #{_lambda_.4} parent=35 // pred_check_branch
        %2511 = sbr.rel (%p2509) target = $region44
      $region43: #{_lambda_.4} parent=35 // pred_region
        _
      $region44: #{_lambda_.4} parent=35 // pred_fallthru
        _
    $region36: #{_lambda_.4} parent=5 // pred_fallthru
      _
    %p2512 = scmp.le.s32.totalorder 2, %s12
    // Predicated region
    $region45: #{_lambda_.4} parent=5 // pred_check
      %p2513 = pneg %p2512
    $region46: #{_lambda_.4} parent=5 // pred_check_branch
      %2515 = sbr.rel (%p2513) target = $region48
    $region47: #{_lambda_.4} parent=5 // pred_region
      %s2516 = ssub.s32 %s12, 2
      // Predicated region
      $region49: #{_lambda_.4} parent=47 // pred_check
        %p2517 = pneg %p130
      $region50: #{_lambda_.4} parent=47 // pred_check_branch
        %2519 = sbr.rel (%p2517) target = $region52
      $region51: #{_lambda_.4} parent=47 // pred_region
        %p2520 = scmp.lt.s32.totalorder %s18, 1
        %s2521 = scalar_select %p2520, %s18, 1
        %s2522 = smul.addr %s2521, 32
        %s2523 = smul.addr %s2522, 4
        %s2524 = scalar_lea.vmem %s4, %s2523
      $region52: #{_lambda_.4} parent=47 // pred_fallthru
        _
      // Predicated region
      $region53: #{_lambda_.4} parent=47 // pred_check
        %p2525 = pneg %p156
      $region54: #{_lambda_.4} parent=47 // pred_check_branch
        %2527 = sbr.rel (%p2525) target = $region56
      $region55: #{_lambda_.4} parent=47 // pred_region
        %p2528 = scmp.lt.s32.totalorder %s18, 1
        %s2529 = scalar_select %p2528, %s18, 1
        %s2530 = smul.addr %s2529, 2
        %s2531 = scalar_lea.vmem %s5, %s2530
      $region56: #{_lambda_.4} parent=47 // pred_fallthru
        _
    $region48: #{_lambda_.4} parent=5 // pred_fallthru
      _
  $region6: #{_lambda_.4} parent=0 // loop_footer
    %s16 = sadd.s32 1, %s12
  $region7: #{_lambda_.4} parent=0 // loop_footer_branch
    %11 = sbr.rel target = $region3
  $region8: #{_lambda_.4} parent=0 // loop_exit
    _

</llo_original>
